<compile_context>
chip_gen: v6e
topology: v6e:2x2x1
jax: 0.10.0
libtpu: 0.0.40
codegen_flags: <defaults>
</compile_context>

<pallas_src>
import math

import jax
import jax.numpy as jnp
from jax.experimental import pallas as pl
from jax.experimental.pallas import tpu as pltpu


# ---------------------------------------------------------------------------
# Parameter prep (plain JAX, runs once outside the recurrence)
# ---------------------------------------------------------------------------
_TINY = 1e-24  # zero-amax guard


def fake_quant_per_row(w):
    """8-bit linear fake quant, per output row (axis 0), narrow range [-127, 127]."""
    amax = jnp.maximum(jnp.max(jnp.abs(w), axis=1, keepdims=True), _TINY)
    scale = 127.0 / amax
    return jnp.clip(jnp.round(w * scale), -127.0, 127.0) / scale


def _reorder_gates_ifgo_to_ifog(p):
    """Permute LSTM gate blocks along axis 0 from (i,f,g,o) to (i,f,o,g)."""
    H = p.shape[0] // 4
    return jnp.concatenate([p[: 2 * H], p[3 * H:], p[2 * H: 3 * H]], axis=0)


def _pick_row_tile(M):
    """Row tile for the parallel input projection (biggest nice divisor of M)."""
    for cand in (1024, 512, 256, 128, 64, 32, 16, 8):
        if cand <= M and M % cand == 0:
            return cand
    return M


def _pick_time_chunk(T, B, G, H):
    """Largest K dividing T keeping the per-chunk VMEM footprint modest.

    Per chunk: gx (K*B*G) double-buffered + out (K*B*H) double-buffered, f32.
    Budget ~8 MiB keeps well under the default scoped VMEM limit while still
    amortizing grid-step overhead.
    """
    per_step_bytes = 4 * B * (2 * G + 2 * H)
    max_k = max(1, min(T, (8 << 20) // max(1, per_step_bytes)))
    for k in range(max_k, 0, -1):
        if T % k == 0:
            return k
    return 1


# ---------------------------------------------------------------------------
# Kernel 1: parallel input projection  gates_x = fq(x) @ W_ih_q^T + (b_ih+b_hh)
# ---------------------------------------------------------------------------
def _ih_proj_kernel(scale_ref, x_ref, wih_ref, b_ref, gx_ref):
    s = scale_ref[0]                                    # 127 / amax(input), SMEM scalar
    xq = jnp.clip(jnp.round(x_ref[...] * s), -127.0, 127.0) / s
    gx_ref[...] = (jnp.dot(xq, wih_ref[...], preferred_element_type=jnp.float32)
                   + b_ref[...])


# ---------------------------------------------------------------------------
# Kernel 2: sequential recurrence, K timesteps per grid step, h/c in VMEM scratch
# ---------------------------------------------------------------------------
def _lstm_recur_kernel(gx_ref, whh_ref, h0_ref, c0_ref,
                       out_ref, hn_ref, cn_ref, h_sc, c_sc):
    c_idx = pl.program_id(0)
    B, H = h_sc.shape
    K = gx_ref.shape[0] // B

    @pl.when(c_idx == 0)
    def _():
        h_sc[...] = h0_ref[...]
        c_sc[...] = c0_ref[...]

    def step(kk, carry):
        h, c = carry
        r0 = pl.multiple_of(kk * B, B)
        # ih contribution (incl. both biases) was precomputed; only the recurrent
        # matmul + pointwise cell math remains on the serial critical path.
        gates = (gx_ref[pl.ds(r0, B), :]
                 + jnp.dot(h, whh_ref[...], preferred_element_type=jnp.float32))
        # gate layout after wrapper-side permutation: (i, f, o, g)
        sg = jax.nn.sigmoid(gates[:, : 3 * H])           # one contiguous sigmoid slab
        g_g = jnp.tanh(gates[:, 3 * H:])
        i_g = sg[:, :H]
        f_g = sg[:, H: 2 * H]
        o_g = sg[:, 2 * H: 3 * H]
        c_new = f_g * c + i_g * g_g
        h_new = o_g * jnp.tanh(c_new)
        out_ref[pl.ds(r0, B), :] = h_new.astype(out_ref.dtype)
        return h_new, c_new

    h_f, c_f = jax.lax.fori_loop(0, K, step, (h_sc[...], c_sc[...]), unroll=True)
    h_sc[...] = h_f
    c_sc[...] = c_f

    @pl.when(c_idx == pl.num_programs(0) - 1)
    def _():
        hn_ref[...] = h_f.astype(hn_ref.dtype)
        cn_ref[...] = c_f.astype(cn_ref.dtype)


# ---------------------------------------------------------------------------
# Wrapper
# ---------------------------------------------------------------------------
@jax.jit
def quant_lstm_forward(x, w_ih, w_hh, b_ih, b_hh, h0, c0):
    """x: (T, B, D); w_ih: (4H, D); w_hh: (4H, H); b_*: (4H,); h0/c0: (1, B, H)."""
    T, B, D = x.shape
    G, H = w_hh.shape

    # --- weight fake-quant (per-row), gate reorder (i,f,g,o)->(i,f,o,g), transpose
    wih_q_t = fake_quant_per_row(_reorder_gates_ifgo_to_ifog(w_ih)).T    # (D, 4H)
    whh_q_t = fake_quant_per_row(_reorder_gates_ifgo_to_ifog(w_hh)).T    # (H, 4H)
    bias = (_reorder_gates_ifgo_to_ifog(b_ih)
            + _reorder_gates_ifgo_to_ifog(b_hh)).reshape(1, G)           # (1, 4H)

    # --- per-tensor input quant scale (SMEM scalar for the pre-pass kernel)
    amax_x = jnp.maximum(jnp.max(jnp.abs(x)), _TINY)
    x_scale = (127.0 / amax_x).reshape(1).astype(jnp.float32)

    # --- pad batch to a sublane multiple so row blocks stay (8,128)-aligned
    Bp = ((B + 7) // 8) * 8
    if Bp != B:
        pad = Bp - B
        x = jnp.pad(x, ((0, 0), (0, pad), (0, 0)))
        h0 = jnp.pad(h0, ((0, 0), (0, pad), (0, 0)))
        c0 = jnp.pad(c0, ((0, 0), (0, pad), (0, 0)))

    M = T * Bp
    x_flat = x.reshape(M, D)
    h0_2d = h0[0]
    c0_2d = c0[0]

    # --- pass 1: parallel input projection over all timesteps at once ----------
    tm = _pick_row_tile(M)
    gates_x = pl.pallas_call(
        _ih_proj_kernel,
        out_shape=jax.ShapeDtypeStruct((M, G), jnp.float32),
        grid=(M // tm,),
        in_specs=[
            pl.BlockSpec(memory_space=pltpu.MemorySpace.SMEM),   # input quant scale
            pl.BlockSpec((tm, D), lambda i: (i, 0)),             # x rows
            pl.BlockSpec((D, G), lambda i: (0, 0)),              # W_ih_q^T (resident)
            pl.BlockSpec((1, G), lambda i: (0, 0)),              # b_ih + b_hh
        ],
        out_specs=pl.BlockSpec((tm, G), lambda i: (i, 0)),
        compiler_params=pltpu.CompilerParams(
            dimension_semantics=("parallel",)),
    )(x_scale, x_flat, wih_q_t, bias)

    # --- pass 2: sequential recurrence, K timesteps per grid step --------------
    K = _pick_time_chunk(T, Bp, G, H)
    out_flat, h_n2d, c_n2d = pl.pallas_call(
        _lstm_recur_kernel,
        out_shape=(
            jax.ShapeDtypeStruct((M, H), jnp.float32),    # output sequence (flattened)
            jax.ShapeDtypeStruct((Bp, H), jnp.float32),   # h_n
            jax.ShapeDtypeStruct((Bp, H), jnp.float32),   # c_n
        ),
        grid=(T // K,),
        in_specs=[
            pl.BlockSpec((K * Bp, G), lambda c: (c, 0)),  # precomputed ih gates chunk
            pl.BlockSpec((H, G), lambda c: (0, 0)),       # W_hh_q^T (resident)
            pl.BlockSpec((Bp, H), lambda c: (0, 0)),      # h0
            pl.BlockSpec((Bp, H), lambda c: (0, 0)),      # c0
        ],
        out_specs=(
            pl.BlockSpec((K * Bp, H), lambda c: (c, 0)),  # output chunk
            pl.BlockSpec((Bp, H), lambda c: (0, 0)),      # h_n (resident)
            pl.BlockSpec((Bp, H), lambda c: (0, 0)),      # c_n (resident)
        ),
        scratch_shapes=[
            pltpu.VMEM((Bp, H), jnp.float32),             # h state
            pltpu.VMEM((Bp, H), jnp.float32),             # c state
        ],
        compiler_params=pltpu.CompilerParams(
            dimension_semantics=("arbitrary",)),          # time is sequential
    )(gates_x, whh_q_t, h0_2d, c0_2d)

    out = out_flat.reshape(T, Bp, H)[:, :B, :]
    h_n = h_n2d[:B][None]
    c_n = c_n2d[:B][None]
    return out, h_n, c_n


# ---------------------------------------------------------------------------
# Pure-JAX reference (original (i,f,g,o) layout) for a sanity check
# ---------------------------------------------------------------------------
def reference_lstm(x, w_ih, w_hh, b_ih, b_hh, h0, c0):
    H = w_hh.shape[1]
    wih_q = fake_quant_per_row(w_ih)
    whh_q = fake_quant_per_row(w_hh)
    scale = 127.0 / jnp.maximum(jnp.max(jnp.abs(x)), _TINY)
    xq = jnp.clip(jnp.round(x * scale), -127.0, 127.0) / scale

    def step(carry, x_t):
        h, c = carry
        gates = x_t @ wih_q.T + b_ih + h @ whh_q.T + b_hh
        i = jax.nn.sigmoid(gates[:, 0:H])
        f = jax.nn.sigmoid(gates[:, H:2 * H])
        g = jnp.tanh(gates[:, 2 * H:3 * H])
        o = jax.nn.sigmoid(gates[:, 3 * H:4 * H])
        c_new = f * c + i * g
        h_new = o * jnp.tanh(c_new)
        return (h_new, c_new), h_new

    (h_n, c_n), out = jax.lax.scan(step, (h0[0], c0[0]), xq)
    return out, h_n[None], c_n[None]


# ---------------------------------------------------------------------------
if __name__ == "__main__":
    # small shapes consistent with the module (time-major, batch_first=False)
    T, B, D, H = 8, 8, 128, 128            # seq, batch, input_size, hidden_size
    G = 4 * H                               # LSTM gate_size

    key = jax.random.PRNGKey(0)
    k_x, k_wih, k_whh, k_bih, k_bhh = jax.random.split(key, 5)

    # reset_parameters(): uniform(-stdv, stdv), stdv = 1/sqrt(hidden_size)
    stdv = 1.0 / math.sqrt(H)
    w_ih = jax.random.uniform(k_wih, (G, D), jnp.float32, -stdv, stdv)
    w_hh = jax.random.uniform(k_whh, (G, H), jnp.float32, -stdv, stdv)
    b_ih = jax.random.uniform(k_bih, (G,), jnp.float32, -stdv, stdv)
    b_hh = jax.random.uniform(k_bhh, (G,), jnp.float32, -stdv, stdv)

    x = jax.random.normal(k_x, (T, B, D), jnp.float32)
    # hx defaults to zeros (forward() with hx=None)
    h0 = jnp.zeros((1, B, H), jnp.float32)
    c0 = jnp.zeros((1, B, H), jnp.float32)

    out, h_n, c_n = quant_lstm_forward(x, w_ih, w_hh, b_ih, b_hh, h0, c0)
    jax.block_until_ready((out, h_n, c_n))

    # sanity check against the pure-JAX reference
    ref_out, ref_h, ref_c = reference_lstm(x, w_ih, w_hh, b_ih, b_hh, h0, c0)
    assert jnp.allclose(out, ref_out, atol=5e-5, rtol=5e-5)
    assert jnp.allclose(h_n, ref_h, atol=5e-5, rtol=5e-5)
    assert jnp.allclose(c_n, ref_c, atol=5e-5, rtol=5e-5)

    print("KERNEL_OK")
</pallas_src>

<mosaic_0001>
module attributes {stable_mosaic.version = 11 : i64} {
  func.func @_ih_proj_kernel(%arg0: i32, %arg1: memref<1xf32, #tpu.memory_space<smem>>, %arg2: memref<64x128xf32, #tpu.memory_space<vmem>>, %arg3: memref<128x512xf32, #tpu.memory_space<vmem>>, %arg4: memref<1x512xf32, #tpu.memory_space<vmem>>, %arg5: memref<64x512xf32, #tpu.memory_space<vmem>>) attributes {dimension_semantics = [#tpu.dimension_semantics<parallel>], iteration_bounds = array<i64: 1>, scalar_prefetch = 0 : i64, scratch_operands = 0 : i64, tpu.core_type = #tpu.core_type<tc>, window_params = [{transform_indices = @transform_0, window_bounds = array<i64: 1>}, {transform_indices = @transform_1, window_bounds = array<i64: 64, 128>}, {pipeline_mode = #tpu.pipeline_mode<synchronous>, transform_indices = @transform_2, window_bounds = array<i64: 128, 512>}, {pipeline_mode = #tpu.pipeline_mode<synchronous>, transform_indices = @transform_3, window_bounds = array<i64: 1, 512>}, {transform_indices = @transform_4, window_bounds = array<i64: 64, 512>}]} {
    %c0 = arith.constant 0 : index
    %0 = memref.load %arg1[%c0] : memref<1xf32, #tpu.memory_space<smem>>
    %c0_0 = arith.constant 0 : index
    %c0_1 = arith.constant 0 : index
    %1 = vector.load %arg2[%c0_0, %c0_1] : memref<64x128xf32, #tpu.memory_space<vmem>>, vector<64x128xf32>
    %2 = vector.broadcast %0 : f32 to vector<64x128xf32>
    %3 = arith.mulf %1, %2 : vector<64x128xf32>
    %4 = math.roundeven %3 : vector<64x128xf32>
    %cst = arith.constant -1.270000e+02 : f32
    %cst_2 = arith.constant 1.270000e+02 : f32
    %5 = vector.broadcast %cst : f32 to vector<64x128xf32>
    %6 = arith.maximumf %5, %4 : vector<64x128xf32>
    %7 = vector.broadcast %cst_2 : f32 to vector<64x128xf32>
    %8 = arith.minimumf %7, %6 : vector<64x128xf32>
    %9 = vector.broadcast %0 : f32 to vector<64x128xf32>
    %10 = arith.divf %8, %9 : vector<64x128xf32>
    %c0_3 = arith.constant 0 : index
    %c0_4 = arith.constant 0 : index
    %11 = vector.load %arg3[%c0_3, %c0_4] : memref<128x512xf32, #tpu.memory_space<vmem>>, vector<128x512xf32>
    %cst_5 = arith.constant dense<0.000000e+00> : vector<64x512xf32>
    %12 = tpu.matmul %10, %11, %cst_5 {dimension_numbers = #tpu.dot_dimension_numbers<[1], [0], [0], [1], [0, 0, 1, 1], [], []>} : vector<64x128xf32>, vector<128x512xf32>, vector<64x512xf32> -> vector<64x512xf32>
    %c0_6 = arith.constant 0 : index
    %c0_7 = arith.constant 0 : index
    %13 = vector.load %arg4[%c0_6, %c0_7] : memref<1x512xf32, #tpu.memory_space<vmem>>, vector<1x512xf32>
    %14 = vector.broadcast %13 : vector<1x512xf32> to vector<64x512xf32>
    %15 = arith.addf %12, %14 : vector<64x512xf32>
    %c0_8 = arith.constant 0 : index
    %c0_9 = arith.constant 0 : index
    %16 = vector.load %arg5[%c0_8, %c0_9] : memref<64x512xf32, #tpu.memory_space<vmem>>, vector<64x512xf32>
    tpu.vector_store %arg5[%c0_8, %c0_9], %15 {strides = array<i32>} : memref<64x512xf32, #tpu.memory_space<vmem>>, vector<64x512xf32>,
    return
  }
  func.func @transform_0(%arg0: i32) -> i32 {
    %c0_i32 = arith.constant 0 : i32
    %c0_i32_0 = arith.constant 0 : i32
    return %c0_i32 : i32
  }
  func.func @transform_1(%arg0: i32) -> (i32, i32) {
    %c0_i32 = arith.constant 0 : i32
    %c0_i32_0 = arith.constant 0 : i32
    return %arg0, %c0_i32 : i32, i32
  }
  func.func @transform_2(%arg0: i32) -> (i32, i32) {
    %c0_i32 = arith.constant 0 : i32
    %c0_i32_0 = arith.constant 0 : i32
    %c0_i32_1 = arith.constant 0 : i32
    return %c0_i32, %c0_i32_0 : i32, i32
  }
  func.func @transform_3(%arg0: i32) -> (i32, i32) {
    %c0_i32 = arith.constant 0 : i32
    %c0_i32_0 = arith.constant 0 : i32
    %c0_i32_1 = arith.constant 0 : i32
    return %c0_i32, %c0_i32_0 : i32, i32
  }
  func.func @transform_4(%arg0: i32) -> (i32, i32) {
    %c0_i32 = arith.constant 0 : i32
    %c0_i32_0 = arith.constant 0 : i32
    return %arg0, %c0_i32 : i32, i32
  }
}

module attributes {stable_mosaic.version = 11 : i64} {
  func.func @_lstm_recur_kernel(%arg0: i32, %arg1: memref<64x512xf32, #tpu.memory_space<vmem>>, %arg2: memref<128x512xf32, #tpu.memory_space<vmem>>, %arg3: memref<8x128xf32, #tpu.memory_space<vmem>>, %arg4: memref<8x128xf32, #tpu.memory_space<vmem>>, %arg5: memref<64x128xf32, #tpu.memory_space<vmem>>, %arg6: memref<8x128xf32, #tpu.memory_space<vmem>>, %arg7: memref<8x128xf32, #tpu.memory_space<vmem>>, %arg8: memref<8x128xf32, #tpu.memory_space<vmem>>, %arg9: memref<8x128xf32, #tpu.memory_space<vmem>>) attributes {dimension_semantics = [#tpu.dimension_semantics<arbitrary>], iteration_bounds = array<i64: 1>, scalar_prefetch = 0 : i64, scratch_operands = 2 : i64, tpu.core_type = #tpu.core_type<tc>, window_params = [{transform_indices = @transform_0, window_bounds = array<i64: 64, 512>}, {pipeline_mode = #tpu.pipeline_mode<synchronous>, transform_indices = @transform_1, window_bounds = array<i64: 128, 512>}, {pipeline_mode = #tpu.pipeline_mode<synchronous>, transform_indices = @transform_2, window_bounds = array<i64: 8, 128>}, {pipeline_mode = #tpu.pipeline_mode<synchronous>, transform_indices = @transform_3, window_bounds = array<i64: 8, 128>}, {transform_indices = @transform_4, window_bounds = array<i64: 64, 128>}, {pipeline_mode = #tpu.pipeline_mode<synchronous>, transform_indices = @transform_5, window_bounds = array<i64: 8, 128>}, {pipeline_mode = #tpu.pipeline_mode<synchronous>, transform_indices = @transform_6, window_bounds = array<i64: 8, 128>}]} {
    %c0_i32 = arith.constant 0 : i32
    %0 = arith.cmpi eq, %arg0, %c0_i32 : i32
    %1 = arith.extui %0 : i1 to i32
    %c0_i32_0 = arith.constant 0 : i32
    %2 = arith.cmpi ne, %1, %c0_i32_0 : i32
    scf.if %2 {
      %c0_66 = arith.constant 0 : index
      %c0_67 = arith.constant 0 : index
      %210 = vector.load %arg3[%c0_66, %c0_67] : memref<8x128xf32, #tpu.memory_space<vmem>>, vector<8x128xf32>
      %c0_68 = arith.constant 0 : index
      %c0_69 = arith.constant 0 : index
      %211 = vector.load %arg8[%c0_68, %c0_69] : memref<8x128xf32, #tpu.memory_space<vmem>>, vector<8x128xf32>
      tpu.vector_store %arg8[%c0_68, %c0_69], %210 {strides = array<i32>} : memref<8x128xf32, #tpu.memory_space<vmem>>, vector<8x128xf32>,
      %c0_70 = arith.constant 0 : index
      %c0_71 = arith.constant 0 : index
      %212 = vector.load %arg4[%c0_70, %c0_71] : memref<8x128xf32, #tpu.memory_space<vmem>>, vector<8x128xf32>
      %c0_72 = arith.constant 0 : index
      %c0_73 = arith.constant 0 : index
      %213 = vector.load %arg9[%c0_72, %c0_73] : memref<8x128xf32, #tpu.memory_space<vmem>>, vector<8x128xf32>
      tpu.vector_store %arg9[%c0_72, %c0_73], %212 {strides = array<i32>} : memref<8x128xf32, #tpu.memory_space<vmem>>, vector<8x128xf32>,
    } else {
    }
    %c0 = arith.constant 0 : index
    %c0_1 = arith.constant 0 : index
    %3 = vector.load %arg8[%c0, %c0_1] : memref<8x128xf32, #tpu.memory_space<vmem>>, vector<8x128xf32>
    %c0_2 = arith.constant 0 : index
    %c0_3 = arith.constant 0 : index
    %4 = vector.load %arg9[%c0_2, %c0_3] : memref<8x128xf32, #tpu.memory_space<vmem>>, vector<8x128xf32>
    %c0_i32_4 = arith.constant 0 : i32
    %c8_i32 = arith.constant 8 : i32
    %5 = arith.muli %c0_i32_4, %c8_i32 : i32
    %6 = tpu.assume_multiple %5, 8 : i32
    %7 = arith.index_cast %6 : i32 to index
    %c0_5 = arith.constant 0 : index
    %8 = vector.load %arg1[%7, %c0_5] : memref<64x512xf32, #tpu.memory_space<vmem>>, vector<8x512xf32>
    %c0_6 = arith.constant 0 : index
    %c0_7 = arith.constant 0 : index
    %9 = vector.load %arg2[%c0_6, %c0_7] : memref<128x512xf32, #tpu.memory_space<vmem>>, vector<128x512xf32>
    %cst = arith.constant dense<0.000000e+00> : vector<8x512xf32>
    %10 = tpu.matmul %3, %9, %cst {dimension_numbers = #tpu.dot_dimension_numbers<[1], [0], [0], [1], [0, 0, 1, 1], [], []>} : vector<8x128xf32>, vector<128x512xf32>, vector<8x512xf32> -> vector<8x512xf32>
    %11 = arith.addf %8, %10 : vector<8x512xf32>
    %12 = vector.extract_strided_slice %11 {offsets = [0, 0], sizes = [8, 384], strides = [1, 1]} : vector<8x512xf32> to vector<8x384xf32>
    %13 = arith.negf %12 : vector<8x384xf32>
    %14 = math.exp %13 : vector<8x384xf32>
    %cst_8 = arith.constant 1.000000e+00 : f32
    %15 = vector.broadcast %cst_8 : f32 to vector<8x384xf32>
    %16 = arith.addf %15, %14 : vector<8x384xf32>
    %17 = arith.divf %15, %16 : vector<8x384xf32>
    %18 = vector.extract_strided_slice %11 {offsets = [0, 384], sizes = [8, 128], strides = [1, 1]} : vector<8x512xf32> to vector<8x128xf32>
    %19 = math.tanh %18 : vector<8x128xf32>
    %20 = vector.extract_strided_slice %17 {offsets = [0, 0], sizes = [8, 128], strides = [1, 1]} : vector<8x384xf32> to vector<8x128xf32>
    %21 = vector.extract_strided_slice %17 {offsets = [0, 128], sizes = [8, 128], strides = [1, 1]} : vector<8x384xf32> to vector<8x128xf32>
    %22 = vector.extract_strided_slice %17 {offsets = [0, 256], sizes = [8, 128], strides = [1, 1]} : vector<8x384xf32> to vector<8x128xf32>
    %23 = arith.mulf %21, %4 : vector<8x128xf32>
    %24 = arith.mulf %20, %19 : vector<8x128xf32>
    %25 = arith.addf %23, %24 : vector<8x128xf32>
    %26 = math.tanh %25 : vector<8x128xf32>
    %27 = arith.mulf %22, %26 : vector<8x128xf32>
    %28 = arith.index_cast %6 : i32 to index
    %c0_9 = arith.constant 0 : index
    %29 = vector.load %arg5[%28, %c0_9] : memref<64x128xf32, #tpu.memory_space<vmem>>, vector<8x128xf32>
    tpu.vector_store %arg5[%28, %c0_9], %27 {strides = array<i32>} : memref<64x128xf32, #tpu.memory_space<vmem>>, vector<8x128xf32>,
    %c1_i32 = arith.constant 1 : i32
    %c8_i32_10 = arith.constant 8 : i32
    %30 = arith.muli %c1_i32, %c8_i32_10 : i32
    %31 = tpu.assume_multiple %30, 8 : i32
    %32 = arith.index_cast %31 : i32 to index
    %c0_11 = arith.constant 0 : index
    %33 = vector.load %arg1[%32, %c0_11] : memref<64x512xf32, #tpu.memory_space<vmem>>, vector<8x512xf32>
    %c0_12 = arith.constant 0 : index
    %c0_13 = arith.constant 0 : index
    %34 = vector.load %arg2[%c0_12, %c0_13] : memref<128x512xf32, #tpu.memory_space<vmem>>, vector<128x512xf32>
    %cst_14 = arith.constant dense<0.000000e+00> : vector<8x512xf32>
    %35 = tpu.matmul %27, %34, %cst_14 {dimension_numbers = #tpu.dot_dimension_numbers<[1], [0], [0], [1], [0, 0, 1, 1], [], []>} : vector<8x128xf32>, vector<128x512xf32>, vector<8x512xf32> -> vector<8x512xf32>
    %36 = arith.addf %33, %35 : vector<8x512xf32>
    %37 = vector.extract_strided_slice %36 {offsets = [0, 0], sizes = [8, 384], strides = [1, 1]} : vector<8x512xf32> to vector<8x384xf32>
    %38 = arith.negf %37 : vector<8x384xf32>
    %39 = math.exp %38 : vector<8x384xf32>
    %cst_15 = arith.constant 1.000000e+00 : f32
    %40 = vector.broadcast %cst_15 : f32 to vector<8x384xf32>
    %41 = arith.addf %40, %39 : vector<8x384xf32>
    %42 = arith.divf %40, %41 : vector<8x384xf32>
    %43 = vector.extract_strided_slice %36 {offsets = [0, 384], sizes = [8, 128], strides = [1, 1]} : vector<8x512xf32> to vector<8x128xf32>
    %44 = math.tanh %43 : vector<8x128xf32>
    %45 = vector.extract_strided_slice %42 {offsets = [0, 0], sizes = [8, 128], strides = [1, 1]} : vector<8x384xf32> to vector<8x128xf32>
    %46 = vector.extract_strided_slice %42 {offsets = [0, 128], sizes = [8, 128], strides = [1, 1]} : vector<8x384xf32> to vector<8x128xf32>
    %47 = vector.extract_strided_slice %42 {offsets = [0, 256], sizes = [8, 128], strides = [1, 1]} : vector<8x384xf32> to vector<8x128xf32>
    %48 = arith.mulf %46, %25 : vector<8x128xf32>
    %49 = arith.mulf %45, %44 : vector<8x128xf32>
    %50 = arith.addf %48, %49 : vector<8x128xf32>
    %51 = math.tanh %50 : vector<8x128xf32>
    %52 = arith.mulf %47, %51 : vector<8x128xf32>
    %53 = arith.index_cast %31 : i32 to index
    %c0_16 = arith.constant 0 : index
    %54 = vector.load %arg5[%53, %c0_16] : memref<64x128xf32, #tpu.memory_space<vmem>>, vector<8x128xf32>
    tpu.vector_store %arg5[%53, %c0_16], %52 {strides = array<i32>} : memref<64x128xf32, #tpu.memory_space<vmem>>, vector<8x128xf32>,
    %c2_i32 = arith.constant 2 : i32
    %c8_i32_17 = arith.constant 8 : i32
    %55 = arith.muli %c2_i32, %c8_i32_17 : i32
    %56 = tpu.assume_multiple %55, 8 : i32
    %57 = arith.index_cast %56 : i32 to index
    %c0_18 = arith.constant 0 : index
    %58 = vector.load %arg1[%57, %c0_18] : memref<64x512xf32, #tpu.memory_space<vmem>>, vector<8x512xf32>
    %c0_19 = arith.constant 0 : index
    %c0_20 = arith.constant 0 : index
    %59 = vector.load %arg2[%c0_19, %c0_20] : memref<128x512xf32, #tpu.memory_space<vmem>>, vector<128x512xf32>
    %cst_21 = arith.constant dense<0.000000e+00> : vector<8x512xf32>
    %60 = tpu.matmul %52, %59, %cst_21 {dimension_numbers = #tpu.dot_dimension_numbers<[1], [0], [0], [1], [0, 0, 1, 1], [], []>} : vector<8x128xf32>, vector<128x512xf32>, vector<8x512xf32> -> vector<8x512xf32>
    %61 = arith.addf %58, %60 : vector<8x512xf32>
    %62 = vector.extract_strided_slice %61 {offsets = [0, 0], sizes = [8, 384], strides = [1, 1]} : vector<8x512xf32> to vector<8x384xf32>
    %63 = arith.negf %62 : vector<8x384xf32>
    %64 = math.exp %63 : vector<8x384xf32>
    %cst_22 = arith.constant 1.000000e+00 : f32
    %65 = vector.broadcast %cst_22 : f32 to vector<8x384xf32>
    %66 = arith.addf %65, %64 : vector<8x384xf32>
    %67 = arith.divf %65, %66 : vector<8x384xf32>
    %68 = vector.extract_strided_slice %61 {offsets = [0, 384], sizes = [8, 128], strides = [1, 1]} : vector<8x512xf32> to vector<8x128xf32>
    %69 = math.tanh %68 : vector<8x128xf32>
    %70 = vector.extract_strided_slice %67 {offsets = [0, 0], sizes = [8, 128], strides = [1, 1]} : vector<8x384xf32> to vector<8x128xf32>
    %71 = vector.extract_strided_slice %67 {offsets = [0, 128], sizes = [8, 128], strides = [1, 1]} : vector<8x384xf32> to vector<8x128xf32>
    %72 = vector.extract_strided_slice %67 {offsets = [0, 256], sizes = [8, 128], strides = [1, 1]} : vector<8x384xf32> to vector<8x128xf32>
    %73 = arith.mulf %71, %50 : vector<8x128xf32>
    %74 = arith.mulf %70, %69 : vector<8x128xf32>
    %75 = arith.addf %73, %74 : vector<8x128xf32>
    %76 = math.tanh %75 : vector<8x128xf32>
    %77 = arith.mulf %72, %76 : vector<8x128xf32>
    %78 = arith.index_cast %56 : i32 to index
    %c0_23 = arith.constant 0 : index
    %79 = vector.load %arg5[%78, %c0_23] : memref<64x128xf32, #tpu.memory_space<vmem>>, vector<8x128xf32>
    tpu.vector_store %arg5[%78, %c0_23], %77 {strides = array<i32>} : memref<64x128xf32, #tpu.memory_space<vmem>>, vector<8x128xf32>,
    %c3_i32 = arith.constant 3 : i32
    %c8_i32_24 = arith.constant 8 : i32
    %80 = arith.muli %c3_i32, %c8_i32_24 : i32
    %81 = tpu.assume_multiple %80, 8 : i32
    %82 = arith.index_cast %81 : i32 to index
    %c0_25 = arith.constant 0 : index
    %83 = vector.load %arg1[%82, %c0_25] : memref<64x512xf32, #tpu.memory_space<vmem>>, vector<8x512xf32>
    %c0_26 = arith.constant 0 : index
    %c0_27 = arith.constant 0 : index
    %84 = vector.load %arg2[%c0_26, %c0_27] : memref<128x512xf32, #tpu.memory_space<vmem>>, vector<128x512xf32>
    %cst_28 = arith.constant dense<0.000000e+00> : vector<8x512xf32>
    %85 = tpu.matmul %77, %84, %cst_28 {dimension_numbers = #tpu.dot_dimension_numbers<[1], [0], [0], [1], [0, 0, 1, 1], [], []>} : vector<8x128xf32>, vector<128x512xf32>, vector<8x512xf32> -> vector<8x512xf32>
    %86 = arith.addf %83, %85 : vector<8x512xf32>
    %87 = vector.extract_strided_slice %86 {offsets = [0, 0], sizes = [8, 384], strides = [1, 1]} : vector<8x512xf32> to vector<8x384xf32>
    %88 = arith.negf %87 : vector<8x384xf32>
    %89 = math.exp %88 : vector<8x384xf32>
    %cst_29 = arith.constant 1.000000e+00 : f32
    %90 = vector.broadcast %cst_29 : f32 to vector<8x384xf32>
    %91 = arith.addf %90, %89 : vector<8x384xf32>
    %92 = arith.divf %90, %91 : vector<8x384xf32>
    %93 = vector.extract_strided_slice %86 {offsets = [0, 384], sizes = [8, 128], strides = [1, 1]} : vector<8x512xf32> to vector<8x128xf32>
    %94 = math.tanh %93 : vector<8x128xf32>
    %95 = vector.extract_strided_slice %92 {offsets = [0, 0], sizes = [8, 128], strides = [1, 1]} : vector<8x384xf32> to vector<8x128xf32>
    %96 = vector.extract_strided_slice %92 {offsets = [0, 128], sizes = [8, 128], strides = [1, 1]} : vector<8x384xf32> to vector<8x128xf32>
    %97 = vector.extract_strided_slice %92 {offsets = [0, 256], sizes = [8, 128], strides = [1, 1]} : vector<8x384xf32> to vector<8x128xf32>
    %98 = arith.mulf %96, %75 : vector<8x128xf32>
    %99 = arith.mulf %95, %94 : vector<8x128xf32>
    %100 = arith.addf %98, %99 : vector<8x128xf32>
    %101 = math.tanh %100 : vector<8x128xf32>
    %102 = arith.mulf %97, %101 : vector<8x128xf32>
    %103 = arith.index_cast %81 : i32 to index
    %c0_30 = arith.constant 0 : index
    %104 = vector.load %arg5[%103, %c0_30] : memref<64x128xf32, #tpu.memory_space<vmem>>, vector<8x128xf32>
    tpu.vector_store %arg5[%103, %c0_30], %102 {strides = array<i32>} : memref<64x128xf32, #tpu.memory_space<vmem>>, vector<8x128xf32>,
    %c4_i32 = arith.constant 4 : i32
    %c8_i32_31 = arith.constant 8 : i32
    %105 = arith.muli %c4_i32, %c8_i32_31 : i32
    %106 = tpu.assume_multiple %105, 8 : i32
    %107 = arith.index_cast %106 : i32 to index
    %c0_32 = arith.constant 0 : index
    %108 = vector.load %arg1[%107, %c0_32] : memref<64x512xf32, #tpu.memory_space<vmem>>, vector<8x512xf32>
    %c0_33 = arith.constant 0 : index
    %c0_34 = arith.constant 0 : index
    %109 = vector.load %arg2[%c0_33, %c0_34] : memref<128x512xf32, #tpu.memory_space<vmem>>, vector<128x512xf32>
    %cst_35 = arith.constant dense<0.000000e+00> : vector<8x512xf32>
    %110 = tpu.matmul %102, %109, %cst_35 {dimension_numbers = #tpu.dot_dimension_numbers<[1], [0], [0], [1], [0, 0, 1, 1], [], []>} : vector<8x128xf32>, vector<128x512xf32>, vector<8x512xf32> -> vector<8x512xf32>
    %111 = arith.addf %108, %110 : vector<8x512xf32>
    %112 = vector.extract_strided_slice %111 {offsets = [0, 0], sizes = [8, 384], strides = [1, 1]} : vector<8x512xf32> to vector<8x384xf32>
    %113 = arith.negf %112 : vector<8x384xf32>
    %114 = math.exp %113 : vector<8x384xf32>
    %cst_36 = arith.constant 1.000000e+00 : f32
    %115 = vector.broadcast %cst_36 : f32 to vector<8x384xf32>
    %116 = arith.addf %115, %114 : vector<8x384xf32>
    %117 = arith.divf %115, %116 : vector<8x384xf32>
    %118 = vector.extract_strided_slice %111 {offsets = [0, 384], sizes = [8, 128], strides = [1, 1]} : vector<8x512xf32> to vector<8x128xf32>
    %119 = math.tanh %118 : vector<8x128xf32>
    %120 = vector.extract_strided_slice %117 {offsets = [0, 0], sizes = [8, 128], strides = [1, 1]} : vector<8x384xf32> to vector<8x128xf32>
    %121 = vector.extract_strided_slice %117 {offsets = [0, 128], sizes = [8, 128], strides = [1, 1]} : vector<8x384xf32> to vector<8x128xf32>
    %122 = vector.extract_strided_slice %117 {offsets = [0, 256], sizes = [8, 128], strides = [1, 1]} : vector<8x384xf32> to vector<8x128xf32>
    %123 = arith.mulf %121, %100 : vector<8x128xf32>
    %124 = arith.mulf %120, %119 : vector<8x128xf32>
    %125 = arith.addf %123, %124 : vector<8x128xf32>
    %126 = math.tanh %125 : vector<8x128xf32>
    %127 = arith.mulf %122, %126 : vector<8x128xf32>
    %128 = arith.index_cast %106 : i32 to index
    %c0_37 = arith.constant 0 : index
    %129 = vector.load %arg5[%128, %c0_37] : memref<64x128xf32, #tpu.memory_space<vmem>>, vector<8x128xf32>
    tpu.vector_store %arg5[%128, %c0_37], %127 {strides = array<i32>} : memref<64x128xf32, #tpu.memory_space<vmem>>, vector<8x128xf32>,
    %c5_i32 = arith.constant 5 : i32
    %c8_i32_38 = arith.constant 8 : i32
    %130 = arith.muli %c5_i32, %c8_i32_38 : i32
    %131 = tpu.assume_multiple %130, 8 : i32
    %132 = arith.index_cast %131 : i32 to index
    %c0_39 = arith.constant 0 : index
    %133 = vector.load %arg1[%132, %c0_39] : memref<64x512xf32, #tpu.memory_space<vmem>>, vector<8x512xf32>
    %c0_40 = arith.constant 0 : index
    %c0_41 = arith.constant 0 : index
    %134 = vector.load %arg2[%c0_40, %c0_41] : memref<128x512xf32, #tpu.memory_space<vmem>>, vector<128x512xf32>
    %cst_42 = arith.constant dense<0.000000e+00> : vector<8x512xf32>
    %135 = tpu.matmul %127, %134, %cst_42 {dimension_numbers = #tpu.dot_dimension_numbers<[1], [0], [0], [1], [0, 0, 1, 1], [], []>} : vector<8x128xf32>, vector<128x512xf32>, vector<8x512xf32> -> vector<8x512xf32>
    %136 = arith.addf %133, %135 : vector<8x512xf32>
    %137 = vector.extract_strided_slice %136 {offsets = [0, 0], sizes = [8, 384], strides = [1, 1]} : vector<8x512xf32> to vector<8x384xf32>
    %138 = arith.negf %137 : vector<8x384xf32>
    %139 = math.exp %138 : vector<8x384xf32>
    %cst_43 = arith.constant 1.000000e+00 : f32
    %140 = vector.broadcast %cst_43 : f32 to vector<8x384xf32>
    %141 = arith.addf %140, %139 : vector<8x384xf32>
    %142 = arith.divf %140, %141 : vector<8x384xf32>
    %143 = vector.extract_strided_slice %136 {offsets = [0, 384], sizes = [8, 128], strides = [1, 1]} : vector<8x512xf32> to vector<8x128xf32>
    %144 = math.tanh %143 : vector<8x128xf32>
    %145 = vector.extract_strided_slice %142 {offsets = [0, 0], sizes = [8, 128], strides = [1, 1]} : vector<8x384xf32> to vector<8x128xf32>
    %146 = vector.extract_strided_slice %142 {offsets = [0, 128], sizes = [8, 128], strides = [1, 1]} : vector<8x384xf32> to vector<8x128xf32>
    %147 = vector.extract_strided_slice %142 {offsets = [0, 256], sizes = [8, 128], strides = [1, 1]} : vector<8x384xf32> to vector<8x128xf32>
    %148 = arith.mulf %146, %125 : vector<8x128xf32>
    %149 = arith.mulf %145, %144 : vector<8x128xf32>
    %150 = arith.addf %148, %149 : vector<8x128xf32>
    %151 = math.tanh %150 : vector<8x128xf32>
    %152 = arith.mulf %147, %151 : vector<8x128xf32>
    %153 = arith.index_cast %131 : i32 to index
    %c0_44 = arith.constant 0 : index
    %154 = vector.load %arg5[%153, %c0_44] : memref<64x128xf32, #tpu.memory_space<vmem>>, vector<8x128xf32>
    tpu.vector_store %arg5[%153, %c0_44], %152 {strides = array<i32>} : memref<64x128xf32, #tpu.memory_space<vmem>>, vector<8x128xf32>,
    %c6_i32 = arith.constant 6 : i32
    %c8_i32_45 = arith.constant 8 : i32
    %155 = arith.muli %c6_i32, %c8_i32_45 : i32
    %156 = tpu.assume_multiple %155, 8 : i32
    %157 = arith.index_cast %156 : i32 to index
    %c0_46 = arith.constant 0 : index
    %158 = vector.load %arg1[%157, %c0_46] : memref<64x512xf32, #tpu.memory_space<vmem>>, vector<8x512xf32>
    %c0_47 = arith.constant 0 : index
    %c0_48 = arith.constant 0 : index
    %159 = vector.load %arg2[%c0_47, %c0_48] : memref<128x512xf32, #tpu.memory_space<vmem>>, vector<128x512xf32>
    %cst_49 = arith.constant dense<0.000000e+00> : vector<8x512xf32>
    %160 = tpu.matmul %152, %159, %cst_49 {dimension_numbers = #tpu.dot_dimension_numbers<[1], [0], [0], [1], [0, 0, 1, 1], [], []>} : vector<8x128xf32>, vector<128x512xf32>, vector<8x512xf32> -> vector<8x512xf32>
    %161 = arith.addf %158, %160 : vector<8x512xf32>
    %162 = vector.extract_strided_slice %161 {offsets = [0, 0], sizes = [8, 384], strides = [1, 1]} : vector<8x512xf32> to vector<8x384xf32>
    %163 = arith.negf %162 : vector<8x384xf32>
    %164 = math.exp %163 : vector<8x384xf32>
    %cst_50 = arith.constant 1.000000e+00 : f32
    %165 = vector.broadcast %cst_50 : f32 to vector<8x384xf32>
    %166 = arith.addf %165, %164 : vector<8x384xf32>
    %167 = arith.divf %165, %166 : vector<8x384xf32>
    %168 = vector.extract_strided_slice %161 {offsets = [0, 384], sizes = [8, 128], strides = [1, 1]} : vector<8x512xf32> to vector<8x128xf32>
    %169 = math.tanh %168 : vector<8x128xf32>
    %170 = vector.extract_strided_slice %167 {offsets = [0, 0], sizes = [8, 128], strides = [1, 1]} : vector<8x384xf32> to vector<8x128xf32>
    %171 = vector.extract_strided_slice %167 {offsets = [0, 128], sizes = [8, 128], strides = [1, 1]} : vector<8x384xf32> to vector<8x128xf32>
    %172 = vector.extract_strided_slice %167 {offsets = [0, 256], sizes = [8, 128], strides = [1, 1]} : vector<8x384xf32> to vector<8x128xf32>
    %173 = arith.mulf %171, %150 : vector<8x128xf32>
    %174 = arith.mulf %170, %169 : vector<8x128xf32>
    %175 = arith.addf %173, %174 : vector<8x128xf32>
    %176 = math.tanh %175 : vector<8x128xf32>
    %177 = arith.mulf %172, %176 : vector<8x128xf32>
    %178 = arith.index_cast %156 : i32 to index
    %c0_51 = arith.constant 0 : index
    %179 = vector.load %arg5[%178, %c0_51] : memref<64x128xf32, #tpu.memory_space<vmem>>, vector<8x128xf32>
    tpu.vector_store %arg5[%178, %c0_51], %177 {strides = array<i32>} : memref<64x128xf32, #tpu.memory_space<vmem>>, vector<8x128xf32>,
    %c7_i32 = arith.constant 7 : i32
    %c8_i32_52 = arith.constant 8 : i32
    %180 = arith.muli %c7_i32, %c8_i32_52 : i32
    %181 = tpu.assume_multiple %180, 8 : i32
    %182 = arith.index_cast %181 : i32 to index
    %c0_53 = arith.constant 0 : index
    %183 = vector.load %arg1[%182, %c0_53] : memref<64x512xf32, #tpu.memory_space<vmem>>, vector<8x512xf32>
    %c0_54 = arith.constant 0 : index
    %c0_55 = arith.constant 0 : index
    %184 = vector.load %arg2[%c0_54, %c0_55] : memref<128x512xf32, #tpu.memory_space<vmem>>, vector<128x512xf32>
    %cst_56 = arith.constant dense<0.000000e+00> : vector<8x512xf32>
    %185 = tpu.matmul %177, %184, %cst_56 {dimension_numbers = #tpu.dot_dimension_numbers<[1], [0], [0], [1], [0, 0, 1, 1], [], []>} : vector<8x128xf32>, vector<128x512xf32>, vector<8x512xf32> -> vector<8x512xf32>
    %186 = arith.addf %183, %185 : vector<8x512xf32>
    %187 = vector.extract_strided_slice %186 {offsets = [0, 0], sizes = [8, 384], strides = [1, 1]} : vector<8x512xf32> to vector<8x384xf32>
    %188 = arith.negf %187 : vector<8x384xf32>
    %189 = math.exp %188 : vector<8x384xf32>
    %cst_57 = arith.constant 1.000000e+00 : f32
    %190 = vector.broadcast %cst_57 : f32 to vector<8x384xf32>
    %191 = arith.addf %190, %189 : vector<8x384xf32>
    %192 = arith.divf %190, %191 : vector<8x384xf32>
    %193 = vector.extract_strided_slice %186 {offsets = [0, 384], sizes = [8, 128], strides = [1, 1]} : vector<8x512xf32> to vector<8x128xf32>
    %194 = math.tanh %193 : vector<8x128xf32>
    %195 = vector.extract_strided_slice %192 {offsets = [0, 0], sizes = [8, 128], strides = [1, 1]} : vector<8x384xf32> to vector<8x128xf32>
    %196 = vector.extract_strided_slice %192 {offsets = [0, 128], sizes = [8, 128], strides = [1, 1]} : vector<8x384xf32> to vector<8x128xf32>
    %197 = vector.extract_strided_slice %192 {offsets = [0, 256], sizes = [8, 128], strides = [1, 1]} : vector<8x384xf32> to vector<8x128xf32>
    %198 = arith.mulf %196, %175 : vector<8x128xf32>
    %199 = arith.mulf %195, %194 : vector<8x128xf32>
    %200 = arith.addf %198, %199 : vector<8x128xf32>
    %201 = math.tanh %200 : vector<8x128xf32>
    %202 = arith.mulf %197, %201 : vector<8x128xf32>
    %203 = arith.index_cast %181 : i32 to index
    %c0_58 = arith.constant 0 : index
    %204 = vector.load %arg5[%203, %c0_58] : memref<64x128xf32, #tpu.memory_space<vmem>>, vector<8x128xf32>
    tpu.vector_store %arg5[%203, %c0_58], %202 {strides = array<i32>} : memref<64x128xf32, #tpu.memory_space<vmem>>, vector<8x128xf32>,
    %c8_i32_59 = arith.constant 8 : i32
    %c0_60 = arith.constant 0 : index
    %c0_61 = arith.constant 0 : index
    %205 = vector.load %arg8[%c0_60, %c0_61] : memref<8x128xf32, #tpu.memory_space<vmem>>, vector<8x128xf32>
    tpu.vector_store %arg8[%c0_60, %c0_61], %202 {strides = array<i32>} : memref<8x128xf32, #tpu.memory_space<vmem>>, vector<8x128xf32>,
    %c0_62 = arith.constant 0 : index
    %c0_63 = arith.constant 0 : index
    %206 = vector.load %arg9[%c0_62, %c0_63] : memref<8x128xf32, #tpu.memory_space<vmem>>, vector<8x128xf32>
    tpu.vector_store %arg9[%c0_62, %c0_63], %200 {strides = array<i32>} : memref<8x128xf32, #tpu.memory_space<vmem>>, vector<8x128xf32>,
    %c0_i32_64 = arith.constant 0 : i32
    %207 = arith.cmpi eq, %arg0, %c0_i32_64 : i32
    %208 = arith.extui %207 : i1 to i32
    %c0_i32_65 = arith.constant 0 : i32
    %209 = arith.cmpi ne, %208, %c0_i32_65 : i32
    scf.if %209 {
      %c0_66 = arith.constant 0 : index
      %c0_67 = arith.constant 0 : index
      %210 = vector.load %arg6[%c0_66, %c0_67] : memref<8x128xf32, #tpu.memory_space<vmem>>, vector<8x128xf32>
      tpu.vector_store %arg6[%c0_66, %c0_67], %202 {strides = array<i32>} : memref<8x128xf32, #tpu.memory_space<vmem>>, vector<8x128xf32>,
      %c0_68 = arith.constant 0 : index
      %c0_69 = arith.constant 0 : index
      %211 = vector.load %arg7[%c0_68, %c0_69] : memref<8x128xf32, #tpu.memory_space<vmem>>, vector<8x128xf32>
      tpu.vector_store %arg7[%c0_68, %c0_69], %200 {strides = array<i32>} : memref<8x128xf32, #tpu.memory_space<vmem>>, vector<8x128xf32>,
    } else {
    }
    return
  }
  func.func @transform_0(%arg0: i32) -> (i32, i32) {
    %c0_i32 = arith.constant 0 : i32
    %c0_i32_0 = arith.constant 0 : i32
    return %arg0, %c0_i32 : i32, i32
  }
  func.func @transform_1(%arg0: i32) -> (i32, i32) {
    %c0_i32 = arith.constant 0 : i32
    %c0_i32_0 = arith.constant 0 : i32
    %c0_i32_1 = arith.constant 0 : i32
    return %c0_i32, %c0_i32_0 : i32, i32
  }
  func.func @transform_2(%arg0: i32) -> (i32, i32) {
    %c0_i32 = arith.constant 0 : i32
    %c0_i32_0 = arith.constant 0 : i32
    %c0_i32_1 = arith.constant 0 : i32
    return %c0_i32, %c0_i32_0 : i32, i32
  }
  func.func @transform_3(%arg0: i32) -> (i32, i32) {
    %c0_i32 = arith.constant 0 : i32
    %c0_i32_0 = arith.constant 0 : i32
    %c0_i32_1 = arith.constant 0 : i32
    return %c0_i32, %c0_i32_0 : i32, i32
  }
  func.func @transform_4(%arg0: i32) -> (i32, i32) {
    %c0_i32 = arith.constant 0 : i32
    %c0_i32_0 = arith.constant 0 : i32
    return %arg0, %c0_i32 : i32, i32
  }
  func.func @transform_5(%arg0: i32) -> (i32, i32) {
    %c0_i32 = arith.constant 0 : i32
    %c0_i32_0 = arith.constant 0 : i32
    %c0_i32_1 = arith.constant 0 : i32
    return %c0_i32, %c0_i32_0 : i32, i32
  }
  func.func @transform_6(%arg0: i32) -> (i32, i32) {
    %c0_i32 = arith.constant 0 : i32
    %c0_i32_0 = arith.constant 0 : i32
    %c0_i32_1 = arith.constant 0 : i32
    return %c0_i32, %c0_i32_0 : i32, i32
  }
}

</mosaic_0001>

<llo_original>
// kernel: quant_lstm_forward.2
$region0: #{quant_lstm_forward.2}
  #allocation0 [shape = 'u32[]', space=smem, size = 0x4, offset = 0x4, fixed_abs, tag = 'smem constant byte address 0x4 - core index']
  #allocation1 [shape = 'u32[144,128]{1,0:T(1,128)}', space=vmem, size = 0x12000, scoped, tag = 'internal scratch']
  #allocation2 [shape = 'f32[1]{0:T(128)S(6)}', space=smem, size = 0x200, scoped, tag = 'scoped memory for quant_lstm_forward.2']
  %s0 = inlined_call_operand.<no memory space> [shape: f32[1], index: 0, kind: input, shape index: {}]
  %s1 = inlined_call_operand.vmem [shape: f32[64,128], index: 1, kind: input, shape index: {}]
  %s2 = inlined_call_operand.vmem [shape: f32[128,512], index: 2, kind: input, shape index: {}]
  %s3 = inlined_call_operand.vmem [shape: f32[1,512], index: 3, kind: input, shape index: {}]
  %s4 = inlined_call_operand.vmem [shape: f32[64,512], index: 4, kind: output, shape index: {}]
  %s5 = sld [smem:[#allocation0]]
  $region26: #{quant_lstm_forward.2} parent=0
    _
  %s7 = ssub.s32 1, %s5
  %s8 = scalar_select 0, %s7, %s5
  %9 = sst [smem:[#allocation2]] %s0
  // Predicated region
  $region2: #{quant_lstm_forward.2} parent=0 // pred_check
    _
  $region3: #{quant_lstm_forward.2} parent=0 // pred_check_branch
    %11 = sbr.rel (0) target = $region5
  $region4: #{quant_lstm_forward.2} parent=0 // pred_region
    _
  $region5: #{quant_lstm_forward.2} parent=0 // pred_fallthru
    _
  // Predicated region
  $region6: #{quant_lstm_forward.2} parent=0 // pred_check
    _
  $region7: #{quant_lstm_forward.2} parent=0 // pred_check_branch
    %13 = sbr.rel (0) target = $region9
  $region8: #{quant_lstm_forward.2} parent=0 // pred_region
    _
  $region9: #{quant_lstm_forward.2} parent=0 // pred_fallthru
    _
  // Predicated region
  $region10: #{quant_lstm_forward.2} parent=0 // pred_check
    _
  $region11: #{quant_lstm_forward.2} parent=0 // pred_check_branch
    %15 = sbr.rel (0) target = $region13
  $region12: #{quant_lstm_forward.2} parent=0 // pred_region
    _
  $region13: #{quant_lstm_forward.2} parent=0 // pred_fallthru
    _
  // Predicated region
  $region14: #{quant_lstm_forward.2} parent=0 // pred_check
    _
  $region15: #{quant_lstm_forward.2} parent=0 // pred_check_branch
    %17 = sbr.rel (0) target = $region17
  $region16: #{quant_lstm_forward.2} parent=0 // pred_region
    _
  $region17: #{quant_lstm_forward.2} parent=0 // pred_fallthru
    _
  %s18 = sld [smem:[#allocation2]]
  %v19 = vld [vmem:[%s1] sm:$0xff]
  %v20 = vld [vmem:[%s1 + $0x8] sm:$0xff]
  %v21 = vld [vmem:[%s1 + $0x10] sm:$0xff]
  %v22 = vld [vmem:[%s1 + $0x18] sm:$0xff]
  %v23 = vld [vmem:[%s1 + $0x20] sm:$0xff]
  %v24 = vld [vmem:[%s1 + $0x28] sm:$0xff]
  %v25 = vld [vmem:[%s1 + $0x30] sm:$0xff]
  %v26 = vld [vmem:[%s1 + $0x38] sm:$0xff]
  %v27 = vstv %s18
  %v28 = vmul.f32 %v19, %v27
  %v29 = vmul.f32 %v20, %v27
  %v30 = vmul.f32 %v21, %v27
  %v31 = vmul.f32 %v22, %v27
  %v32 = vmul.f32 %v23, %v27
  %v33 = vmul.f32 %v24, %v27
  %v34 = vmul.f32 %v25, %v27
  %v35 = vmul.f32 %v26, %v27
  %v36 = vround.ne.pseudo %v28
  %v37 = vround.ne.pseudo %v29
  %v38 = vround.ne.pseudo %v30
  %v39 = vround.ne.pseudo %v31
  %v40 = vround.ne.pseudo %v32
  %v41 = vround.ne.pseudo %v33
  %v42 = vround.ne.pseudo %v34
  %v43 = vround.ne.pseudo %v35
  %v44 = vmax.f32 %v36, -127.0
  %v45 = vmax.f32 %v37, -127.0
  %v46 = vmax.f32 %v38, -127.0
  %v47 = vmax.f32 %v39, -127.0
  %v48 = vmax.f32 %v40, -127.0
  %v49 = vmax.f32 %v41, -127.0
  %v50 = vmax.f32 %v42, -127.0
  %v51 = vmax.f32 %v43, -127.0
  %v52 = vmin.f32 %v44, 127.0
  %v53 = vmin.f32 %v45, 127.0
  %v54 = vmin.f32 %v46, 127.0
  %v55 = vmin.f32 %v47, 127.0
  %v56 = vmin.f32 %v48, 127.0
  %v57 = vmin.f32 %v49, 127.0
  %v58 = vmin.f32 %v50, 127.0
  %v59 = vmin.f32 %v51, 127.0
  %v60 = vrcp.pop %v27
  %v61 = vmul.f32 %v52, %v60
  %v62 = vmul.f32 %v53, %v60
  %v63 = vmul.f32 %v54, %v60
  %v64 = vmul.f32 %v55, %v60
  %v65 = vmul.f32 %v56, %v60
  %v66 = vmul.f32 %v57, %v60
  %v67 = vmul.f32 %v58, %v60
  %v68 = vmul.f32 %v59, %v60
  %v69 = vld [vmem:[%s2] sm:$0xff]
  %v70 = vld [vmem:[%s2 + $0x8] sm:$0xff]
  %v71 = vld [vmem:[%s2 + $0x10] sm:$0xff]
  %v72 = vld [vmem:[%s2 + $0x18] sm:$0xff]
  %v73 = vld [vmem:[%s2 + $0x20] sm:$0xff]
  %v74 = vld [vmem:[%s2 + $0x28] sm:$0xff]
  %v75 = vld [vmem:[%s2 + $0x30] sm:$0xff]
  %v76 = vld [vmem:[%s2 + $0x38] sm:$0xff]
  %v77 = vld [vmem:[%s2 + $0x40] sm:$0xff]
  %v78 = vld [vmem:[%s2 + $0x48] sm:$0xff]
  %v79 = vld [vmem:[%s2 + $0x50] sm:$0xff]
  %v80 = vld [vmem:[%s2 + $0x58] sm:$0xff]
  %v81 = vld [vmem:[%s2 + $0x60] sm:$0xff]
  %v82 = vld [vmem:[%s2 + $0x68] sm:$0xff]
  %v83 = vld [vmem:[%s2 + $0x70] sm:$0xff]
  %v84 = vld [vmem:[%s2 + $0x78] sm:$0xff]
  %v85 = vld [vmem:[%s2 + $0x80] sm:$0xff]
  %v86 = vld [vmem:[%s2 + $0x88] sm:$0xff]
  %v87 = vld [vmem:[%s2 + $0x90] sm:$0xff]
  %v88 = vld [vmem:[%s2 + $0x98] sm:$0xff]
  %v89 = vld [vmem:[%s2 + $0xa0] sm:$0xff]
  %v90 = vld [vmem:[%s2 + $0xa8] sm:$0xff]
  %v91 = vld [vmem:[%s2 + $0xb0] sm:$0xff]
  %v92 = vld [vmem:[%s2 + $0xb8] sm:$0xff]
  %v93 = vld [vmem:[%s2 + $0xc0] sm:$0xff]
  %v94 = vld [vmem:[%s2 + $0xc8] sm:$0xff]
  %v95 = vld [vmem:[%s2 + $0xd0] sm:$0xff]
  %v96 = vld [vmem:[%s2 + $0xd8] sm:$0xff]
  %v97 = vld [vmem:[%s2 + $0xe0] sm:$0xff]
  %v98 = vld [vmem:[%s2 + $0xe8] sm:$0xff]
  %v99 = vld [vmem:[%s2 + $0xf0] sm:$0xff]
  %v100 = vld [vmem:[%s2 + $0xf8] sm:$0xff]
  %v101 = vld [vmem:[%s2 + $0x100] sm:$0xff]
  %v102 = vld [vmem:[%s2 + $0x108] sm:$0xff]
  %v103 = vld [vmem:[%s2 + $0x110] sm:$0xff]
  %v104 = vld [vmem:[%s2 + $0x118] sm:$0xff]
  %v105 = vld [vmem:[%s2 + $0x120] sm:$0xff]
  %v106 = vld [vmem:[%s2 + $0x128] sm:$0xff]
  %v107 = vld [vmem:[%s2 + $0x130] sm:$0xff]
  %v108 = vld [vmem:[%s2 + $0x138] sm:$0xff]
  %v109 = vld [vmem:[%s2 + $0x140] sm:$0xff]
  %v110 = vld [vmem:[%s2 + $0x148] sm:$0xff]
  %v111 = vld [vmem:[%s2 + $0x150] sm:$0xff]
  %v112 = vld [vmem:[%s2 + $0x158] sm:$0xff]
  %v113 = vld [vmem:[%s2 + $0x160] sm:$0xff]
  %v114 = vld [vmem:[%s2 + $0x168] sm:$0xff]
  %v115 = vld [vmem:[%s2 + $0x170] sm:$0xff]
  %v116 = vld [vmem:[%s2 + $0x178] sm:$0xff]
  %v117 = vld [vmem:[%s2 + $0x180] sm:$0xff]
  %v118 = vld [vmem:[%s2 + $0x188] sm:$0xff]
  %v119 = vld [vmem:[%s2 + $0x190] sm:$0xff]
  %v120 = vld [vmem:[%s2 + $0x198] sm:$0xff]
  %v121 = vld [vmem:[%s2 + $0x1a0] sm:$0xff]
  %v122 = vld [vmem:[%s2 + $0x1a8] sm:$0xff]
  %v123 = vld [vmem:[%s2 + $0x1b0] sm:$0xff]
  %v124 = vld [vmem:[%s2 + $0x1b8] sm:$0xff]
  %v125 = vld [vmem:[%s2 + $0x1c0] sm:$0xff]
  %v126 = vld [vmem:[%s2 + $0x1c8] sm:$0xff]
  %v127 = vld [vmem:[%s2 + $0x1d0] sm:$0xff]
  %v128 = vld [vmem:[%s2 + $0x1d8] sm:$0xff]
  %v129 = vld [vmem:[%s2 + $0x1e0] sm:$0xff]
  %v130 = vld [vmem:[%s2 + $0x1e8] sm:$0xff]
  %v131 = vld [vmem:[%s2 + $0x1f0] sm:$0xff]
  %v132 = vld [vmem:[%s2 + $0x1f8] sm:$0xff]
  %v133 = vld [vmem:[%s3] sm:$0xf]
  %v135 = vlaneseq
  %v136 = vshrl.u32 %v135, 7
  %v137 = vsub.s32 0, %v136
  %v138 = vrot.slane %v133, %v137
  %v139 = vlaneseq
  %v140 = vshrl.u32 %v139, 7
  %v141 = vsub.s32 1, %v140
  %v142 = vrot.slane %v133, %v141
  %v143 = vlaneseq
  %v144 = vshrl.u32 %v143, 7
  %v145 = vsub.s32 2, %v144
  %v146 = vrot.slane %v133, %v145
  %v147 = vlaneseq
  %v148 = vshrl.u32 %v147, 7
  %v149 = vsub.s32 3, %v148
  %v150 = vrot.slane %v133, %v149
  %155 = vmatprep.subr.mxu0 %v130
  %156 = vmatpush1.msra.mxu0 %v129
  %157 = vmatprep.subr.mxu0 %v126
  %158 = vmatpush1.msra.mxu0 %v125
  %159 = vmatprep.subr.mxu0 %v122
  %160 = vmatpush1.msra.mxu0 %v121
  %161 = vmatprep.subr.mxu0 %v118
  %162 = vmatpush1.msra.mxu0 %v117
  %163 = vmatprep.subr.mxu0 %v114
  %164 = vmatpush1.msra.mxu0 %v113
  %165 = vmatprep.subr.mxu0 %v110
  %166 = vmatpush1.msra.mxu0 %v109
  %167 = vmatprep.subr.mxu0 %v106
  %168 = vmatpush1.msra.mxu0 %v105
  %169 = vmatprep.subr.mxu0 %v102
  %170 = vmatpush1.msra.mxu0 %v101
  %171 = vmatprep.subr.mxu0 %v98
  %172 = vmatpush1.msra.mxu0 %v97
  %173 = vmatprep.subr.mxu0 %v94
  %174 = vmatpush1.msra.mxu0 %v93
  %175 = vmatprep.subr.mxu0 %v90
  %176 = vmatpush1.msra.mxu0 %v89
  %177 = vmatprep.subr.mxu0 %v86
  %178 = vmatpush1.msra.mxu0 %v85
  %179 = vmatprep.subr.mxu0 %v82
  %180 = vmatpush1.msra.mxu0 %v81
  %181 = vmatprep.subr.mxu0 %v78
  %182 = vmatpush1.msra.mxu0 %v77
  %183 = vmatprep.subr.mxu0 %v74
  %184 = vmatpush1.msra.mxu0 %v73
  %185 = vmatprep.subr.mxu0 %v70
  %186 = vmatpush1.msra.mxu0 %v69
  %187 = vmatprep.subr.mxu0 0.0
  %188 = vmatpush2.msra.mxu0 0.0
  %189 = vmatprep.subr.mxu0 0.0
  %190 = vmatpush2.msra.mxu0 0.0
  %191 = vmatprep.subr.mxu0 0.0
  %192 = vmatpush2.msra.mxu0 0.0
  %193 = vmatprep.subr.mxu0 0.0
  %194 = vmatpush2.msra.mxu0 0.0
  %195 = vmatprep.subr.mxu0 0.0
  %196 = vmatpush2.msra.mxu0 0.0
  %197 = vmatprep.subr.mxu0 0.0
  %198 = vmatpush2.msra.mxu0 0.0
  %199 = vmatprep.subr.mxu0 0.0
  %200 = vmatpush2.msra.mxu0 0.0
  %201 = vmatprep.subr.mxu0 0.0
  %202 = vmatpush2.msra.mxu0 0.0
  %203 = vmatprep.subr.mxu0 0.0
  %204 = vmatpush2.msra.mxu0 0.0
  %205 = vmatprep.subr.mxu0 0.0
  %206 = vmatpush2.msra.mxu0 0.0
  %207 = vmatprep.subr.mxu0 0.0
  %208 = vmatpush2.msra.mxu0 0.0
  %209 = vmatprep.subr.mxu0 0.0
  %210 = vmatpush2.msra.mxu0 0.0
  %211 = vmatprep.subr.mxu0 0.0
  %212 = vmatpush2.msra.mxu0 0.0
  %213 = vmatprep.subr.mxu0 0.0
  %214 = vmatpush2.msra.mxu0 0.0
  %215 = vmatprep.subr.mxu0 0.0
  %216 = vmatpush2.msra.mxu0 0.0
  %217 = vmatprep.subr.mxu0 0.0
  %218 = vmatpush2.msra.mxu0 0.0
  %219 = vmatprep.mubr.f32.mxu0 0.0
  %220 = vmatmul.mubr.f32.gmra.mxu0 %v61
  %v221 = vpop.f32.mrf.mxu0
  %v222 = vadd.f32 %v138, %v221
  %v223 = vpop.f32.mrf.mxu0
  %v224 = vadd.f32 %v142, %v223
  %225 = vmatprep.mubr.f32.mxu0 0.0
  %226 = vmatmul.mubr.f32.gmra.mxu0 %v62
  %v227 = vpop.f32.mrf.mxu0
  %v228 = vadd.f32 %v138, %v227
  %v229 = vpop.f32.mrf.mxu0
  %v230 = vadd.f32 %v142, %v229
  %231 = vmatprep.mubr.f32.mxu0 0.0
  %232 = vmatmul.mubr.f32.gmra.mxu0 %v63
  %v233 = vpop.f32.mrf.mxu0
  %v234 = vadd.f32 %v138, %v233
  %v235 = vpop.f32.mrf.mxu0
  %v236 = vadd.f32 %v142, %v235
  %237 = vmatprep.mubr.f32.mxu0 0.0
  %238 = vmatmul.mubr.f32.gmra.mxu0 %v64
  %v239 = vpop.f32.mrf.mxu0
  %v240 = vadd.f32 %v138, %v239
  %v241 = vpop.f32.mrf.mxu0
  %v242 = vadd.f32 %v142, %v241
  %243 = vmatprep.mubr.f32.mxu0 0.0
  %244 = vmatmul.mubr.f32.gmra.mxu0 %v65
  %v245 = vpop.f32.mrf.mxu0
  %v246 = vadd.f32 %v138, %v245
  %v247 = vpop.f32.mrf.mxu0
  %v248 = vadd.f32 %v142, %v247
  %249 = vmatprep.mubr.f32.mxu0 0.0
  %250 = vmatmul.mubr.f32.gmra.mxu0 %v66
  %v251 = vpop.f32.mrf.mxu0
  %v252 = vadd.f32 %v138, %v251
  %v253 = vpop.f32.mrf.mxu0
  %v254 = vadd.f32 %v142, %v253
  %255 = vmatprep.mubr.f32.mxu0 0.0
  %256 = vmatmul.mubr.f32.gmra.mxu0 %v67
  %v257 = vpop.f32.mrf.mxu0
  %v258 = vadd.f32 %v138, %v257
  %v259 = vpop.f32.mrf.mxu0
  %v260 = vadd.f32 %v142, %v259
  %261 = vmatprep.mubr.f32.mxu0 0.0
  %262 = vmatmul.mubr.f32.gmra.mxu0 %v68
  %v263 = vpop.f32.mrf.mxu0
  %v264 = vadd.f32 %v138, %v263
  %v265 = vpop.f32.mrf.mxu0
  %v266 = vadd.f32 %v142, %v265
  %267 = vdwg.mxu0
  %268 = vmatprep.subr.mxu0 %v132
  %269 = vmatpush1.msra.mxu0 %v131
  %270 = vmatprep.subr.mxu0 %v128
  %271 = vmatpush1.msra.mxu0 %v127
  %272 = vmatprep.subr.mxu0 %v124
  %273 = vmatpush1.msra.mxu0 %v123
  %274 = vmatprep.subr.mxu0 %v120
  %275 = vmatpush1.msra.mxu0 %v119
  %276 = vmatprep.subr.mxu0 %v116
  %277 = vmatpush1.msra.mxu0 %v115
  %278 = vmatprep.subr.mxu0 %v112
  %279 = vmatpush1.msra.mxu0 %v111
  %280 = vmatprep.subr.mxu0 %v108
  %281 = vmatpush1.msra.mxu0 %v107
  %282 = vmatprep.subr.mxu0 %v104
  %283 = vmatpush1.msra.mxu0 %v103
  %284 = vmatprep.subr.mxu0 %v100
  %285 = vmatpush1.msra.mxu0 %v99
  %286 = vmatprep.subr.mxu0 %v96
  %287 = vmatpush1.msra.mxu0 %v95
  %288 = vmatprep.subr.mxu0 %v92
  %289 = vmatpush1.msra.mxu0 %v91
  %290 = vmatprep.subr.mxu0 %v88
  %291 = vmatpush1.msra.mxu0 %v87
  %292 = vmatprep.subr.mxu0 %v84
  %293 = vmatpush1.msra.mxu0 %v83
  %294 = vmatprep.subr.mxu0 %v80
  %295 = vmatpush1.msra.mxu0 %v79
  %296 = vmatprep.subr.mxu0 %v76
  %297 = vmatpush1.msra.mxu0 %v75
  %298 = vmatprep.subr.mxu0 %v72
  %299 = vmatpush1.msra.mxu0 %v71
  %300 = vmatprep.subr.mxu0 0.0
  %301 = vmatpush2.msra.mxu0 0.0
  %302 = vmatprep.subr.mxu0 0.0
  %303 = vmatpush2.msra.mxu0 0.0
  %304 = vmatprep.subr.mxu0 0.0
  %305 = vmatpush2.msra.mxu0 0.0
  %306 = vmatprep.subr.mxu0 0.0
  %307 = vmatpush2.msra.mxu0 0.0
  %308 = vmatprep.subr.mxu0 0.0
  %309 = vmatpush2.msra.mxu0 0.0
  %310 = vmatprep.subr.mxu0 0.0
  %311 = vmatpush2.msra.mxu0 0.0
  %312 = vmatprep.subr.mxu0 0.0
  %313 = vmatpush2.msra.mxu0 0.0
  %314 = vmatprep.subr.mxu0 0.0
  %315 = vmatpush2.msra.mxu0 0.0
  %316 = vmatprep.subr.mxu0 0.0
  %317 = vmatpush2.msra.mxu0 0.0
  %318 = vmatprep.subr.mxu0 0.0
  %319 = vmatpush2.msra.mxu0 0.0
  %320 = vmatprep.subr.mxu0 0.0
  %321 = vmatpush2.msra.mxu0 0.0
  %322 = vmatprep.subr.mxu0 0.0
  %323 = vmatpush2.msra.mxu0 0.0
  %324 = vmatprep.subr.mxu0 0.0
  %325 = vmatpush2.msra.mxu0 0.0
  %326 = vmatprep.subr.mxu0 0.0
  %327 = vmatpush2.msra.mxu0 0.0
  %328 = vmatprep.subr.mxu0 0.0
  %329 = vmatpush2.msra.mxu0 0.0
  %330 = vmatprep.subr.mxu0 0.0
  %331 = vmatpush2.msra.mxu0 0.0
  %332 = vmatprep.mubr.f32.mxu0 0.0
  %333 = vmatmul.mubr.f32.gmra.mxu0 %v61
  %v334 = vpop.f32.mrf.mxu0
  %v335 = vadd.f32 %v146, %v334
  %v336 = vpop.f32.mrf.mxu0
  %v337 = vadd.f32 %v150, %v336
  %338 = vmatprep.mubr.f32.mxu0 0.0
  %339 = vmatmul.mubr.f32.gmra.mxu0 %v62
  %v340 = vpop.f32.mrf.mxu0
  %v341 = vadd.f32 %v146, %v340
  %v342 = vpop.f32.mrf.mxu0
  %v343 = vadd.f32 %v150, %v342
  %344 = vmatprep.mubr.f32.mxu0 0.0
  %345 = vmatmul.mubr.f32.gmra.mxu0 %v63
  %v346 = vpop.f32.mrf.mxu0
  %v347 = vadd.f32 %v146, %v346
  %v348 = vpop.f32.mrf.mxu0
  %v349 = vadd.f32 %v150, %v348
  %350 = vmatprep.mubr.f32.mxu0 0.0
  %351 = vmatmul.mubr.f32.gmra.mxu0 %v64
  %v352 = vpop.f32.mrf.mxu0
  %v353 = vadd.f32 %v146, %v352
  %v354 = vpop.f32.mrf.mxu0
  %v355 = vadd.f32 %v150, %v354
  %356 = vmatprep.mubr.f32.mxu0 0.0
  %357 = vmatmul.mubr.f32.gmra.mxu0 %v65
  %v358 = vpop.f32.mrf.mxu0
  %v359 = vadd.f32 %v146, %v358
  %v360 = vpop.f32.mrf.mxu0
  %v361 = vadd.f32 %v150, %v360
  %362 = vmatprep.mubr.f32.mxu0 0.0
  %363 = vmatmul.mubr.f32.gmra.mxu0 %v66
  %v364 = vpop.f32.mrf.mxu0
  %v365 = vadd.f32 %v146, %v364
  %v366 = vpop.f32.mrf.mxu0
  %v367 = vadd.f32 %v150, %v366
  %368 = vmatprep.mubr.f32.mxu0 0.0
  %369 = vmatmul.mubr.f32.gmra.mxu0 %v67
  %v370 = vpop.f32.mrf.mxu0
  %v371 = vadd.f32 %v146, %v370
  %v372 = vpop.f32.mrf.mxu0
  %v373 = vadd.f32 %v150, %v372
  %374 = vmatprep.mubr.f32.mxu0 0.0
  %375 = vmatmul.mubr.f32.gmra.mxu0 %v68
  %v376 = vpop.f32.mrf.mxu0
  %v377 = vadd.f32 %v146, %v376
  %v378 = vpop.f32.mrf.mxu0
  %v379 = vadd.f32 %v150, %v378
  %380 = vdwg.mxu0
  %381 = vst [vmem:[%s4] sm:$0xff] %v222
  %382 = vst [vmem:[%s4 + $0x8] sm:$0xff] %v224
  %383 = vst [vmem:[%s4 + $0x10] sm:$0xff] %v335
  %384 = vst [vmem:[%s4 + $0x18] sm:$0xff] %v337
  %385 = vst [vmem:[%s4 + $0x20] sm:$0xff] %v228
  %386 = vst [vmem:[%s4 + $0x28] sm:$0xff] %v230
  %387 = vst [vmem:[%s4 + $0x30] sm:$0xff] %v341
  %388 = vst [vmem:[%s4 + $0x38] sm:$0xff] %v343
  %389 = vst [vmem:[%s4 + $0x40] sm:$0xff] %v234
  %390 = vst [vmem:[%s4 + $0x48] sm:$0xff] %v236
  %391 = vst [vmem:[%s4 + $0x50] sm:$0xff] %v347
  %392 = vst [vmem:[%s4 + $0x58] sm:$0xff] %v349
  %393 = vst [vmem:[%s4 + $0x60] sm:$0xff] %v240
  %394 = vst [vmem:[%s4 + $0x68] sm:$0xff] %v242
  %395 = vst [vmem:[%s4 + $0x70] sm:$0xff] %v353
  %396 = vst [vmem:[%s4 + $0x78] sm:$0xff] %v355
  %397 = vst [vmem:[%s4 + $0x80] sm:$0xff] %v246
  %398 = vst [vmem:[%s4 + $0x88] sm:$0xff] %v248
  %399 = vst [vmem:[%s4 + $0x90] sm:$0xff] %v359
  %400 = vst [vmem:[%s4 + $0x98] sm:$0xff] %v361
  %401 = vst [vmem:[%s4 + $0xa0] sm:$0xff] %v252
  %402 = vst [vmem:[%s4 + $0xa8] sm:$0xff] %v254
  %403 = vst [vmem:[%s4 + $0xb0] sm:$0xff] %v365
  %404 = vst [vmem:[%s4 + $0xb8] sm:$0xff] %v367
  %405 = vst [vmem:[%s4 + $0xc0] sm:$0xff] %v258
  %406 = vst [vmem:[%s4 + $0xc8] sm:$0xff] %v260
  %407 = vst [vmem:[%s4 + $0xd0] sm:$0xff] %v371
  %408 = vst [vmem:[%s4 + $0xd8] sm:$0xff] %v373
  %409 = vst [vmem:[%s4 + $0xe0] sm:$0xff] %v264
  %410 = vst [vmem:[%s4 + $0xe8] sm:$0xff] %v266
  %411 = vst [vmem:[%s4 + $0xf0] sm:$0xff] %v377
  %412 = vst [vmem:[%s4 + $0xf8] sm:$0xff] %v379
  // Predicated region
  $region18: #{quant_lstm_forward.2} parent=0 // pred_check
    _
  $region19: #{quant_lstm_forward.2} parent=0 // pred_check_branch
    %414 = sbr.rel (0) target = $region21
  $region20: #{quant_lstm_forward.2} parent=0 // pred_region
    _
  $region21: #{quant_lstm_forward.2} parent=0 // pred_fallthru
    _
  // Predicated region
  $region22: #{quant_lstm_forward.2} parent=0 // pred_check
    _
  $region23: #{quant_lstm_forward.2} parent=0 // pred_check_branch
    %416 = sbr.rel (0) target = $region25
  $region24: #{quant_lstm_forward.2} parent=0 // pred_region
    _
  $region25: #{quant_lstm_forward.2} parent=0 // pred_fallthru
    _

// kernel: quant_lstm_forward.3
$region0: #{quant_lstm_forward.3}
  #allocation0 [shape = 'u32[]', space=smem, size = 0x4, offset = 0x4, fixed_abs, tag = 'smem constant byte address 0x4 - core index']
  #allocation1 [shape = 'u32[144,128]{1,0:T(1,128)}', space=vmem, size = 0x12000, scoped, tag = 'internal scratch']
  #allocation2 [shape = 'f32[8,128]{1,0:T(8,128)}', space=vmem, size = 0x1000, scoped, tag = 'scratch operand']
  #allocation3 [shape = 'f32[8,128]{1,0:T(8,128)}', space=vmem, size = 0x1000, scoped, tag = 'scratch operand']
  %s0 = inlined_call_operand.vmem [shape: f32[64,512], index: 0, kind: input, shape index: {}]
  %s1 = inlined_call_operand.vmem [shape: f32[128,512], index: 1, kind: input, shape index: {}]
  %s2 = inlined_call_operand.vmem [shape: f32[8,128], index: 2, kind: input, shape index: {}]
  %s3 = inlined_call_operand.vmem [shape: f32[8,128], index: 3, kind: input, shape index: {}]
  %s4 = inlined_call_operand.hbm [shape: f32[64,128], index: 4, kind: output, shape index: {0}]
  %s5 = inlined_call_operand.hbm [shape: f32[8,128], index: 5, kind: output, shape index: {1}]
  %s6 = inlined_call_operand.hbm [shape: f32[8,128], index: 6, kind: output, shape index: {2}]
  %7 = xla_tuple %s4, %s5, %s6
  %s8 = sld [smem:[#allocation0]]
  $region50: #{quant_lstm_forward.3} parent=0
    _
  %s10 = ssub.s32 1, %s8
  %s11 = scalar_select 0, %s10, %s8
  $region1: #{quant_lstm_forward.3} parent=0
    #allocation4 [shape = 'u8[32768]{0}', space=vmem, size = 0x8000, scoped, tag = 'output window, operand 0, single buffered']
    #allocation5 [shape = 's32[1]{0}', space=sflag, size = 0x4, scoped, tag = 'scoped memory for quant_lstm_forward.3']
    #allocation6 [shape = 'u8[4096]{0}', space=vmem, size = 0x1000, scoped, tag = 'output window, operand 1, single buffered']
    #allocation7 [shape = 's32[1]{0}', space=sflag, size = 0x4, scoped, tag = 'scoped memory for quant_lstm_forward.3']
    #allocation8 [shape = 'u8[4096]{0}', space=vmem, size = 0x1000, scoped, tag = 'output window, operand 2, single buffered']
    %12 = vsyncpa [#allocation5], 0
    %13 = vsyncpa [#allocation7], 0
    // Predicated region
    $region2: #{quant_lstm_forward.3} parent=1 // pred_check
      _
    $region3: #{quant_lstm_forward.3} parent=1 // pred_check_branch
      %15 = sbr.rel (0) target = $region5
    $region4: #{quant_lstm_forward.3} parent=1 // pred_region
      _
    $region5: #{quant_lstm_forward.3} parent=1 // pred_fallthru
      _
    // Predicated region
    $region6: #{quant_lstm_forward.3} parent=1 // pred_check
      _
    $region7: #{quant_lstm_forward.3} parent=1 // pred_check_branch
      %17 = sbr.rel (0) target = $region9
    $region8: #{quant_lstm_forward.3} parent=1 // pred_region
      _
    $region9: #{quant_lstm_forward.3} parent=1 // pred_fallthru
      _
    // Predicated region
    $region10: #{quant_lstm_forward.3} parent=1 // pred_check
      _
    $region11: #{quant_lstm_forward.3} parent=1 // pred_check_branch
      %19 = sbr.rel (0) target = $region13
    $region12: #{quant_lstm_forward.3} parent=1 // pred_region
      _
    $region13: #{quant_lstm_forward.3} parent=1 // pred_fallthru
      _
    // Predicated region
    $region14: #{quant_lstm_forward.3} parent=1 // pred_check
      _
    $region15: #{quant_lstm_forward.3} parent=1 // pred_check_branch
      %21 = sbr.rel (0) target = $region17
    $region16: #{quant_lstm_forward.3} parent=1 // pred_region
      _
    $region17: #{quant_lstm_forward.3} parent=1 // pred_fallthru
      _
    %p22 = scmp.eq.s32.totalorder 0, 0
    // Predicated region
    $region18: #{quant_lstm_forward.3} parent=1 // pred_check
      %p23 = pneg %p22
    $region19: #{quant_lstm_forward.3} parent=1 // pred_check_branch
      %25 = sbr.rel (%p23) target = $region21
    $region20: #{quant_lstm_forward.3} parent=1 // pred_region
      %v26 = vld [vmem:[%s2] sm:$0xff]
      %27 = vst [vmem:[#allocation2] sm:$0xff] %v26
      %v28 = vld [vmem:[%s3] sm:$0xff]
      %29 = vst [vmem:[#allocation3] sm:$0xff] %v28
    $region21: #{quant_lstm_forward.3} parent=1 // pred_fallthru
      _
    %v30 = vld [vmem:[#allocation2] sm:$0xff]
    %v31 = vld [vmem:[#allocation3] sm:$0xff]
    %s32 = smul.u32 0, 4
    %s33 = smul.addr %s32, 8
    %s34 = scalar_lea.vmem %s0, %s33
    %v35 = vld [vmem:[%s34] sm:$0xff]
    %v36 = vld [vmem:[%s34 + $0x8] sm:$0xff]
    %v37 = vld [vmem:[%s34 + $0x10] sm:$0xff]
    %v38 = vld [vmem:[%s34 + $0x18] sm:$0xff]
    %v39 = vld [vmem:[%s1] sm:$0xff]
    %v40 = vld [vmem:[%s1 + $0x8] sm:$0xff]
    %v41 = vld [vmem:[%s1 + $0x10] sm:$0xff]
    %v42 = vld [vmem:[%s1 + $0x18] sm:$0xff]
    %v43 = vld [vmem:[%s1 + $0x20] sm:$0xff]
    %v44 = vld [vmem:[%s1 + $0x28] sm:$0xff]
    %v45 = vld [vmem:[%s1 + $0x30] sm:$0xff]
    %v46 = vld [vmem:[%s1 + $0x38] sm:$0xff]
    %v47 = vld [vmem:[%s1 + $0x40] sm:$0xff]
    %v48 = vld [vmem:[%s1 + $0x48] sm:$0xff]
    %v49 = vld [vmem:[%s1 + $0x50] sm:$0xff]
    %v50 = vld [vmem:[%s1 + $0x58] sm:$0xff]
    %v51 = vld [vmem:[%s1 + $0x60] sm:$0xff]
    %v52 = vld [vmem:[%s1 + $0x68] sm:$0xff]
    %v53 = vld [vmem:[%s1 + $0x70] sm:$0xff]
    %v54 = vld [vmem:[%s1 + $0x78] sm:$0xff]
    %v55 = vld [vmem:[%s1 + $0x80] sm:$0xff]
    %v56 = vld [vmem:[%s1 + $0x88] sm:$0xff]
    %v57 = vld [vmem:[%s1 + $0x90] sm:$0xff]
    %v58 = vld [vmem:[%s1 + $0x98] sm:$0xff]
    %v59 = vld [vmem:[%s1 + $0xa0] sm:$0xff]
    %v60 = vld [vmem:[%s1 + $0xa8] sm:$0xff]
    %v61 = vld [vmem:[%s1 + $0xb0] sm:$0xff]
    %v62 = vld [vmem:[%s1 + $0xb8] sm:$0xff]
    %v63 = vld [vmem:[%s1 + $0xc0] sm:$0xff]
    %v64 = vld [vmem:[%s1 + $0xc8] sm:$0xff]
    %v65 = vld [vmem:[%s1 + $0xd0] sm:$0xff]
    %v66 = vld [vmem:[%s1 + $0xd8] sm:$0xff]
    %v67 = vld [vmem:[%s1 + $0xe0] sm:$0xff]
    %v68 = vld [vmem:[%s1 + $0xe8] sm:$0xff]
    %v69 = vld [vmem:[%s1 + $0xf0] sm:$0xff]
    %v70 = vld [vmem:[%s1 + $0xf8] sm:$0xff]
    %v71 = vld [vmem:[%s1 + $0x100] sm:$0xff]
    %v72 = vld [vmem:[%s1 + $0x108] sm:$0xff]
    %v73 = vld [vmem:[%s1 + $0x110] sm:$0xff]
    %v74 = vld [vmem:[%s1 + $0x118] sm:$0xff]
    %v75 = vld [vmem:[%s1 + $0x120] sm:$0xff]
    %v76 = vld [vmem:[%s1 + $0x128] sm:$0xff]
    %v77 = vld [vmem:[%s1 + $0x130] sm:$0xff]
    %v78 = vld [vmem:[%s1 + $0x138] sm:$0xff]
    %v79 = vld [vmem:[%s1 + $0x140] sm:$0xff]
    %v80 = vld [vmem:[%s1 + $0x148] sm:$0xff]
    %v81 = vld [vmem:[%s1 + $0x150] sm:$0xff]
    %v82 = vld [vmem:[%s1 + $0x158] sm:$0xff]
    %v83 = vld [vmem:[%s1 + $0x160] sm:$0xff]
    %v84 = vld [vmem:[%s1 + $0x168] sm:$0xff]
    %v85 = vld [vmem:[%s1 + $0x170] sm:$0xff]
    %v86 = vld [vmem:[%s1 + $0x178] sm:$0xff]
    %v87 = vld [vmem:[%s1 + $0x180] sm:$0xff]
    %v88 = vld [vmem:[%s1 + $0x188] sm:$0xff]
    %v89 = vld [vmem:[%s1 + $0x190] sm:$0xff]
    %v90 = vld [vmem:[%s1 + $0x198] sm:$0xff]
    %v91 = vld [vmem:[%s1 + $0x1a0] sm:$0xff]
    %v92 = vld [vmem:[%s1 + $0x1a8] sm:$0xff]
    %v93 = vld [vmem:[%s1 + $0x1b0] sm:$0xff]
    %v94 = vld [vmem:[%s1 + $0x1b8] sm:$0xff]
    %v95 = vld [vmem:[%s1 + $0x1c0] sm:$0xff]
    %v96 = vld [vmem:[%s1 + $0x1c8] sm:$0xff]
    %v97 = vld [vmem:[%s1 + $0x1d0] sm:$0xff]
    %v98 = vld [vmem:[%s1 + $0x1d8] sm:$0xff]
    %v99 = vld [vmem:[%s1 + $0x1e0] sm:$0xff]
    %v100 = vld [vmem:[%s1 + $0x1e8] sm:$0xff]
    %v101 = vld [vmem:[%s1 + $0x1f0] sm:$0xff]
    %v102 = vld [vmem:[%s1 + $0x1f8] sm:$0xff]
    %103 = vmatprep.subr.mxu0 %v100
    %104 = vmatpush1.msra.mxu0 %v99
    %105 = vmatprep.subr.mxu0 %v96
    %106 = vmatpush1.msra.mxu0 %v95
    %107 = vmatprep.subr.mxu0 %v92
    %108 = vmatpush1.msra.mxu0 %v91
    %109 = vmatprep.subr.mxu0 %v88
    %110 = vmatpush1.msra.mxu0 %v87
    %111 = vmatprep.subr.mxu0 %v84
    %112 = vmatpush1.msra.mxu0 %v83
    %113 = vmatprep.subr.mxu0 %v80
    %114 = vmatpush1.msra.mxu0 %v79
    %115 = vmatprep.subr.mxu0 %v76
    %116 = vmatpush1.msra.mxu0 %v75
    %117 = vmatprep.subr.mxu0 %v72
    %118 = vmatpush1.msra.mxu0 %v71
    %119 = vmatprep.subr.mxu0 %v68
    %120 = vmatpush1.msra.mxu0 %v67
    %121 = vmatprep.subr.mxu0 %v64
    %122 = vmatpush1.msra.mxu0 %v63
    %123 = vmatprep.subr.mxu0 %v60
    %124 = vmatpush1.msra.mxu0 %v59
    %125 = vmatprep.subr.mxu0 %v56
    %126 = vmatpush1.msra.mxu0 %v55
    %127 = vmatprep.subr.mxu0 %v52
    %128 = vmatpush1.msra.mxu0 %v51
    %129 = vmatprep.subr.mxu0 %v48
    %130 = vmatpush1.msra.mxu0 %v47
    %131 = vmatprep.subr.mxu0 %v44
    %132 = vmatpush1.msra.mxu0 %v43
    %133 = vmatprep.subr.mxu0 %v40
    %134 = vmatpush1.msra.mxu0 %v39
    %135 = vmatprep.subr.mxu0 0.0
    %136 = vmatpush2.msra.mxu0 0.0
    %137 = vmatprep.subr.mxu0 0.0
    %138 = vmatpush2.msra.mxu0 0.0
    %139 = vmatprep.subr.mxu0 0.0
    %140 = vmatpush2.msra.mxu0 0.0
    %141 = vmatprep.subr.mxu0 0.0
    %142 = vmatpush2.msra.mxu0 0.0
    %143 = vmatprep.subr.mxu0 0.0
    %144 = vmatpush2.msra.mxu0 0.0
    %145 = vmatprep.subr.mxu0 0.0
    %146 = vmatpush2.msra.mxu0 0.0
    %147 = vmatprep.subr.mxu0 0.0
    %148 = vmatpush2.msra.mxu0 0.0
    %149 = vmatprep.subr.mxu0 0.0
    %150 = vmatpush2.msra.mxu0 0.0
    %151 = vmatprep.subr.mxu0 0.0
    %152 = vmatpush2.msra.mxu0 0.0
    %153 = vmatprep.subr.mxu0 0.0
    %154 = vmatpush2.msra.mxu0 0.0
    %155 = vmatprep.subr.mxu0 0.0
    %156 = vmatpush2.msra.mxu0 0.0
    %157 = vmatprep.subr.mxu0 0.0
    %158 = vmatpush2.msra.mxu0 0.0
    %159 = vmatprep.subr.mxu0 0.0
    %160 = vmatpush2.msra.mxu0 0.0
    %161 = vmatprep.subr.mxu0 0.0
    %162 = vmatpush2.msra.mxu0 0.0
    %163 = vmatprep.subr.mxu0 0.0
    %164 = vmatpush2.msra.mxu0 0.0
    %165 = vmatprep.subr.mxu0 0.0
    %166 = vmatpush2.msra.mxu0 0.0
    %167 = vmatprep.mubr.f32.mxu0 0.0
    %168 = vmatmul.mubr.f32.gmra.mxu0 %v30
    %v169 = vpop.f32.mrf.mxu0
    %v170 = vadd.f32 0.0, %v169
    %v171 = vpop.f32.mrf.mxu0
    %v172 = vadd.f32 0.0, %v171
    %173 = vdwg.mxu0
    %174 = vmatprep.subr.mxu0 %v102
    %175 = vmatpush1.msra.mxu0 %v101
    %176 = vmatprep.subr.mxu0 %v98
    %177 = vmatpush1.msra.mxu0 %v97
    %178 = vmatprep.subr.mxu0 %v94
    %179 = vmatpush1.msra.mxu0 %v93
    %180 = vmatprep.subr.mxu0 %v90
    %181 = vmatpush1.msra.mxu0 %v89
    %182 = vmatprep.subr.mxu0 %v86
    %183 = vmatpush1.msra.mxu0 %v85
    %184 = vmatprep.subr.mxu0 %v82
    %185 = vmatpush1.msra.mxu0 %v81
    %186 = vmatprep.subr.mxu0 %v78
    %187 = vmatpush1.msra.mxu0 %v77
    %188 = vmatprep.subr.mxu0 %v74
    %189 = vmatpush1.msra.mxu0 %v73
    %190 = vmatprep.subr.mxu0 %v70
    %191 = vmatpush1.msra.mxu0 %v69
    %192 = vmatprep.subr.mxu0 %v66
    %193 = vmatpush1.msra.mxu0 %v65
    %194 = vmatprep.subr.mxu0 %v62
    %195 = vmatpush1.msra.mxu0 %v61
    %196 = vmatprep.subr.mxu0 %v58
    %197 = vmatpush1.msra.mxu0 %v57
    %198 = vmatprep.subr.mxu0 %v54
    %199 = vmatpush1.msra.mxu0 %v53
    %200 = vmatprep.subr.mxu0 %v50
    %201 = vmatpush1.msra.mxu0 %v49
    %202 = vmatprep.subr.mxu0 %v46
    %203 = vmatpush1.msra.mxu0 %v45
    %204 = vmatprep.subr.mxu0 %v42
    %205 = vmatpush1.msra.mxu0 %v41
    %206 = vmatprep.subr.mxu0 0.0
    %207 = vmatpush2.msra.mxu0 0.0
    %208 = vmatprep.subr.mxu0 0.0
    %209 = vmatpush2.msra.mxu0 0.0
    %210 = vmatprep.subr.mxu0 0.0
    %211 = vmatpush2.msra.mxu0 0.0
    %212 = vmatprep.subr.mxu0 0.0
    %213 = vmatpush2.msra.mxu0 0.0
    %214 = vmatprep.subr.mxu0 0.0
    %215 = vmatpush2.msra.mxu0 0.0
    %216 = vmatprep.subr.mxu0 0.0
    %217 = vmatpush2.msra.mxu0 0.0
    %218 = vmatprep.subr.mxu0 0.0
    %219 = vmatpush2.msra.mxu0 0.0
    %220 = vmatprep.subr.mxu0 0.0
    %221 = vmatpush2.msra.mxu0 0.0
    %222 = vmatprep.subr.mxu0 0.0
    %223 = vmatpush2.msra.mxu0 0.0
    %224 = vmatprep.subr.mxu0 0.0
    %225 = vmatpush2.msra.mxu0 0.0
    %226 = vmatprep.subr.mxu0 0.0
    %227 = vmatpush2.msra.mxu0 0.0
    %228 = vmatprep.subr.mxu0 0.0
    %229 = vmatpush2.msra.mxu0 0.0
    %230 = vmatprep.subr.mxu0 0.0
    %231 = vmatpush2.msra.mxu0 0.0
    %232 = vmatprep.subr.mxu0 0.0
    %233 = vmatpush2.msra.mxu0 0.0
    %234 = vmatprep.subr.mxu0 0.0
    %235 = vmatpush2.msra.mxu0 0.0
    %236 = vmatprep.subr.mxu0 0.0
    %237 = vmatpush2.msra.mxu0 0.0
    %238 = vmatprep.mubr.f32.mxu0 0.0
    %239 = vmatmul.mubr.f32.gmra.mxu0 %v30
    %v240 = vpop.f32.mrf.mxu0
    %v241 = vadd.f32 0.0, %v240
    %v242 = vpop.f32.mrf.mxu0
    %v243 = vadd.f32 0.0, %v242
    %244 = vdwg.mxu0
    %v245 = vadd.f32 %v35, %v170
    %v246 = vadd.f32 %v36, %v172
    %v247 = vadd.f32 %v37, %v241
    %v248 = vadd.f32 %v38, %v243
    %v249 = vxor.u32 %v245, 2147483648
    %v250 = vxor.u32 %v246, 2147483648
    %v251 = vxor.u32 %v247, 2147483648
    %v252 = vmul.f32 %v249, 1.442695
    %v253 = vpow.pop %v252
    %v254 = vmul.f32 %v250, 1.442695
    %v255 = vpow.pop %v254
    %v256 = vmul.f32 %v251, 1.442695
    %v257 = vpow.pop %v256
    %v258 = vadd.f32 %v253, 1.0
    %v259 = vadd.f32 %v255, 1.0
    %v260 = vadd.f32 %v257, 1.0
    %v261 = vrcp.pop %v258
    %v262 = vmul.f32 1.0, %v261
    %v263 = vrcp.pop %v259
    %v264 = vmul.f32 1.0, %v263
    %v265 = vrcp.pop %v260
    %v266 = vmul.f32 1.0, %v265
    %v267 = vtanh.pop %v248
    %v268 = vmul.f32 %v264, %v31
    %v269 = vmul.f32 %v262, %v267
    %v270 = vadd.f32 %v268, %v269
    %v271 = vtanh.pop %v270
    %v272 = vmul.f32 %v266, %v271
    %273 = vst [vmem:[#allocation4] sm:$0xff] %v272
    %s274 = smul.u32 1, 4
    %s275 = smul.addr %s274, 8
    %s276 = scalar_lea.vmem %s0, %s275
    %v277 = vld [vmem:[%s276] sm:$0xff]
    %v278 = vld [vmem:[%s276 + $0x8] sm:$0xff]
    %v279 = vld [vmem:[%s276 + $0x10] sm:$0xff]
    %v280 = vld [vmem:[%s276 + $0x18] sm:$0xff]
    %v281 = vld [vmem:[%s1] sm:$0xff]
    %v282 = vld [vmem:[%s1 + $0x8] sm:$0xff]
    %v283 = vld [vmem:[%s1 + $0x10] sm:$0xff]
    %v284 = vld [vmem:[%s1 + $0x18] sm:$0xff]
    %v285 = vld [vmem:[%s1 + $0x20] sm:$0xff]
    %v286 = vld [vmem:[%s1 + $0x28] sm:$0xff]
    %v287 = vld [vmem:[%s1 + $0x30] sm:$0xff]
    %v288 = vld [vmem:[%s1 + $0x38] sm:$0xff]
    %v289 = vld [vmem:[%s1 + $0x40] sm:$0xff]
    %v290 = vld [vmem:[%s1 + $0x48] sm:$0xff]
    %v291 = vld [vmem:[%s1 + $0x50] sm:$0xff]
    %v292 = vld [vmem:[%s1 + $0x58] sm:$0xff]
    %v293 = vld [vmem:[%s1 + $0x60] sm:$0xff]
    %v294 = vld [vmem:[%s1 + $0x68] sm:$0xff]
    %v295 = vld [vmem:[%s1 + $0x70] sm:$0xff]
    %v296 = vld [vmem:[%s1 + $0x78] sm:$0xff]
    %v297 = vld [vmem:[%s1 + $0x80] sm:$0xff]
    %v298 = vld [vmem:[%s1 + $0x88] sm:$0xff]
    %v299 = vld [vmem:[%s1 + $0x90] sm:$0xff]
    %v300 = vld [vmem:[%s1 + $0x98] sm:$0xff]
    %v301 = vld [vmem:[%s1 + $0xa0] sm:$0xff]
    %v302 = vld [vmem:[%s1 + $0xa8] sm:$0xff]
    %v303 = vld [vmem:[%s1 + $0xb0] sm:$0xff]
    %v304 = vld [vmem:[%s1 + $0xb8] sm:$0xff]
    %v305 = vld [vmem:[%s1 + $0xc0] sm:$0xff]
    %v306 = vld [vmem:[%s1 + $0xc8] sm:$0xff]
    %v307 = vld [vmem:[%s1 + $0xd0] sm:$0xff]
    %v308 = vld [vmem:[%s1 + $0xd8] sm:$0xff]
    %v309 = vld [vmem:[%s1 + $0xe0] sm:$0xff]
    %v310 = vld [vmem:[%s1 + $0xe8] sm:$0xff]
    %v311 = vld [vmem:[%s1 + $0xf0] sm:$0xff]
    %v312 = vld [vmem:[%s1 + $0xf8] sm:$0xff]
    %v313 = vld [vmem:[%s1 + $0x100] sm:$0xff]
    %v314 = vld [vmem:[%s1 + $0x108] sm:$0xff]
    %v315 = vld [vmem:[%s1 + $0x110] sm:$0xff]
    %v316 = vld [vmem:[%s1 + $0x118] sm:$0xff]
    %v317 = vld [vmem:[%s1 + $0x120] sm:$0xff]
    %v318 = vld [vmem:[%s1 + $0x128] sm:$0xff]
    %v319 = vld [vmem:[%s1 + $0x130] sm:$0xff]
    %v320 = vld [vmem:[%s1 + $0x138] sm:$0xff]
    %v321 = vld [vmem:[%s1 + $0x140] sm:$0xff]
    %v322 = vld [vmem:[%s1 + $0x148] sm:$0xff]
    %v323 = vld [vmem:[%s1 + $0x150] sm:$0xff]
    %v324 = vld [vmem:[%s1 + $0x158] sm:$0xff]
    %v325 = vld [vmem:[%s1 + $0x160] sm:$0xff]
    %v326 = vld [vmem:[%s1 + $0x168] sm:$0xff]
    %v327 = vld [vmem:[%s1 + $0x170] sm:$0xff]
    %v328 = vld [vmem:[%s1 + $0x178] sm:$0xff]
    %v329 = vld [vmem:[%s1 + $0x180] sm:$0xff]
    %v330 = vld [vmem:[%s1 + $0x188] sm:$0xff]
    %v331 = vld [vmem:[%s1 + $0x190] sm:$0xff]
    %v332 = vld [vmem:[%s1 + $0x198] sm:$0xff]
    %v333 = vld [vmem:[%s1 + $0x1a0] sm:$0xff]
    %v334 = vld [vmem:[%s1 + $0x1a8] sm:$0xff]
    %v335 = vld [vmem:[%s1 + $0x1b0] sm:$0xff]
    %v336 = vld [vmem:[%s1 + $0x1b8] sm:$0xff]
    %v337 = vld [vmem:[%s1 + $0x1c0] sm:$0xff]
    %v338 = vld [vmem:[%s1 + $0x1c8] sm:$0xff]
    %v339 = vld [vmem:[%s1 + $0x1d0] sm:$0xff]
    %v340 = vld [vmem:[%s1 + $0x1d8] sm:$0xff]
    %v341 = vld [vmem:[%s1 + $0x1e0] sm:$0xff]
    %v342 = vld [vmem:[%s1 + $0x1e8] sm:$0xff]
    %v343 = vld [vmem:[%s1 + $0x1f0] sm:$0xff]
    %v344 = vld [vmem:[%s1 + $0x1f8] sm:$0xff]
    %345 = vmatprep.subr.mxu0 %v342
    %346 = vmatpush1.msra.mxu0 %v341
    %347 = vmatprep.subr.mxu0 %v338
    %348 = vmatpush1.msra.mxu0 %v337
    %349 = vmatprep.subr.mxu0 %v334
    %350 = vmatpush1.msra.mxu0 %v333
    %351 = vmatprep.subr.mxu0 %v330
    %352 = vmatpush1.msra.mxu0 %v329
    %353 = vmatprep.subr.mxu0 %v326
    %354 = vmatpush1.msra.mxu0 %v325
    %355 = vmatprep.subr.mxu0 %v322
    %356 = vmatpush1.msra.mxu0 %v321
    %357 = vmatprep.subr.mxu0 %v318
    %358 = vmatpush1.msra.mxu0 %v317
    %359 = vmatprep.subr.mxu0 %v314
    %360 = vmatpush1.msra.mxu0 %v313
    %361 = vmatprep.subr.mxu0 %v310
    %362 = vmatpush1.msra.mxu0 %v309
    %363 = vmatprep.subr.mxu0 %v306
    %364 = vmatpush1.msra.mxu0 %v305
    %365 = vmatprep.subr.mxu0 %v302
    %366 = vmatpush1.msra.mxu0 %v301
    %367 = vmatprep.subr.mxu0 %v298
    %368 = vmatpush1.msra.mxu0 %v297
    %369 = vmatprep.subr.mxu0 %v294
    %370 = vmatpush1.msra.mxu0 %v293
    %371 = vmatprep.subr.mxu0 %v290
    %372 = vmatpush1.msra.mxu0 %v289
    %373 = vmatprep.subr.mxu0 %v286
    %374 = vmatpush1.msra.mxu0 %v285
    %375 = vmatprep.subr.mxu0 %v282
    %376 = vmatpush1.msra.mxu0 %v281
    %377 = vmatprep.subr.mxu0 0.0
    %378 = vmatpush2.msra.mxu0 0.0
    %379 = vmatprep.subr.mxu0 0.0
    %380 = vmatpush2.msra.mxu0 0.0
    %381 = vmatprep.subr.mxu0 0.0
    %382 = vmatpush2.msra.mxu0 0.0
    %383 = vmatprep.subr.mxu0 0.0
    %384 = vmatpush2.msra.mxu0 0.0
    %385 = vmatprep.subr.mxu0 0.0
    %386 = vmatpush2.msra.mxu0 0.0
    %387 = vmatprep.subr.mxu0 0.0
    %388 = vmatpush2.msra.mxu0 0.0
    %389 = vmatprep.subr.mxu0 0.0
    %390 = vmatpush2.msra.mxu0 0.0
    %391 = vmatprep.subr.mxu0 0.0
    %392 = vmatpush2.msra.mxu0 0.0
    %393 = vmatprep.subr.mxu0 0.0
    %394 = vmatpush2.msra.mxu0 0.0
    %395 = vmatprep.subr.mxu0 0.0
    %396 = vmatpush2.msra.mxu0 0.0
    %397 = vmatprep.subr.mxu0 0.0
    %398 = vmatpush2.msra.mxu0 0.0
    %399 = vmatprep.subr.mxu0 0.0
    %400 = vmatpush2.msra.mxu0 0.0
    %401 = vmatprep.subr.mxu0 0.0
    %402 = vmatpush2.msra.mxu0 0.0
    %403 = vmatprep.subr.mxu0 0.0
    %404 = vmatpush2.msra.mxu0 0.0
    %405 = vmatprep.subr.mxu0 0.0
    %406 = vmatpush2.msra.mxu0 0.0
    %407 = vmatprep.subr.mxu0 0.0
    %408 = vmatpush2.msra.mxu0 0.0
    %409 = vmatprep.mubr.f32.mxu0 0.0
    %410 = vmatmul.mubr.f32.gmra.mxu0 %v272
    %v411 = vpop.f32.mrf.mxu0
    %v412 = vadd.f32 0.0, %v411
    %v413 = vpop.f32.mrf.mxu0
    %v414 = vadd.f32 0.0, %v413
    %415 = vdwg.mxu0
    %416 = vmatprep.subr.mxu0 %v344
    %417 = vmatpush1.msra.mxu0 %v343
    %418 = vmatprep.subr.mxu0 %v340
    %419 = vmatpush1.msra.mxu0 %v339
    %420 = vmatprep.subr.mxu0 %v336
    %421 = vmatpush1.msra.mxu0 %v335
    %422 = vmatprep.subr.mxu0 %v332
    %423 = vmatpush1.msra.mxu0 %v331
    %424 = vmatprep.subr.mxu0 %v328
    %425 = vmatpush1.msra.mxu0 %v327
    %426 = vmatprep.subr.mxu0 %v324
    %427 = vmatpush1.msra.mxu0 %v323
    %428 = vmatprep.subr.mxu0 %v320
    %429 = vmatpush1.msra.mxu0 %v319
    %430 = vmatprep.subr.mxu0 %v316
    %431 = vmatpush1.msra.mxu0 %v315
    %432 = vmatprep.subr.mxu0 %v312
    %433 = vmatpush1.msra.mxu0 %v311
    %434 = vmatprep.subr.mxu0 %v308
    %435 = vmatpush1.msra.mxu0 %v307
    %436 = vmatprep.subr.mxu0 %v304
    %437 = vmatpush1.msra.mxu0 %v303
    %438 = vmatprep.subr.mxu0 %v300
    %439 = vmatpush1.msra.mxu0 %v299
    %440 = vmatprep.subr.mxu0 %v296
    %441 = vmatpush1.msra.mxu0 %v295
    %442 = vmatprep.subr.mxu0 %v292
    %443 = vmatpush1.msra.mxu0 %v291
    %444 = vmatprep.subr.mxu0 %v288
    %445 = vmatpush1.msra.mxu0 %v287
    %446 = vmatprep.subr.mxu0 %v284
    %447 = vmatpush1.msra.mxu0 %v283
    %448 = vmatprep.subr.mxu0 0.0
    %449 = vmatpush2.msra.mxu0 0.0
    %450 = vmatprep.subr.mxu0 0.0
    %451 = vmatpush2.msra.mxu0 0.0
    %452 = vmatprep.subr.mxu0 0.0
    %453 = vmatpush2.msra.mxu0 0.0
    %454 = vmatprep.subr.mxu0 0.0
    %455 = vmatpush2.msra.mxu0 0.0
    %456 = vmatprep.subr.mxu0 0.0
    %457 = vmatpush2.msra.mxu0 0.0
    %458 = vmatprep.subr.mxu0 0.0
    %459 = vmatpush2.msra.mxu0 0.0
    %460 = vmatprep.subr.mxu0 0.0
    %461 = vmatpush2.msra.mxu0 0.0
    %462 = vmatprep.subr.mxu0 0.0
    %463 = vmatpush2.msra.mxu0 0.0
    %464 = vmatprep.subr.mxu0 0.0
    %465 = vmatpush2.msra.mxu0 0.0
    %466 = vmatprep.subr.mxu0 0.0
    %467 = vmatpush2.msra.mxu0 0.0
    %468 = vmatprep.subr.mxu0 0.0
    %469 = vmatpush2.msra.mxu0 0.0
    %470 = vmatprep.subr.mxu0 0.0
    %471 = vmatpush2.msra.mxu0 0.0
    %472 = vmatprep.subr.mxu0 0.0
    %473 = vmatpush2.msra.mxu0 0.0
    %474 = vmatprep.subr.mxu0 0.0
    %475 = vmatpush2.msra.mxu0 0.0
    %476 = vmatprep.subr.mxu0 0.0
    %477 = vmatpush2.msra.mxu0 0.0
    %478 = vmatprep.subr.mxu0 0.0
    %479 = vmatpush2.msra.mxu0 0.0
    %480 = vmatprep.mubr.f32.mxu0 0.0
    %481 = vmatmul.mubr.f32.gmra.mxu0 %v272
    %v482 = vpop.f32.mrf.mxu0
    %v483 = vadd.f32 0.0, %v482
    %v484 = vpop.f32.mrf.mxu0
    %v485 = vadd.f32 0.0, %v484
    %486 = vdwg.mxu0
    %v487 = vadd.f32 %v277, %v412
    %v488 = vadd.f32 %v278, %v414
    %v489 = vadd.f32 %v279, %v483
    %v490 = vadd.f32 %v280, %v485
    %v491 = vxor.u32 %v487, 2147483648
    %v492 = vxor.u32 %v488, 2147483648
    %v493 = vxor.u32 %v489, 2147483648
    %v494 = vmul.f32 %v491, 1.442695
    %v495 = vpow.pop %v494
    %v496 = vmul.f32 %v492, 1.442695
    %v497 = vpow.pop %v496
    %v498 = vmul.f32 %v493, 1.442695
    %v499 = vpow.pop %v498
    %v500 = vadd.f32 %v495, 1.0
    %v501 = vadd.f32 %v497, 1.0
    %v502 = vadd.f32 %v499, 1.0
    %v503 = vrcp.pop %v500
    %v504 = vmul.f32 1.0, %v503
    %v505 = vrcp.pop %v501
    %v506 = vmul.f32 1.0, %v505
    %v507 = vrcp.pop %v502
    %v508 = vmul.f32 1.0, %v507
    %v509 = vtanh.pop %v490
    %v510 = vmul.f32 %v506, %v270
    %v511 = vmul.f32 %v504, %v509
    %v512 = vadd.f32 %v510, %v511
    %v513 = vtanh.pop %v512
    %v514 = vmul.f32 %v508, %v513
    %s515 = scalar_lea.vmem [#allocation4], 8
    %516 = vst [vmem:[%s515] sm:$0xff] %v514
    %s517 = smul.u32 2, 4
    %s518 = smul.addr %s517, 8
    %s519 = scalar_lea.vmem %s0, %s518
    %v520 = vld [vmem:[%s519] sm:$0xff]
    %v521 = vld [vmem:[%s519 + $0x8] sm:$0xff]
    %v522 = vld [vmem:[%s519 + $0x10] sm:$0xff]
    %v523 = vld [vmem:[%s519 + $0x18] sm:$0xff]
    %v524 = vld [vmem:[%s1] sm:$0xff]
    %v525 = vld [vmem:[%s1 + $0x8] sm:$0xff]
    %v526 = vld [vmem:[%s1 + $0x10] sm:$0xff]
    %v527 = vld [vmem:[%s1 + $0x18] sm:$0xff]
    %v528 = vld [vmem:[%s1 + $0x20] sm:$0xff]
    %v529 = vld [vmem:[%s1 + $0x28] sm:$0xff]
    %v530 = vld [vmem:[%s1 + $0x30] sm:$0xff]
    %v531 = vld [vmem:[%s1 + $0x38] sm:$0xff]
    %v532 = vld [vmem:[%s1 + $0x40] sm:$0xff]
    %v533 = vld [vmem:[%s1 + $0x48] sm:$0xff]
    %v534 = vld [vmem:[%s1 + $0x50] sm:$0xff]
    %v535 = vld [vmem:[%s1 + $0x58] sm:$0xff]
    %v536 = vld [vmem:[%s1 + $0x60] sm:$0xff]
    %v537 = vld [vmem:[%s1 + $0x68] sm:$0xff]
    %v538 = vld [vmem:[%s1 + $0x70] sm:$0xff]
    %v539 = vld [vmem:[%s1 + $0x78] sm:$0xff]
    %v540 = vld [vmem:[%s1 + $0x80] sm:$0xff]
    %v541 = vld [vmem:[%s1 + $0x88] sm:$0xff]
    %v542 = vld [vmem:[%s1 + $0x90] sm:$0xff]
    %v543 = vld [vmem:[%s1 + $0x98] sm:$0xff]
    %v544 = vld [vmem:[%s1 + $0xa0] sm:$0xff]
    %v545 = vld [vmem:[%s1 + $0xa8] sm:$0xff]
    %v546 = vld [vmem:[%s1 + $0xb0] sm:$0xff]
    %v547 = vld [vmem:[%s1 + $0xb8] sm:$0xff]
    %v548 = vld [vmem:[%s1 + $0xc0] sm:$0xff]
    %v549 = vld [vmem:[%s1 + $0xc8] sm:$0xff]
    %v550 = vld [vmem:[%s1 + $0xd0] sm:$0xff]
    %v551 = vld [vmem:[%s1 + $0xd8] sm:$0xff]
    %v552 = vld [vmem:[%s1 + $0xe0] sm:$0xff]
    %v553 = vld [vmem:[%s1 + $0xe8] sm:$0xff]
    %v554 = vld [vmem:[%s1 + $0xf0] sm:$0xff]
    %v555 = vld [vmem:[%s1 + $0xf8] sm:$0xff]
    %v556 = vld [vmem:[%s1 + $0x100] sm:$0xff]
    %v557 = vld [vmem:[%s1 + $0x108] sm:$0xff]
    %v558 = vld [vmem:[%s1 + $0x110] sm:$0xff]
    %v559 = vld [vmem:[%s1 + $0x118] sm:$0xff]
    %v560 = vld [vmem:[%s1 + $0x120] sm:$0xff]
    %v561 = vld [vmem:[%s1 + $0x128] sm:$0xff]
    %v562 = vld [vmem:[%s1 + $0x130] sm:$0xff]
    %v563 = vld [vmem:[%s1 + $0x138] sm:$0xff]
    %v564 = vld [vmem:[%s1 + $0x140] sm:$0xff]
    %v565 = vld [vmem:[%s1 + $0x148] sm:$0xff]
    %v566 = vld [vmem:[%s1 + $0x150] sm:$0xff]
    %v567 = vld [vmem:[%s1 + $0x158] sm:$0xff]
    %v568 = vld [vmem:[%s1 + $0x160] sm:$0xff]
    %v569 = vld [vmem:[%s1 + $0x168] sm:$0xff]
    %v570 = vld [vmem:[%s1 + $0x170] sm:$0xff]
    %v571 = vld [vmem:[%s1 + $0x178] sm:$0xff]
    %v572 = vld [vmem:[%s1 + $0x180] sm:$0xff]
    %v573 = vld [vmem:[%s1 + $0x188] sm:$0xff]
    %v574 = vld [vmem:[%s1 + $0x190] sm:$0xff]
    %v575 = vld [vmem:[%s1 + $0x198] sm:$0xff]
    %v576 = vld [vmem:[%s1 + $0x1a0] sm:$0xff]
    %v577 = vld [vmem:[%s1 + $0x1a8] sm:$0xff]
    %v578 = vld [vmem:[%s1 + $0x1b0] sm:$0xff]
    %v579 = vld [vmem:[%s1 + $0x1b8] sm:$0xff]
    %v580 = vld [vmem:[%s1 + $0x1c0] sm:$0xff]
    %v581 = vld [vmem:[%s1 + $0x1c8] sm:$0xff]
    %v582 = vld [vmem:[%s1 + $0x1d0] sm:$0xff]
    %v583 = vld [vmem:[%s1 + $0x1d8] sm:$0xff]
    %v584 = vld [vmem:[%s1 + $0x1e0] sm:$0xff]
    %v585 = vld [vmem:[%s1 + $0x1e8] sm:$0xff]
    %v586 = vld [vmem:[%s1 + $0x1f0] sm:$0xff]
    %v587 = vld [vmem:[%s1 + $0x1f8] sm:$0xff]
    %588 = vmatprep.subr.mxu0 %v585
    %589 = vmatpush1.msra.mxu0 %v584
    %590 = vmatprep.subr.mxu0 %v581
    %591 = vmatpush1.msra.mxu0 %v580
    %592 = vmatprep.subr.mxu0 %v577
    %593 = vmatpush1.msra.mxu0 %v576
    %594 = vmatprep.subr.mxu0 %v573
    %595 = vmatpush1.msra.mxu0 %v572
    %596 = vmatprep.subr.mxu0 %v569
    %597 = vmatpush1.msra.mxu0 %v568
    %598 = vmatprep.subr.mxu0 %v565
    %599 = vmatpush1.msra.mxu0 %v564
    %600 = vmatprep.subr.mxu0 %v561
    %601 = vmatpush1.msra.mxu0 %v560
    %602 = vmatprep.subr.mxu0 %v557
    %603 = vmatpush1.msra.mxu0 %v556
    %604 = vmatprep.subr.mxu0 %v553
    %605 = vmatpush1.msra.mxu0 %v552
    %606 = vmatprep.subr.mxu0 %v549
    %607 = vmatpush1.msra.mxu0 %v548
    %608 = vmatprep.subr.mxu0 %v545
    %609 = vmatpush1.msra.mxu0 %v544
    %610 = vmatprep.subr.mxu0 %v541
    %611 = vmatpush1.msra.mxu0 %v540
    %612 = vmatprep.subr.mxu0 %v537
    %613 = vmatpush1.msra.mxu0 %v536
    %614 = vmatprep.subr.mxu0 %v533
    %615 = vmatpush1.msra.mxu0 %v532
    %616 = vmatprep.subr.mxu0 %v529
    %617 = vmatpush1.msra.mxu0 %v528
    %618 = vmatprep.subr.mxu0 %v525
    %619 = vmatpush1.msra.mxu0 %v524
    %620 = vmatprep.subr.mxu0 0.0
    %621 = vmatpush2.msra.mxu0 0.0
    %622 = vmatprep.subr.mxu0 0.0
    %623 = vmatpush2.msra.mxu0 0.0
    %624 = vmatprep.subr.mxu0 0.0
    %625 = vmatpush2.msra.mxu0 0.0
    %626 = vmatprep.subr.mxu0 0.0
    %627 = vmatpush2.msra.mxu0 0.0
    %628 = vmatprep.subr.mxu0 0.0
    %629 = vmatpush2.msra.mxu0 0.0
    %630 = vmatprep.subr.mxu0 0.0
    %631 = vmatpush2.msra.mxu0 0.0
    %632 = vmatprep.subr.mxu0 0.0
    %633 = vmatpush2.msra.mxu0 0.0
    %634 = vmatprep.subr.mxu0 0.0
    %635 = vmatpush2.msra.mxu0 0.0
    %636 = vmatprep.subr.mxu0 0.0
    %637 = vmatpush2.msra.mxu0 0.0
    %638 = vmatprep.subr.mxu0 0.0
    %639 = vmatpush2.msra.mxu0 0.0
    %640 = vmatprep.subr.mxu0 0.0
    %641 = vmatpush2.msra.mxu0 0.0
    %642 = vmatprep.subr.mxu0 0.0
    %643 = vmatpush2.msra.mxu0 0.0
    %644 = vmatprep.subr.mxu0 0.0
    %645 = vmatpush2.msra.mxu0 0.0
    %646 = vmatprep.subr.mxu0 0.0
    %647 = vmatpush2.msra.mxu0 0.0
    %648 = vmatprep.subr.mxu0 0.0
    %649 = vmatpush2.msra.mxu0 0.0
    %650 = vmatprep.subr.mxu0 0.0
    %651 = vmatpush2.msra.mxu0 0.0
    %652 = vmatprep.mubr.f32.mxu0 0.0
    %653 = vmatmul.mubr.f32.gmra.mxu0 %v514
    %v654 = vpop.f32.mrf.mxu0
    %v655 = vadd.f32 0.0, %v654
    %v656 = vpop.f32.mrf.mxu0
    %v657 = vadd.f32 0.0, %v656
    %658 = vdwg.mxu0
    %659 = vmatprep.subr.mxu0 %v587
    %660 = vmatpush1.msra.mxu0 %v586
    %661 = vmatprep.subr.mxu0 %v583
    %662 = vmatpush1.msra.mxu0 %v582
    %663 = vmatprep.subr.mxu0 %v579
    %664 = vmatpush1.msra.mxu0 %v578
    %665 = vmatprep.subr.mxu0 %v575
    %666 = vmatpush1.msra.mxu0 %v574
    %667 = vmatprep.subr.mxu0 %v571
    %668 = vmatpush1.msra.mxu0 %v570
    %669 = vmatprep.subr.mxu0 %v567
    %670 = vmatpush1.msra.mxu0 %v566
    %671 = vmatprep.subr.mxu0 %v563
    %672 = vmatpush1.msra.mxu0 %v562
    %673 = vmatprep.subr.mxu0 %v559
    %674 = vmatpush1.msra.mxu0 %v558
    %675 = vmatprep.subr.mxu0 %v555
    %676 = vmatpush1.msra.mxu0 %v554
    %677 = vmatprep.subr.mxu0 %v551
    %678 = vmatpush1.msra.mxu0 %v550
    %679 = vmatprep.subr.mxu0 %v547
    %680 = vmatpush1.msra.mxu0 %v546
    %681 = vmatprep.subr.mxu0 %v543
    %682 = vmatpush1.msra.mxu0 %v542
    %683 = vmatprep.subr.mxu0 %v539
    %684 = vmatpush1.msra.mxu0 %v538
    %685 = vmatprep.subr.mxu0 %v535
    %686 = vmatpush1.msra.mxu0 %v534
    %687 = vmatprep.subr.mxu0 %v531
    %688 = vmatpush1.msra.mxu0 %v530
    %689 = vmatprep.subr.mxu0 %v527
    %690 = vmatpush1.msra.mxu0 %v526
    %691 = vmatprep.subr.mxu0 0.0
    %692 = vmatpush2.msra.mxu0 0.0
    %693 = vmatprep.subr.mxu0 0.0
    %694 = vmatpush2.msra.mxu0 0.0
    %695 = vmatprep.subr.mxu0 0.0
    %696 = vmatpush2.msra.mxu0 0.0
    %697 = vmatprep.subr.mxu0 0.0
    %698 = vmatpush2.msra.mxu0 0.0
    %699 = vmatprep.subr.mxu0 0.0
    %700 = vmatpush2.msra.mxu0 0.0
    %701 = vmatprep.subr.mxu0 0.0
    %702 = vmatpush2.msra.mxu0 0.0
    %703 = vmatprep.subr.mxu0 0.0
    %704 = vmatpush2.msra.mxu0 0.0
    %705 = vmatprep.subr.mxu0 0.0
    %706 = vmatpush2.msra.mxu0 0.0
    %707 = vmatprep.subr.mxu0 0.0
    %708 = vmatpush2.msra.mxu0 0.0
    %709 = vmatprep.subr.mxu0 0.0
    %710 = vmatpush2.msra.mxu0 0.0
    %711 = vmatprep.subr.mxu0 0.0
    %712 = vmatpush2.msra.mxu0 0.0
    %713 = vmatprep.subr.mxu0 0.0
    %714 = vmatpush2.msra.mxu0 0.0
    %715 = vmatprep.subr.mxu0 0.0
    %716 = vmatpush2.msra.mxu0 0.0
    %717 = vmatprep.subr.mxu0 0.0
    %718 = vmatpush2.msra.mxu0 0.0
    %719 = vmatprep.subr.mxu0 0.0
    %720 = vmatpush2.msra.mxu0 0.0
    %721 = vmatprep.subr.mxu0 0.0
    %722 = vmatpush2.msra.mxu0 0.0
    %723 = vmatprep.mubr.f32.mxu0 0.0
    %724 = vmatmul.mubr.f32.gmra.mxu0 %v514
    %v725 = vpop.f32.mrf.mxu0
    %v726 = vadd.f32 0.0, %v725
    %v727 = vpop.f32.mrf.mxu0
    %v728 = vadd.f32 0.0, %v727
    %729 = vdwg.mxu0
    %v730 = vadd.f32 %v520, %v655
    %v731 = vadd.f32 %v521, %v657
    %v732 = vadd.f32 %v522, %v726
    %v733 = vadd.f32 %v523, %v728
    %v734 = vxor.u32 %v730, 2147483648
    %v735 = vxor.u32 %v731, 2147483648
    %v736 = vxor.u32 %v732, 2147483648
    %v737 = vmul.f32 %v734, 1.442695
    %v738 = vpow.pop %v737
    %v739 = vmul.f32 %v735, 1.442695
    %v740 = vpow.pop %v739
    %v741 = vmul.f32 %v736, 1.442695
    %v742 = vpow.pop %v741
    %v743 = vadd.f32 %v738, 1.0
    %v744 = vadd.f32 %v740, 1.0
    %v745 = vadd.f32 %v742, 1.0
    %v746 = vrcp.pop %v743
    %v747 = vmul.f32 1.0, %v746
    %v748 = vrcp.pop %v744
    %v749 = vmul.f32 1.0, %v748
    %v750 = vrcp.pop %v745
    %v751 = vmul.f32 1.0, %v750
    %v752 = vtanh.pop %v733
    %v753 = vmul.f32 %v749, %v512
    %v754 = vmul.f32 %v747, %v752
    %v755 = vadd.f32 %v753, %v754
    %v756 = vtanh.pop %v755
    %v757 = vmul.f32 %v751, %v756
    %s758 = scalar_lea.vmem [#allocation4], 16
    %759 = vst [vmem:[%s758] sm:$0xff] %v757
    %s760 = smul.u32 3, 4
    %s761 = smul.addr %s760, 8
    %s762 = scalar_lea.vmem %s0, %s761
    %v763 = vld [vmem:[%s762] sm:$0xff]
    %v764 = vld [vmem:[%s762 + $0x8] sm:$0xff]
    %v765 = vld [vmem:[%s762 + $0x10] sm:$0xff]
    %v766 = vld [vmem:[%s762 + $0x18] sm:$0xff]
    %v767 = vld [vmem:[%s1] sm:$0xff]
    %v768 = vld [vmem:[%s1 + $0x8] sm:$0xff]
    %v769 = vld [vmem:[%s1 + $0x10] sm:$0xff]
    %v770 = vld [vmem:[%s1 + $0x18] sm:$0xff]
    %v771 = vld [vmem:[%s1 + $0x20] sm:$0xff]
    %v772 = vld [vmem:[%s1 + $0x28] sm:$0xff]
    %v773 = vld [vmem:[%s1 + $0x30] sm:$0xff]
    %v774 = vld [vmem:[%s1 + $0x38] sm:$0xff]
    %v775 = vld [vmem:[%s1 + $0x40] sm:$0xff]
    %v776 = vld [vmem:[%s1 + $0x48] sm:$0xff]
    %v777 = vld [vmem:[%s1 + $0x50] sm:$0xff]
    %v778 = vld [vmem:[%s1 + $0x58] sm:$0xff]
    %v779 = vld [vmem:[%s1 + $0x60] sm:$0xff]
    %v780 = vld [vmem:[%s1 + $0x68] sm:$0xff]
    %v781 = vld [vmem:[%s1 + $0x70] sm:$0xff]
    %v782 = vld [vmem:[%s1 + $0x78] sm:$0xff]
    %v783 = vld [vmem:[%s1 + $0x80] sm:$0xff]
    %v784 = vld [vmem:[%s1 + $0x88] sm:$0xff]
    %v785 = vld [vmem:[%s1 + $0x90] sm:$0xff]
    %v786 = vld [vmem:[%s1 + $0x98] sm:$0xff]
    %v787 = vld [vmem:[%s1 + $0xa0] sm:$0xff]
    %v788 = vld [vmem:[%s1 + $0xa8] sm:$0xff]
    %v789 = vld [vmem:[%s1 + $0xb0] sm:$0xff]
    %v790 = vld [vmem:[%s1 + $0xb8] sm:$0xff]
    %v791 = vld [vmem:[%s1 + $0xc0] sm:$0xff]
    %v792 = vld [vmem:[%s1 + $0xc8] sm:$0xff]
    %v793 = vld [vmem:[%s1 + $0xd0] sm:$0xff]
    %v794 = vld [vmem:[%s1 + $0xd8] sm:$0xff]
    %v795 = vld [vmem:[%s1 + $0xe0] sm:$0xff]
    %v796 = vld [vmem:[%s1 + $0xe8] sm:$0xff]
    %v797 = vld [vmem:[%s1 + $0xf0] sm:$0xff]
    %v798 = vld [vmem:[%s1 + $0xf8] sm:$0xff]
    %v799 = vld [vmem:[%s1 + $0x100] sm:$0xff]
    %v800 = vld [vmem:[%s1 + $0x108] sm:$0xff]
    %v801 = vld [vmem:[%s1 + $0x110] sm:$0xff]
    %v802 = vld [vmem:[%s1 + $0x118] sm:$0xff]
    %v803 = vld [vmem:[%s1 + $0x120] sm:$0xff]
    %v804 = vld [vmem:[%s1 + $0x128] sm:$0xff]
    %v805 = vld [vmem:[%s1 + $0x130] sm:$0xff]
    %v806 = vld [vmem:[%s1 + $0x138] sm:$0xff]
    %v807 = vld [vmem:[%s1 + $0x140] sm:$0xff]
    %v808 = vld [vmem:[%s1 + $0x148] sm:$0xff]
    %v809 = vld [vmem:[%s1 + $0x150] sm:$0xff]
    %v810 = vld [vmem:[%s1 + $0x158] sm:$0xff]
    %v811 = vld [vmem:[%s1 + $0x160] sm:$0xff]
    %v812 = vld [vmem:[%s1 + $0x168] sm:$0xff]
    %v813 = vld [vmem:[%s1 + $0x170] sm:$0xff]
    %v814 = vld [vmem:[%s1 + $0x178] sm:$0xff]
    %v815 = vld [vmem:[%s1 + $0x180] sm:$0xff]
    %v816 = vld [vmem:[%s1 + $0x188] sm:$0xff]
    %v817 = vld [vmem:[%s1 + $0x190] sm:$0xff]
    %v818 = vld [vmem:[%s1 + $0x198] sm:$0xff]
    %v819 = vld [vmem:[%s1 + $0x1a0] sm:$0xff]
    %v820 = vld [vmem:[%s1 + $0x1a8] sm:$0xff]
    %v821 = vld [vmem:[%s1 + $0x1b0] sm:$0xff]
    %v822 = vld [vmem:[%s1 + $0x1b8] sm:$0xff]
    %v823 = vld [vmem:[%s1 + $0x1c0] sm:$0xff]
    %v824 = vld [vmem:[%s1 + $0x1c8] sm:$0xff]
    %v825 = vld [vmem:[%s1 + $0x1d0] sm:$0xff]
    %v826 = vld [vmem:[%s1 + $0x1d8] sm:$0xff]
    %v827 = vld [vmem:[%s1 + $0x1e0] sm:$0xff]
    %v828 = vld [vmem:[%s1 + $0x1e8] sm:$0xff]
    %v829 = vld [vmem:[%s1 + $0x1f0] sm:$0xff]
    %v830 = vld [vmem:[%s1 + $0x1f8] sm:$0xff]
    %831 = vmatprep.subr.mxu0 %v828
    %832 = vmatpush1.msra.mxu0 %v827
    %833 = vmatprep.subr.mxu0 %v824
    %834 = vmatpush1.msra.mxu0 %v823
    %835 = vmatprep.subr.mxu0 %v820
    %836 = vmatpush1.msra.mxu0 %v819
    %837 = vmatprep.subr.mxu0 %v816
    %838 = vmatpush1.msra.mxu0 %v815
    %839 = vmatprep.subr.mxu0 %v812
    %840 = vmatpush1.msra.mxu0 %v811
    %841 = vmatprep.subr.mxu0 %v808
    %842 = vmatpush1.msra.mxu0 %v807
    %843 = vmatprep.subr.mxu0 %v804
    %844 = vmatpush1.msra.mxu0 %v803
    %845 = vmatprep.subr.mxu0 %v800
    %846 = vmatpush1.msra.mxu0 %v799
    %847 = vmatprep.subr.mxu0 %v796
    %848 = vmatpush1.msra.mxu0 %v795
    %849 = vmatprep.subr.mxu0 %v792
    %850 = vmatpush1.msra.mxu0 %v791
    %851 = vmatprep.subr.mxu0 %v788
    %852 = vmatpush1.msra.mxu0 %v787
    %853 = vmatprep.subr.mxu0 %v784
    %854 = vmatpush1.msra.mxu0 %v783
    %855 = vmatprep.subr.mxu0 %v780
    %856 = vmatpush1.msra.mxu0 %v779
    %857 = vmatprep.subr.mxu0 %v776
    %858 = vmatpush1.msra.mxu0 %v775
    %859 = vmatprep.subr.mxu0 %v772
    %860 = vmatpush1.msra.mxu0 %v771
    %861 = vmatprep.subr.mxu0 %v768
    %862 = vmatpush1.msra.mxu0 %v767
    %863 = vmatprep.subr.mxu0 0.0
    %864 = vmatpush2.msra.mxu0 0.0
    %865 = vmatprep.subr.mxu0 0.0
    %866 = vmatpush2.msra.mxu0 0.0
    %867 = vmatprep.subr.mxu0 0.0
    %868 = vmatpush2.msra.mxu0 0.0
    %869 = vmatprep.subr.mxu0 0.0
    %870 = vmatpush2.msra.mxu0 0.0
    %871 = vmatprep.subr.mxu0 0.0
    %872 = vmatpush2.msra.mxu0 0.0
    %873 = vmatprep.subr.mxu0 0.0
    %874 = vmatpush2.msra.mxu0 0.0
    %875 = vmatprep.subr.mxu0 0.0
    %876 = vmatpush2.msra.mxu0 0.0
    %877 = vmatprep.subr.mxu0 0.0
    %878 = vmatpush2.msra.mxu0 0.0
    %879 = vmatprep.subr.mxu0 0.0
    %880 = vmatpush2.msra.mxu0 0.0
    %881 = vmatprep.subr.mxu0 0.0
    %882 = vmatpush2.msra.mxu0 0.0
    %883 = vmatprep.subr.mxu0 0.0
    %884 = vmatpush2.msra.mxu0 0.0
    %885 = vmatprep.subr.mxu0 0.0
    %886 = vmatpush2.msra.mxu0 0.0
    %887 = vmatprep.subr.mxu0 0.0
    %888 = vmatpush2.msra.mxu0 0.0
    %889 = vmatprep.subr.mxu0 0.0
    %890 = vmatpush2.msra.mxu0 0.0
    %891 = vmatprep.subr.mxu0 0.0
    %892 = vmatpush2.msra.mxu0 0.0
    %893 = vmatprep.subr.mxu0 0.0
    %894 = vmatpush2.msra.mxu0 0.0
    %895 = vmatprep.mubr.f32.mxu0 0.0
    %896 = vmatmul.mubr.f32.gmra.mxu0 %v757
    %v897 = vpop.f32.mrf.mxu0
    %v898 = vadd.f32 0.0, %v897
    %v899 = vpop.f32.mrf.mxu0
    %v900 = vadd.f32 0.0, %v899
    %901 = vdwg.mxu0
    %902 = vmatprep.subr.mxu0 %v830
    %903 = vmatpush1.msra.mxu0 %v829
    %904 = vmatprep.subr.mxu0 %v826
    %905 = vmatpush1.msra.mxu0 %v825
    %906 = vmatprep.subr.mxu0 %v822
    %907 = vmatpush1.msra.mxu0 %v821
    %908 = vmatprep.subr.mxu0 %v818
    %909 = vmatpush1.msra.mxu0 %v817
    %910 = vmatprep.subr.mxu0 %v814
    %911 = vmatpush1.msra.mxu0 %v813
    %912 = vmatprep.subr.mxu0 %v810
    %913 = vmatpush1.msra.mxu0 %v809
    %914 = vmatprep.subr.mxu0 %v806
    %915 = vmatpush1.msra.mxu0 %v805
    %916 = vmatprep.subr.mxu0 %v802
    %917 = vmatpush1.msra.mxu0 %v801
    %918 = vmatprep.subr.mxu0 %v798
    %919 = vmatpush1.msra.mxu0 %v797
    %920 = vmatprep.subr.mxu0 %v794
    %921 = vmatpush1.msra.mxu0 %v793
    %922 = vmatprep.subr.mxu0 %v790
    %923 = vmatpush1.msra.mxu0 %v789
    %924 = vmatprep.subr.mxu0 %v786
    %925 = vmatpush1.msra.mxu0 %v785
    %926 = vmatprep.subr.mxu0 %v782
    %927 = vmatpush1.msra.mxu0 %v781
    %928 = vmatprep.subr.mxu0 %v778
    %929 = vmatpush1.msra.mxu0 %v777
    %930 = vmatprep.subr.mxu0 %v774
    %931 = vmatpush1.msra.mxu0 %v773
    %932 = vmatprep.subr.mxu0 %v770
    %933 = vmatpush1.msra.mxu0 %v769
    %934 = vmatprep.subr.mxu0 0.0
    %935 = vmatpush2.msra.mxu0 0.0
    %936 = vmatprep.subr.mxu0 0.0
    %937 = vmatpush2.msra.mxu0 0.0
    %938 = vmatprep.subr.mxu0 0.0
    %939 = vmatpush2.msra.mxu0 0.0
    %940 = vmatprep.subr.mxu0 0.0
    %941 = vmatpush2.msra.mxu0 0.0
    %942 = vmatprep.subr.mxu0 0.0
    %943 = vmatpush2.msra.mxu0 0.0
    %944 = vmatprep.subr.mxu0 0.0
    %945 = vmatpush2.msra.mxu0 0.0
    %946 = vmatprep.subr.mxu0 0.0
    %947 = vmatpush2.msra.mxu0 0.0
    %948 = vmatprep.subr.mxu0 0.0
    %949 = vmatpush2.msra.mxu0 0.0
    %950 = vmatprep.subr.mxu0 0.0
    %951 = vmatpush2.msra.mxu0 0.0
    %952 = vmatprep.subr.mxu0 0.0
    %953 = vmatpush2.msra.mxu0 0.0
    %954 = vmatprep.subr.mxu0 0.0
    %955 = vmatpush2.msra.mxu0 0.0
    %956 = vmatprep.subr.mxu0 0.0
    %957 = vmatpush2.msra.mxu0 0.0
    %958 = vmatprep.subr.mxu0 0.0
    %959 = vmatpush2.msra.mxu0 0.0
    %960 = vmatprep.subr.mxu0 0.0
    %961 = vmatpush2.msra.mxu0 0.0
    %962 = vmatprep.subr.mxu0 0.0
    %963 = vmatpush2.msra.mxu0 0.0
    %964 = vmatprep.subr.mxu0 0.0
    %965 = vmatpush2.msra.mxu0 0.0
    %966 = vmatprep.mubr.f32.mxu0 0.0
    %967 = vmatmul.mubr.f32.gmra.mxu0 %v757
    %v968 = vpop.f32.mrf.mxu0
    %v969 = vadd.f32 0.0, %v968
    %v970 = vpop.f32.mrf.mxu0
    %v971 = vadd.f32 0.0, %v970
    %972 = vdwg.mxu0
    %v973 = vadd.f32 %v763, %v898
    %v974 = vadd.f32 %v764, %v900
    %v975 = vadd.f32 %v765, %v969
    %v976 = vadd.f32 %v766, %v971
    %v977 = vxor.u32 %v973, 2147483648
    %v978 = vxor.u32 %v974, 2147483648
    %v979 = vxor.u32 %v975, 2147483648
    %v980 = vmul.f32 %v977, 1.442695
    %v981 = vpow.pop %v980
    %v982 = vmul.f32 %v978, 1.442695
    %v983 = vpow.pop %v982
    %v984 = vmul.f32 %v979, 1.442695
    %v985 = vpow.pop %v984
    %v986 = vadd.f32 %v981, 1.0
    %v987 = vadd.f32 %v983, 1.0
    %v988 = vadd.f32 %v985, 1.0
    %v989 = vrcp.pop %v986
    %v990 = vmul.f32 1.0, %v989
    %v991 = vrcp.pop %v987
    %v992 = vmul.f32 1.0, %v991
    %v993 = vrcp.pop %v988
    %v994 = vmul.f32 1.0, %v993
    %v995 = vtanh.pop %v976
    %v996 = vmul.f32 %v992, %v755
    %v997 = vmul.f32 %v990, %v995
    %v998 = vadd.f32 %v996, %v997
    %v999 = vtanh.pop %v998
    %v1000 = vmul.f32 %v994, %v999
    %s1001 = scalar_lea.vmem [#allocation4], 24
    %1002 = vst [vmem:[%s1001] sm:$0xff] %v1000
    %s1003 = smul.u32 4, 4
    %s1004 = smul.addr %s1003, 8
    %s1005 = scalar_lea.vmem %s0, %s1004
    %v1006 = vld [vmem:[%s1005] sm:$0xff]
    %v1007 = vld [vmem:[%s1005 + $0x8] sm:$0xff]
    %v1008 = vld [vmem:[%s1005 + $0x10] sm:$0xff]
    %v1009 = vld [vmem:[%s1005 + $0x18] sm:$0xff]
    %v1010 = vld [vmem:[%s1] sm:$0xff]
    %v1011 = vld [vmem:[%s1 + $0x8] sm:$0xff]
    %v1012 = vld [vmem:[%s1 + $0x10] sm:$0xff]
    %v1013 = vld [vmem:[%s1 + $0x18] sm:$0xff]
    %v1014 = vld [vmem:[%s1 + $0x20] sm:$0xff]
    %v1015 = vld [vmem:[%s1 + $0x28] sm:$0xff]
    %v1016 = vld [vmem:[%s1 + $0x30] sm:$0xff]
    %v1017 = vld [vmem:[%s1 + $0x38] sm:$0xff]
    %v1018 = vld [vmem:[%s1 + $0x40] sm:$0xff]
    %v1019 = vld [vmem:[%s1 + $0x48] sm:$0xff]
    %v1020 = vld [vmem:[%s1 + $0x50] sm:$0xff]
    %v1021 = vld [vmem:[%s1 + $0x58] sm:$0xff]
    %v1022 = vld [vmem:[%s1 + $0x60] sm:$0xff]
    %v1023 = vld [vmem:[%s1 + $0x68] sm:$0xff]
    %v1024 = vld [vmem:[%s1 + $0x70] sm:$0xff]
    %v1025 = vld [vmem:[%s1 + $0x78] sm:$0xff]
    %v1026 = vld [vmem:[%s1 + $0x80] sm:$0xff]
    %v1027 = vld [vmem:[%s1 + $0x88] sm:$0xff]
    %v1028 = vld [vmem:[%s1 + $0x90] sm:$0xff]
    %v1029 = vld [vmem:[%s1 + $0x98] sm:$0xff]
    %v1030 = vld [vmem:[%s1 + $0xa0] sm:$0xff]
    %v1031 = vld [vmem:[%s1 + $0xa8] sm:$0xff]
    %v1032 = vld [vmem:[%s1 + $0xb0] sm:$0xff]
    %v1033 = vld [vmem:[%s1 + $0xb8] sm:$0xff]
    %v1034 = vld [vmem:[%s1 + $0xc0] sm:$0xff]
    %v1035 = vld [vmem:[%s1 + $0xc8] sm:$0xff]
    %v1036 = vld [vmem:[%s1 + $0xd0] sm:$0xff]
    %v1037 = vld [vmem:[%s1 + $0xd8] sm:$0xff]
    %v1038 = vld [vmem:[%s1 + $0xe0] sm:$0xff]
    %v1039 = vld [vmem:[%s1 + $0xe8] sm:$0xff]
    %v1040 = vld [vmem:[%s1 + $0xf0] sm:$0xff]
    %v1041 = vld [vmem:[%s1 + $0xf8] sm:$0xff]
    %v1042 = vld [vmem:[%s1 + $0x100] sm:$0xff]
    %v1043 = vld [vmem:[%s1 + $0x108] sm:$0xff]
    %v1044 = vld [vmem:[%s1 + $0x110] sm:$0xff]
    %v1045 = vld [vmem:[%s1 + $0x118] sm:$0xff]
    %v1046 = vld [vmem:[%s1 + $0x120] sm:$0xff]
    %v1047 = vld [vmem:[%s1 + $0x128] sm:$0xff]
    %v1048 = vld [vmem:[%s1 + $0x130] sm:$0xff]
    %v1049 = vld [vmem:[%s1 + $0x138] sm:$0xff]
    %v1050 = vld [vmem:[%s1 + $0x140] sm:$0xff]
    %v1051 = vld [vmem:[%s1 + $0x148] sm:$0xff]
    %v1052 = vld [vmem:[%s1 + $0x150] sm:$0xff]
    %v1053 = vld [vmem:[%s1 + $0x158] sm:$0xff]
    %v1054 = vld [vmem:[%s1 + $0x160] sm:$0xff]
    %v1055 = vld [vmem:[%s1 + $0x168] sm:$0xff]
    %v1056 = vld [vmem:[%s1 + $0x170] sm:$0xff]
    %v1057 = vld [vmem:[%s1 + $0x178] sm:$0xff]
    %v1058 = vld [vmem:[%s1 + $0x180] sm:$0xff]
    %v1059 = vld [vmem:[%s1 + $0x188] sm:$0xff]
    %v1060 = vld [vmem:[%s1 + $0x190] sm:$0xff]
    %v1061 = vld [vmem:[%s1 + $0x198] sm:$0xff]
    %v1062 = vld [vmem:[%s1 + $0x1a0] sm:$0xff]
    %v1063 = vld [vmem:[%s1 + $0x1a8] sm:$0xff]
    %v1064 = vld [vmem:[%s1 + $0x1b0] sm:$0xff]
    %v1065 = vld [vmem:[%s1 + $0x1b8] sm:$0xff]
    %v1066 = vld [vmem:[%s1 + $0x1c0] sm:$0xff]
    %v1067 = vld [vmem:[%s1 + $0x1c8] sm:$0xff]
    %v1068 = vld [vmem:[%s1 + $0x1d0] sm:$0xff]
    %v1069 = vld [vmem:[%s1 + $0x1d8] sm:$0xff]
    %v1070 = vld [vmem:[%s1 + $0x1e0] sm:$0xff]
    %v1071 = vld [vmem:[%s1 + $0x1e8] sm:$0xff]
    %v1072 = vld [vmem:[%s1 + $0x1f0] sm:$0xff]
    %v1073 = vld [vmem:[%s1 + $0x1f8] sm:$0xff]
    %1074 = vmatprep.subr.mxu0 %v1071
    %1075 = vmatpush1.msra.mxu0 %v1070
    %1076 = vmatprep.subr.mxu0 %v1067
    %1077 = vmatpush1.msra.mxu0 %v1066
    %1078 = vmatprep.subr.mxu0 %v1063
    %1079 = vmatpush1.msra.mxu0 %v1062
    %1080 = vmatprep.subr.mxu0 %v1059
    %1081 = vmatpush1.msra.mxu0 %v1058
    %1082 = vmatprep.subr.mxu0 %v1055
    %1083 = vmatpush1.msra.mxu0 %v1054
    %1084 = vmatprep.subr.mxu0 %v1051
    %1085 = vmatpush1.msra.mxu0 %v1050
    %1086 = vmatprep.subr.mxu0 %v1047
    %1087 = vmatpush1.msra.mxu0 %v1046
    %1088 = vmatprep.subr.mxu0 %v1043
    %1089 = vmatpush1.msra.mxu0 %v1042
    %1090 = vmatprep.subr.mxu0 %v1039
    %1091 = vmatpush1.msra.mxu0 %v1038
    %1092 = vmatprep.subr.mxu0 %v1035
    %1093 = vmatpush1.msra.mxu0 %v1034
    %1094 = vmatprep.subr.mxu0 %v1031
    %1095 = vmatpush1.msra.mxu0 %v1030
    %1096 = vmatprep.subr.mxu0 %v1027
    %1097 = vmatpush1.msra.mxu0 %v1026
    %1098 = vmatprep.subr.mxu0 %v1023
    %1099 = vmatpush1.msra.mxu0 %v1022
    %1100 = vmatprep.subr.mxu0 %v1019
    %1101 = vmatpush1.msra.mxu0 %v1018
    %1102 = vmatprep.subr.mxu0 %v1015
    %1103 = vmatpush1.msra.mxu0 %v1014
    %1104 = vmatprep.subr.mxu0 %v1011
    %1105 = vmatpush1.msra.mxu0 %v1010
    %1106 = vmatprep.subr.mxu0 0.0
    %1107 = vmatpush2.msra.mxu0 0.0
    %1108 = vmatprep.subr.mxu0 0.0
    %1109 = vmatpush2.msra.mxu0 0.0
    %1110 = vmatprep.subr.mxu0 0.0
    %1111 = vmatpush2.msra.mxu0 0.0
    %1112 = vmatprep.subr.mxu0 0.0
    %1113 = vmatpush2.msra.mxu0 0.0
    %1114 = vmatprep.subr.mxu0 0.0
    %1115 = vmatpush2.msra.mxu0 0.0
    %1116 = vmatprep.subr.mxu0 0.0
    %1117 = vmatpush2.msra.mxu0 0.0
    %1118 = vmatprep.subr.mxu0 0.0
    %1119 = vmatpush2.msra.mxu0 0.0
    %1120 = vmatprep.subr.mxu0 0.0
    %1121 = vmatpush2.msra.mxu0 0.0
    %1122 = vmatprep.subr.mxu0 0.0
    %1123 = vmatpush2.msra.mxu0 0.0
    %1124 = vmatprep.subr.mxu0 0.0
    %1125 = vmatpush2.msra.mxu0 0.0
    %1126 = vmatprep.subr.mxu0 0.0
    %1127 = vmatpush2.msra.mxu0 0.0
    %1128 = vmatprep.subr.mxu0 0.0
    %1129 = vmatpush2.msra.mxu0 0.0
    %1130 = vmatprep.subr.mxu0 0.0
    %1131 = vmatpush2.msra.mxu0 0.0
    %1132 = vmatprep.subr.mxu0 0.0
    %1133 = vmatpush2.msra.mxu0 0.0
    %1134 = vmatprep.subr.mxu0 0.0
    %1135 = vmatpush2.msra.mxu0 0.0
    %1136 = vmatprep.subr.mxu0 0.0
    %1137 = vmatpush2.msra.mxu0 0.0
    %1138 = vmatprep.mubr.f32.mxu0 0.0
    %1139 = vmatmul.mubr.f32.gmra.mxu0 %v1000
    %v1140 = vpop.f32.mrf.mxu0
    %v1141 = vadd.f32 0.0, %v1140
    %v1142 = vpop.f32.mrf.mxu0
    %v1143 = vadd.f32 0.0, %v1142
    %1144 = vdwg.mxu0
    %1145 = vmatprep.subr.mxu0 %v1073
    %1146 = vmatpush1.msra.mxu0 %v1072
    %1147 = vmatprep.subr.mxu0 %v1069
    %1148 = vmatpush1.msra.mxu0 %v1068
    %1149 = vmatprep.subr.mxu0 %v1065
    %1150 = vmatpush1.msra.mxu0 %v1064
    %1151 = vmatprep.subr.mxu0 %v1061
    %1152 = vmatpush1.msra.mxu0 %v1060
    %1153 = vmatprep.subr.mxu0 %v1057
    %1154 = vmatpush1.msra.mxu0 %v1056
    %1155 = vmatprep.subr.mxu0 %v1053
    %1156 = vmatpush1.msra.mxu0 %v1052
    %1157 = vmatprep.subr.mxu0 %v1049
    %1158 = vmatpush1.msra.mxu0 %v1048
    %1159 = vmatprep.subr.mxu0 %v1045
    %1160 = vmatpush1.msra.mxu0 %v1044
    %1161 = vmatprep.subr.mxu0 %v1041
    %1162 = vmatpush1.msra.mxu0 %v1040
    %1163 = vmatprep.subr.mxu0 %v1037
    %1164 = vmatpush1.msra.mxu0 %v1036
    %1165 = vmatprep.subr.mxu0 %v1033
    %1166 = vmatpush1.msra.mxu0 %v1032
    %1167 = vmatprep.subr.mxu0 %v1029
    %1168 = vmatpush1.msra.mxu0 %v1028
    %1169 = vmatprep.subr.mxu0 %v1025
    %1170 = vmatpush1.msra.mxu0 %v1024
    %1171 = vmatprep.subr.mxu0 %v1021
    %1172 = vmatpush1.msra.mxu0 %v1020
    %1173 = vmatprep.subr.mxu0 %v1017
    %1174 = vmatpush1.msra.mxu0 %v1016
    %1175 = vmatprep.subr.mxu0 %v1013
    %1176 = vmatpush1.msra.mxu0 %v1012
    %1177 = vmatprep.subr.mxu0 0.0
    %1178 = vmatpush2.msra.mxu0 0.0
    %1179 = vmatprep.subr.mxu0 0.0
    %1180 = vmatpush2.msra.mxu0 0.0
    %1181 = vmatprep.subr.mxu0 0.0
    %1182 = vmatpush2.msra.mxu0 0.0
    %1183 = vmatprep.subr.mxu0 0.0
    %1184 = vmatpush2.msra.mxu0 0.0
    %1185 = vmatprep.subr.mxu0 0.0
    %1186 = vmatpush2.msra.mxu0 0.0
    %1187 = vmatprep.subr.mxu0 0.0
    %1188 = vmatpush2.msra.mxu0 0.0
    %1189 = vmatprep.subr.mxu0 0.0
    %1190 = vmatpush2.msra.mxu0 0.0
    %1191 = vmatprep.subr.mxu0 0.0
    %1192 = vmatpush2.msra.mxu0 0.0
    %1193 = vmatprep.subr.mxu0 0.0
    %1194 = vmatpush2.msra.mxu0 0.0
    %1195 = vmatprep.subr.mxu0 0.0
    %1196 = vmatpush2.msra.mxu0 0.0
    %1197 = vmatprep.subr.mxu0 0.0
    %1198 = vmatpush2.msra.mxu0 0.0
    %1199 = vmatprep.subr.mxu0 0.0
    %1200 = vmatpush2.msra.mxu0 0.0
    %1201 = vmatprep.subr.mxu0 0.0
    %1202 = vmatpush2.msra.mxu0 0.0
    %1203 = vmatprep.subr.mxu0 0.0
    %1204 = vmatpush2.msra.mxu0 0.0
    %1205 = vmatprep.subr.mxu0 0.0
    %1206 = vmatpush2.msra.mxu0 0.0
    %1207 = vmatprep.subr.mxu0 0.0
    %1208 = vmatpush2.msra.mxu0 0.0
    %1209 = vmatprep.mubr.f32.mxu0 0.0
    %1210 = vmatmul.mubr.f32.gmra.mxu0 %v1000
    %v1211 = vpop.f32.mrf.mxu0
    %v1212 = vadd.f32 0.0, %v1211
    %v1213 = vpop.f32.mrf.mxu0
    %v1214 = vadd.f32 0.0, %v1213
    %1215 = vdwg.mxu0
    %v1216 = vadd.f32 %v1006, %v1141
    %v1217 = vadd.f32 %v1007, %v1143
    %v1218 = vadd.f32 %v1008, %v1212
    %v1219 = vadd.f32 %v1009, %v1214
    %v1220 = vxor.u32 %v1216, 2147483648
    %v1221 = vxor.u32 %v1217, 2147483648
    %v1222 = vxor.u32 %v1218, 2147483648
    %v1223 = vmul.f32 %v1220, 1.442695
    %v1224 = vpow.pop %v1223
    %v1225 = vmul.f32 %v1221, 1.442695
    %v1226 = vpow.pop %v1225
    %v1227 = vmul.f32 %v1222, 1.442695
    %v1228 = vpow.pop %v1227
    %v1229 = vadd.f32 %v1224, 1.0
    %v1230 = vadd.f32 %v1226, 1.0
    %v1231 = vadd.f32 %v1228, 1.0
    %v1232 = vrcp.pop %v1229
    %v1233 = vmul.f32 1.0, %v1232
    %v1234 = vrcp.pop %v1230
    %v1235 = vmul.f32 1.0, %v1234
    %v1236 = vrcp.pop %v1231
    %v1237 = vmul.f32 1.0, %v1236
    %v1238 = vtanh.pop %v1219
    %v1239 = vmul.f32 %v1235, %v998
    %v1240 = vmul.f32 %v1233, %v1238
    %v1241 = vadd.f32 %v1239, %v1240
    %v1242 = vtanh.pop %v1241
    %v1243 = vmul.f32 %v1237, %v1242
    %s1244 = scalar_lea.vmem [#allocation4], 32
    %1245 = vst [vmem:[%s1244] sm:$0xff] %v1243
    %s1246 = smul.u32 5, 4
    %s1247 = smul.addr %s1246, 8
    %s1248 = scalar_lea.vmem %s0, %s1247
    %v1249 = vld [vmem:[%s1248] sm:$0xff]
    %v1250 = vld [vmem:[%s1248 + $0x8] sm:$0xff]
    %v1251 = vld [vmem:[%s1248 + $0x10] sm:$0xff]
    %v1252 = vld [vmem:[%s1248 + $0x18] sm:$0xff]
    %v1253 = vld [vmem:[%s1] sm:$0xff]
    %v1254 = vld [vmem:[%s1 + $0x8] sm:$0xff]
    %v1255 = vld [vmem:[%s1 + $0x10] sm:$0xff]
    %v1256 = vld [vmem:[%s1 + $0x18] sm:$0xff]
    %v1257 = vld [vmem:[%s1 + $0x20] sm:$0xff]
    %v1258 = vld [vmem:[%s1 + $0x28] sm:$0xff]
    %v1259 = vld [vmem:[%s1 + $0x30] sm:$0xff]
    %v1260 = vld [vmem:[%s1 + $0x38] sm:$0xff]
    %v1261 = vld [vmem:[%s1 + $0x40] sm:$0xff]
    %v1262 = vld [vmem:[%s1 + $0x48] sm:$0xff]
    %v1263 = vld [vmem:[%s1 + $0x50] sm:$0xff]
    %v1264 = vld [vmem:[%s1 + $0x58] sm:$0xff]
    %v1265 = vld [vmem:[%s1 + $0x60] sm:$0xff]
    %v1266 = vld [vmem:[%s1 + $0x68] sm:$0xff]
    %v1267 = vld [vmem:[%s1 + $0x70] sm:$0xff]
    %v1268 = vld [vmem:[%s1 + $0x78] sm:$0xff]
    %v1269 = vld [vmem:[%s1 + $0x80] sm:$0xff]
    %v1270 = vld [vmem:[%s1 + $0x88] sm:$0xff]
    %v1271 = vld [vmem:[%s1 + $0x90] sm:$0xff]
    %v1272 = vld [vmem:[%s1 + $0x98] sm:$0xff]
    %v1273 = vld [vmem:[%s1 + $0xa0] sm:$0xff]
    %v1274 = vld [vmem:[%s1 + $0xa8] sm:$0xff]
    %v1275 = vld [vmem:[%s1 + $0xb0] sm:$0xff]
    %v1276 = vld [vmem:[%s1 + $0xb8] sm:$0xff]
    %v1277 = vld [vmem:[%s1 + $0xc0] sm:$0xff]
    %v1278 = vld [vmem:[%s1 + $0xc8] sm:$0xff]
    %v1279 = vld [vmem:[%s1 + $0xd0] sm:$0xff]
    %v1280 = vld [vmem:[%s1 + $0xd8] sm:$0xff]
    %v1281 = vld [vmem:[%s1 + $0xe0] sm:$0xff]
    %v1282 = vld [vmem:[%s1 + $0xe8] sm:$0xff]
    %v1283 = vld [vmem:[%s1 + $0xf0] sm:$0xff]
    %v1284 = vld [vmem:[%s1 + $0xf8] sm:$0xff]
    %v1285 = vld [vmem:[%s1 + $0x100] sm:$0xff]
    %v1286 = vld [vmem:[%s1 + $0x108] sm:$0xff]
    %v1287 = vld [vmem:[%s1 + $0x110] sm:$0xff]
    %v1288 = vld [vmem:[%s1 + $0x118] sm:$0xff]
    %v1289 = vld [vmem:[%s1 + $0x120] sm:$0xff]
    %v1290 = vld [vmem:[%s1 + $0x128] sm:$0xff]
    %v1291 = vld [vmem:[%s1 + $0x130] sm:$0xff]
    %v1292 = vld [vmem:[%s1 + $0x138] sm:$0xff]
    %v1293 = vld [vmem:[%s1 + $0x140] sm:$0xff]
    %v1294 = vld [vmem:[%s1 + $0x148] sm:$0xff]
    %v1295 = vld [vmem:[%s1 + $0x150] sm:$0xff]
    %v1296 = vld [vmem:[%s1 + $0x158] sm:$0xff]
    %v1297 = vld [vmem:[%s1 + $0x160] sm:$0xff]
    %v1298 = vld [vmem:[%s1 + $0x168] sm:$0xff]
    %v1299 = vld [vmem:[%s1 + $0x170] sm:$0xff]
    %v1300 = vld [vmem:[%s1 + $0x178] sm:$0xff]
    %v1301 = vld [vmem:[%s1 + $0x180] sm:$0xff]
    %v1302 = vld [vmem:[%s1 + $0x188] sm:$0xff]
    %v1303 = vld [vmem:[%s1 + $0x190] sm:$0xff]
    %v1304 = vld [vmem:[%s1 + $0x198] sm:$0xff]
    %v1305 = vld [vmem:[%s1 + $0x1a0] sm:$0xff]
    %v1306 = vld [vmem:[%s1 + $0x1a8] sm:$0xff]
    %v1307 = vld [vmem:[%s1 + $0x1b0] sm:$0xff]
    %v1308 = vld [vmem:[%s1 + $0x1b8] sm:$0xff]
    %v1309 = vld [vmem:[%s1 + $0x1c0] sm:$0xff]
    %v1310 = vld [vmem:[%s1 + $0x1c8] sm:$0xff]
    %v1311 = vld [vmem:[%s1 + $0x1d0] sm:$0xff]
    %v1312 = vld [vmem:[%s1 + $0x1d8] sm:$0xff]
    %v1313 = vld [vmem:[%s1 + $0x1e0] sm:$0xff]
    %v1314 = vld [vmem:[%s1 + $0x1e8] sm:$0xff]
    %v1315 = vld [vmem:[%s1 + $0x1f0] sm:$0xff]
    %v1316 = vld [vmem:[%s1 + $0x1f8] sm:$0xff]
    %1317 = vmatprep.subr.mxu0 %v1314
    %1318 = vmatpush1.msra.mxu0 %v1313
    %1319 = vmatprep.subr.mxu0 %v1310
    %1320 = vmatpush1.msra.mxu0 %v1309
    %1321 = vmatprep.subr.mxu0 %v1306
    %1322 = vmatpush1.msra.mxu0 %v1305
    %1323 = vmatprep.subr.mxu0 %v1302
    %1324 = vmatpush1.msra.mxu0 %v1301
    %1325 = vmatprep.subr.mxu0 %v1298
    %1326 = vmatpush1.msra.mxu0 %v1297
    %1327 = vmatprep.subr.mxu0 %v1294
    %1328 = vmatpush1.msra.mxu0 %v1293
    %1329 = vmatprep.subr.mxu0 %v1290
    %1330 = vmatpush1.msra.mxu0 %v1289
    %1331 = vmatprep.subr.mxu0 %v1286
    %1332 = vmatpush1.msra.mxu0 %v1285
    %1333 = vmatprep.subr.mxu0 %v1282
    %1334 = vmatpush1.msra.mxu0 %v1281
    %1335 = vmatprep.subr.mxu0 %v1278
    %1336 = vmatpush1.msra.mxu0 %v1277
    %1337 = vmatprep.subr.mxu0 %v1274
    %1338 = vmatpush1.msra.mxu0 %v1273
    %1339 = vmatprep.subr.mxu0 %v1270
    %1340 = vmatpush1.msra.mxu0 %v1269
    %1341 = vmatprep.subr.mxu0 %v1266
    %1342 = vmatpush1.msra.mxu0 %v1265
    %1343 = vmatprep.subr.mxu0 %v1262
    %1344 = vmatpush1.msra.mxu0 %v1261
    %1345 = vmatprep.subr.mxu0 %v1258
    %1346 = vmatpush1.msra.mxu0 %v1257
    %1347 = vmatprep.subr.mxu0 %v1254
    %1348 = vmatpush1.msra.mxu0 %v1253
    %1349 = vmatprep.subr.mxu0 0.0
    %1350 = vmatpush2.msra.mxu0 0.0
    %1351 = vmatprep.subr.mxu0 0.0
    %1352 = vmatpush2.msra.mxu0 0.0
    %1353 = vmatprep.subr.mxu0 0.0
    %1354 = vmatpush2.msra.mxu0 0.0
    %1355 = vmatprep.subr.mxu0 0.0
    %1356 = vmatpush2.msra.mxu0 0.0
    %1357 = vmatprep.subr.mxu0 0.0
    %1358 = vmatpush2.msra.mxu0 0.0
    %1359 = vmatprep.subr.mxu0 0.0
    %1360 = vmatpush2.msra.mxu0 0.0
    %1361 = vmatprep.subr.mxu0 0.0
    %1362 = vmatpush2.msra.mxu0 0.0
    %1363 = vmatprep.subr.mxu0 0.0
    %1364 = vmatpush2.msra.mxu0 0.0
    %1365 = vmatprep.subr.mxu0 0.0
    %1366 = vmatpush2.msra.mxu0 0.0
    %1367 = vmatprep.subr.mxu0 0.0
    %1368 = vmatpush2.msra.mxu0 0.0
    %1369 = vmatprep.subr.mxu0 0.0
    %1370 = vmatpush2.msra.mxu0 0.0
    %1371 = vmatprep.subr.mxu0 0.0
    %1372 = vmatpush2.msra.mxu0 0.0
    %1373 = vmatprep.subr.mxu0 0.0
    %1374 = vmatpush2.msra.mxu0 0.0
    %1375 = vmatprep.subr.mxu0 0.0
    %1376 = vmatpush2.msra.mxu0 0.0
    %1377 = vmatprep.subr.mxu0 0.0
    %1378 = vmatpush2.msra.mxu0 0.0
    %1379 = vmatprep.subr.mxu0 0.0
    %1380 = vmatpush2.msra.mxu0 0.0
    %1381 = vmatprep.mubr.f32.mxu0 0.0
    %1382 = vmatmul.mubr.f32.gmra.mxu0 %v1243
    %v1383 = vpop.f32.mrf.mxu0
    %v1384 = vadd.f32 0.0, %v1383
    %v1385 = vpop.f32.mrf.mxu0
    %v1386 = vadd.f32 0.0, %v1385
    %1387 = vdwg.mxu0
    %1388 = vmatprep.subr.mxu0 %v1316
    %1389 = vmatpush1.msra.mxu0 %v1315
    %1390 = vmatprep.subr.mxu0 %v1312
    %1391 = vmatpush1.msra.mxu0 %v1311
    %1392 = vmatprep.subr.mxu0 %v1308
    %1393 = vmatpush1.msra.mxu0 %v1307
    %1394 = vmatprep.subr.mxu0 %v1304
    %1395 = vmatpush1.msra.mxu0 %v1303
    %1396 = vmatprep.subr.mxu0 %v1300
    %1397 = vmatpush1.msra.mxu0 %v1299
    %1398 = vmatprep.subr.mxu0 %v1296
    %1399 = vmatpush1.msra.mxu0 %v1295
    %1400 = vmatprep.subr.mxu0 %v1292
    %1401 = vmatpush1.msra.mxu0 %v1291
    %1402 = vmatprep.subr.mxu0 %v1288
    %1403 = vmatpush1.msra.mxu0 %v1287
    %1404 = vmatprep.subr.mxu0 %v1284
    %1405 = vmatpush1.msra.mxu0 %v1283
    %1406 = vmatprep.subr.mxu0 %v1280
    %1407 = vmatpush1.msra.mxu0 %v1279
    %1408 = vmatprep.subr.mxu0 %v1276
    %1409 = vmatpush1.msra.mxu0 %v1275
    %1410 = vmatprep.subr.mxu0 %v1272
    %1411 = vmatpush1.msra.mxu0 %v1271
    %1412 = vmatprep.subr.mxu0 %v1268
    %1413 = vmatpush1.msra.mxu0 %v1267
    %1414 = vmatprep.subr.mxu0 %v1264
    %1415 = vmatpush1.msra.mxu0 %v1263
    %1416 = vmatprep.subr.mxu0 %v1260
    %1417 = vmatpush1.msra.mxu0 %v1259
    %1418 = vmatprep.subr.mxu0 %v1256
    %1419 = vmatpush1.msra.mxu0 %v1255
    %1420 = vmatprep.subr.mxu0 0.0
    %1421 = vmatpush2.msra.mxu0 0.0
    %1422 = vmatprep.subr.mxu0 0.0
    %1423 = vmatpush2.msra.mxu0 0.0
    %1424 = vmatprep.subr.mxu0 0.0
    %1425 = vmatpush2.msra.mxu0 0.0
    %1426 = vmatprep.subr.mxu0 0.0
    %1427 = vmatpush2.msra.mxu0 0.0
    %1428 = vmatprep.subr.mxu0 0.0
    %1429 = vmatpush2.msra.mxu0 0.0
    %1430 = vmatprep.subr.mxu0 0.0
    %1431 = vmatpush2.msra.mxu0 0.0
    %1432 = vmatprep.subr.mxu0 0.0
    %1433 = vmatpush2.msra.mxu0 0.0
    %1434 = vmatprep.subr.mxu0 0.0
    %1435 = vmatpush2.msra.mxu0 0.0
    %1436 = vmatprep.subr.mxu0 0.0
    %1437 = vmatpush2.msra.mxu0 0.0
    %1438 = vmatprep.subr.mxu0 0.0
    %1439 = vmatpush2.msra.mxu0 0.0
    %1440 = vmatprep.subr.mxu0 0.0
    %1441 = vmatpush2.msra.mxu0 0.0
    %1442 = vmatprep.subr.mxu0 0.0
    %1443 = vmatpush2.msra.mxu0 0.0
    %1444 = vmatprep.subr.mxu0 0.0
    %1445 = vmatpush2.msra.mxu0 0.0
    %1446 = vmatprep.subr.mxu0 0.0
    %1447 = vmatpush2.msra.mxu0 0.0
    %1448 = vmatprep.subr.mxu0 0.0
    %1449 = vmatpush2.msra.mxu0 0.0
    %1450 = vmatprep.subr.mxu0 0.0
    %1451 = vmatpush2.msra.mxu0 0.0
    %1452 = vmatprep.mubr.f32.mxu0 0.0
    %1453 = vmatmul.mubr.f32.gmra.mxu0 %v1243
    %v1454 = vpop.f32.mrf.mxu0
    %v1455 = vadd.f32 0.0, %v1454
    %v1456 = vpop.f32.mrf.mxu0
    %v1457 = vadd.f32 0.0, %v1456
    %1458 = vdwg.mxu0
    %v1459 = vadd.f32 %v1249, %v1384
    %v1460 = vadd.f32 %v1250, %v1386
    %v1461 = vadd.f32 %v1251, %v1455
    %v1462 = vadd.f32 %v1252, %v1457
    %v1463 = vxor.u32 %v1459, 2147483648
    %v1464 = vxor.u32 %v1460, 2147483648
    %v1465 = vxor.u32 %v1461, 2147483648
    %v1466 = vmul.f32 %v1463, 1.442695
    %v1467 = vpow.pop %v1466
    %v1468 = vmul.f32 %v1464, 1.442695
    %v1469 = vpow.pop %v1468
    %v1470 = vmul.f32 %v1465, 1.442695
    %v1471 = vpow.pop %v1470
    %v1472 = vadd.f32 %v1467, 1.0
    %v1473 = vadd.f32 %v1469, 1.0
    %v1474 = vadd.f32 %v1471, 1.0
    %v1475 = vrcp.pop %v1472
    %v1476 = vmul.f32 1.0, %v1475
    %v1477 = vrcp.pop %v1473
    %v1478 = vmul.f32 1.0, %v1477
    %v1479 = vrcp.pop %v1474
    %v1480 = vmul.f32 1.0, %v1479
    %v1481 = vtanh.pop %v1462
    %v1482 = vmul.f32 %v1478, %v1241
    %v1483 = vmul.f32 %v1476, %v1481
    %v1484 = vadd.f32 %v1482, %v1483
    %v1485 = vtanh.pop %v1484
    %v1486 = vmul.f32 %v1480, %v1485
    %s1487 = scalar_lea.vmem [#allocation4], 40
    %1488 = vst [vmem:[%s1487] sm:$0xff] %v1486
    %s1489 = smul.u32 6, 4
    %s1490 = smul.addr %s1489, 8
    %s1491 = scalar_lea.vmem %s0, %s1490
    %v1492 = vld [vmem:[%s1491] sm:$0xff]
    %v1493 = vld [vmem:[%s1491 + $0x8] sm:$0xff]
    %v1494 = vld [vmem:[%s1491 + $0x10] sm:$0xff]
    %v1495 = vld [vmem:[%s1491 + $0x18] sm:$0xff]
    %v1496 = vld [vmem:[%s1] sm:$0xff]
    %v1497 = vld [vmem:[%s1 + $0x8] sm:$0xff]
    %v1498 = vld [vmem:[%s1 + $0x10] sm:$0xff]
    %v1499 = vld [vmem:[%s1 + $0x18] sm:$0xff]
    %v1500 = vld [vmem:[%s1 + $0x20] sm:$0xff]
    %v1501 = vld [vmem:[%s1 + $0x28] sm:$0xff]
    %v1502 = vld [vmem:[%s1 + $0x30] sm:$0xff]
    %v1503 = vld [vmem:[%s1 + $0x38] sm:$0xff]
    %v1504 = vld [vmem:[%s1 + $0x40] sm:$0xff]
    %v1505 = vld [vmem:[%s1 + $0x48] sm:$0xff]
    %v1506 = vld [vmem:[%s1 + $0x50] sm:$0xff]
    %v1507 = vld [vmem:[%s1 + $0x58] sm:$0xff]
    %v1508 = vld [vmem:[%s1 + $0x60] sm:$0xff]
    %v1509 = vld [vmem:[%s1 + $0x68] sm:$0xff]
    %v1510 = vld [vmem:[%s1 + $0x70] sm:$0xff]
    %v1511 = vld [vmem:[%s1 + $0x78] sm:$0xff]
    %v1512 = vld [vmem:[%s1 + $0x80] sm:$0xff]
    %v1513 = vld [vmem:[%s1 + $0x88] sm:$0xff]
    %v1514 = vld [vmem:[%s1 + $0x90] sm:$0xff]
    %v1515 = vld [vmem:[%s1 + $0x98] sm:$0xff]
    %v1516 = vld [vmem:[%s1 + $0xa0] sm:$0xff]
    %v1517 = vld [vmem:[%s1 + $0xa8] sm:$0xff]
    %v1518 = vld [vmem:[%s1 + $0xb0] sm:$0xff]
    %v1519 = vld [vmem:[%s1 + $0xb8] sm:$0xff]
    %v1520 = vld [vmem:[%s1 + $0xc0] sm:$0xff]
    %v1521 = vld [vmem:[%s1 + $0xc8] sm:$0xff]
    %v1522 = vld [vmem:[%s1 + $0xd0] sm:$0xff]
    %v1523 = vld [vmem:[%s1 + $0xd8] sm:$0xff]
    %v1524 = vld [vmem:[%s1 + $0xe0] sm:$0xff]
    %v1525 = vld [vmem:[%s1 + $0xe8] sm:$0xff]
    %v1526 = vld [vmem:[%s1 + $0xf0] sm:$0xff]
    %v1527 = vld [vmem:[%s1 + $0xf8] sm:$0xff]
    %v1528 = vld [vmem:[%s1 + $0x100] sm:$0xff]
    %v1529 = vld [vmem:[%s1 + $0x108] sm:$0xff]
    %v1530 = vld [vmem:[%s1 + $0x110] sm:$0xff]
    %v1531 = vld [vmem:[%s1 + $0x118] sm:$0xff]
    %v1532 = vld [vmem:[%s1 + $0x120] sm:$0xff]
    %v1533 = vld [vmem:[%s1 + $0x128] sm:$0xff]
    %v1534 = vld [vmem:[%s1 + $0x130] sm:$0xff]
    %v1535 = vld [vmem:[%s1 + $0x138] sm:$0xff]
    %v1536 = vld [vmem:[%s1 + $0x140] sm:$0xff]
    %v1537 = vld [vmem:[%s1 + $0x148] sm:$0xff]
    %v1538 = vld [vmem:[%s1 + $0x150] sm:$0xff]
    %v1539 = vld [vmem:[%s1 + $0x158] sm:$0xff]
    %v1540 = vld [vmem:[%s1 + $0x160] sm:$0xff]
    %v1541 = vld [vmem:[%s1 + $0x168] sm:$0xff]
    %v1542 = vld [vmem:[%s1 + $0x170] sm:$0xff]
    %v1543 = vld [vmem:[%s1 + $0x178] sm:$0xff]
    %v1544 = vld [vmem:[%s1 + $0x180] sm:$0xff]
    %v1545 = vld [vmem:[%s1 + $0x188] sm:$0xff]
    %v1546 = vld [vmem:[%s1 + $0x190] sm:$0xff]
    %v1547 = vld [vmem:[%s1 + $0x198] sm:$0xff]
    %v1548 = vld [vmem:[%s1 + $0x1a0] sm:$0xff]
    %v1549 = vld [vmem:[%s1 + $0x1a8] sm:$0xff]
    %v1550 = vld [vmem:[%s1 + $0x1b0] sm:$0xff]
    %v1551 = vld [vmem:[%s1 + $0x1b8] sm:$0xff]
    %v1552 = vld [vmem:[%s1 + $0x1c0] sm:$0xff]
    %v1553 = vld [vmem:[%s1 + $0x1c8] sm:$0xff]
    %v1554 = vld [vmem:[%s1 + $0x1d0] sm:$0xff]
    %v1555 = vld [vmem:[%s1 + $0x1d8] sm:$0xff]
    %v1556 = vld [vmem:[%s1 + $0x1e0] sm:$0xff]
    %v1557 = vld [vmem:[%s1 + $0x1e8] sm:$0xff]
    %v1558 = vld [vmem:[%s1 + $0x1f0] sm:$0xff]
    %v1559 = vld [vmem:[%s1 + $0x1f8] sm:$0xff]
    %1560 = vmatprep.subr.mxu0 %v1557
    %1561 = vmatpush1.msra.mxu0 %v1556
    %1562 = vmatprep.subr.mxu0 %v1553
    %1563 = vmatpush1.msra.mxu0 %v1552
    %1564 = vmatprep.subr.mxu0 %v1549
    %1565 = vmatpush1.msra.mxu0 %v1548
    %1566 = vmatprep.subr.mxu0 %v1545
    %1567 = vmatpush1.msra.mxu0 %v1544
    %1568 = vmatprep.subr.mxu0 %v1541
    %1569 = vmatpush1.msra.mxu0 %v1540
    %1570 = vmatprep.subr.mxu0 %v1537
    %1571 = vmatpush1.msra.mxu0 %v1536
    %1572 = vmatprep.subr.mxu0 %v1533
    %1573 = vmatpush1.msra.mxu0 %v1532
    %1574 = vmatprep.subr.mxu0 %v1529
    %1575 = vmatpush1.msra.mxu0 %v1528
    %1576 = vmatprep.subr.mxu0 %v1525
    %1577 = vmatpush1.msra.mxu0 %v1524
    %1578 = vmatprep.subr.mxu0 %v1521
    %1579 = vmatpush1.msra.mxu0 %v1520
    %1580 = vmatprep.subr.mxu0 %v1517
    %1581 = vmatpush1.msra.mxu0 %v1516
    %1582 = vmatprep.subr.mxu0 %v1513
    %1583 = vmatpush1.msra.mxu0 %v1512
    %1584 = vmatprep.subr.mxu0 %v1509
    %1585 = vmatpush1.msra.mxu0 %v1508
    %1586 = vmatprep.subr.mxu0 %v1505
    %1587 = vmatpush1.msra.mxu0 %v1504
    %1588 = vmatprep.subr.mxu0 %v1501
    %1589 = vmatpush1.msra.mxu0 %v1500
    %1590 = vmatprep.subr.mxu0 %v1497
    %1591 = vmatpush1.msra.mxu0 %v1496
    %1592 = vmatprep.subr.mxu0 0.0
    %1593 = vmatpush2.msra.mxu0 0.0
    %1594 = vmatprep.subr.mxu0 0.0
    %1595 = vmatpush2.msra.mxu0 0.0
    %1596 = vmatprep.subr.mxu0 0.0
    %1597 = vmatpush2.msra.mxu0 0.0
    %1598 = vmatprep.subr.mxu0 0.0
    %1599 = vmatpush2.msra.mxu0 0.0
    %1600 = vmatprep.subr.mxu0 0.0
    %1601 = vmatpush2.msra.mxu0 0.0
    %1602 = vmatprep.subr.mxu0 0.0
    %1603 = vmatpush2.msra.mxu0 0.0
    %1604 = vmatprep.subr.mxu0 0.0
    %1605 = vmatpush2.msra.mxu0 0.0
    %1606 = vmatprep.subr.mxu0 0.0
    %1607 = vmatpush2.msra.mxu0 0.0
    %1608 = vmatprep.subr.mxu0 0.0
    %1609 = vmatpush2.msra.mxu0 0.0
    %1610 = vmatprep.subr.mxu0 0.0
    %1611 = vmatpush2.msra.mxu0 0.0
    %1612 = vmatprep.subr.mxu0 0.0
    %1613 = vmatpush2.msra.mxu0 0.0
    %1614 = vmatprep.subr.mxu0 0.0
    %1615 = vmatpush2.msra.mxu0 0.0
    %1616 = vmatprep.subr.mxu0 0.0
    %1617 = vmatpush2.msra.mxu0 0.0
    %1618 = vmatprep.subr.mxu0 0.0
    %1619 = vmatpush2.msra.mxu0 0.0
    %1620 = vmatprep.subr.mxu0 0.0
    %1621 = vmatpush2.msra.mxu0 0.0
    %1622 = vmatprep.subr.mxu0 0.0
    %1623 = vmatpush2.msra.mxu0 0.0
    %1624 = vmatprep.mubr.f32.mxu0 0.0
    %1625 = vmatmul.mubr.f32.gmra.mxu0 %v1486
    %v1626 = vpop.f32.mrf.mxu0
    %v1627 = vadd.f32 0.0, %v1626
    %v1628 = vpop.f32.mrf.mxu0
    %v1629 = vadd.f32 0.0, %v1628
    %1630 = vdwg.mxu0
    %1631 = vmatprep.subr.mxu0 %v1559
    %1632 = vmatpush1.msra.mxu0 %v1558
    %1633 = vmatprep.subr.mxu0 %v1555
    %1634 = vmatpush1.msra.mxu0 %v1554
    %1635 = vmatprep.subr.mxu0 %v1551
    %1636 = vmatpush1.msra.mxu0 %v1550
    %1637 = vmatprep.subr.mxu0 %v1547
    %1638 = vmatpush1.msra.mxu0 %v1546
    %1639 = vmatprep.subr.mxu0 %v1543
    %1640 = vmatpush1.msra.mxu0 %v1542
    %1641 = vmatprep.subr.mxu0 %v1539
    %1642 = vmatpush1.msra.mxu0 %v1538
    %1643 = vmatprep.subr.mxu0 %v1535
    %1644 = vmatpush1.msra.mxu0 %v1534
    %1645 = vmatprep.subr.mxu0 %v1531
    %1646 = vmatpush1.msra.mxu0 %v1530
    %1647 = vmatprep.subr.mxu0 %v1527
    %1648 = vmatpush1.msra.mxu0 %v1526
    %1649 = vmatprep.subr.mxu0 %v1523
    %1650 = vmatpush1.msra.mxu0 %v1522
    %1651 = vmatprep.subr.mxu0 %v1519
    %1652 = vmatpush1.msra.mxu0 %v1518
    %1653 = vmatprep.subr.mxu0 %v1515
    %1654 = vmatpush1.msra.mxu0 %v1514
    %1655 = vmatprep.subr.mxu0 %v1511
    %1656 = vmatpush1.msra.mxu0 %v1510
    %1657 = vmatprep.subr.mxu0 %v1507
    %1658 = vmatpush1.msra.mxu0 %v1506
    %1659 = vmatprep.subr.mxu0 %v1503
    %1660 = vmatpush1.msra.mxu0 %v1502
    %1661 = vmatprep.subr.mxu0 %v1499
    %1662 = vmatpush1.msra.mxu0 %v1498
    %1663 = vmatprep.subr.mxu0 0.0
    %1664 = vmatpush2.msra.mxu0 0.0
    %1665 = vmatprep.subr.mxu0 0.0
    %1666 = vmatpush2.msra.mxu0 0.0
    %1667 = vmatprep.subr.mxu0 0.0
    %1668 = vmatpush2.msra.mxu0 0.0
    %1669 = vmatprep.subr.mxu0 0.0
    %1670 = vmatpush2.msra.mxu0 0.0
    %1671 = vmatprep.subr.mxu0 0.0
    %1672 = vmatpush2.msra.mxu0 0.0
    %1673 = vmatprep.subr.mxu0 0.0
    %1674 = vmatpush2.msra.mxu0 0.0
    %1675 = vmatprep.subr.mxu0 0.0
    %1676 = vmatpush2.msra.mxu0 0.0
    %1677 = vmatprep.subr.mxu0 0.0
    %1678 = vmatpush2.msra.mxu0 0.0
    %1679 = vmatprep.subr.mxu0 0.0
    %1680 = vmatpush2.msra.mxu0 0.0
    %1681 = vmatprep.subr.mxu0 0.0
    %1682 = vmatpush2.msra.mxu0 0.0
    %1683 = vmatprep.subr.mxu0 0.0
    %1684 = vmatpush2.msra.mxu0 0.0
    %1685 = vmatprep.subr.mxu0 0.0
    %1686 = vmatpush2.msra.mxu0 0.0
    %1687 = vmatprep.subr.mxu0 0.0
    %1688 = vmatpush2.msra.mxu0 0.0
    %1689 = vmatprep.subr.mxu0 0.0
    %1690 = vmatpush2.msra.mxu0 0.0
    %1691 = vmatprep.subr.mxu0 0.0
    %1692 = vmatpush2.msra.mxu0 0.0
    %1693 = vmatprep.subr.mxu0 0.0
    %1694 = vmatpush2.msra.mxu0 0.0
    %1695 = vmatprep.mubr.f32.mxu0 0.0
    %1696 = vmatmul.mubr.f32.gmra.mxu0 %v1486
    %v1697 = vpop.f32.mrf.mxu0
    %v1698 = vadd.f32 0.0, %v1697
    %v1699 = vpop.f32.mrf.mxu0
    %v1700 = vadd.f32 0.0, %v1699
    %1701 = vdwg.mxu0
    %v1702 = vadd.f32 %v1492, %v1627
    %v1703 = vadd.f32 %v1493, %v1629
    %v1704 = vadd.f32 %v1494, %v1698
    %v1705 = vadd.f32 %v1495, %v1700
    %v1706 = vxor.u32 %v1702, 2147483648
    %v1707 = vxor.u32 %v1703, 2147483648
    %v1708 = vxor.u32 %v1704, 2147483648
    %v1709 = vmul.f32 %v1706, 1.442695
    %v1710 = vpow.pop %v1709
    %v1711 = vmul.f32 %v1707, 1.442695
    %v1712 = vpow.pop %v1711
    %v1713 = vmul.f32 %v1708, 1.442695
    %v1714 = vpow.pop %v1713
    %v1715 = vadd.f32 %v1710, 1.0
    %v1716 = vadd.f32 %v1712, 1.0
    %v1717 = vadd.f32 %v1714, 1.0
    %v1718 = vrcp.pop %v1715
    %v1719 = vmul.f32 1.0, %v1718
    %v1720 = vrcp.pop %v1716
    %v1721 = vmul.f32 1.0, %v1720
    %v1722 = vrcp.pop %v1717
    %v1723 = vmul.f32 1.0, %v1722
    %v1724 = vtanh.pop %v1705
    %v1725 = vmul.f32 %v1721, %v1484
    %v1726 = vmul.f32 %v1719, %v1724
    %v1727 = vadd.f32 %v1725, %v1726
    %v1728 = vtanh.pop %v1727
    %v1729 = vmul.f32 %v1723, %v1728
    %s1730 = scalar_lea.vmem [#allocation4], 48
    %1731 = vst [vmem:[%s1730] sm:$0xff] %v1729
    %s1732 = smul.u32 7, 4
    %s1733 = smul.addr %s1732, 8
    %s1734 = scalar_lea.vmem %s0, %s1733
    %v1735 = vld [vmem:[%s1734] sm:$0xff]
    %v1736 = vld [vmem:[%s1734 + $0x8] sm:$0xff]
    %v1737 = vld [vmem:[%s1734 + $0x10] sm:$0xff]
    %v1738 = vld [vmem:[%s1734 + $0x18] sm:$0xff]
    %v1739 = vld [vmem:[%s1] sm:$0xff]
    %v1740 = vld [vmem:[%s1 + $0x8] sm:$0xff]
    %v1741 = vld [vmem:[%s1 + $0x10] sm:$0xff]
    %v1742 = vld [vmem:[%s1 + $0x18] sm:$0xff]
    %v1743 = vld [vmem:[%s1 + $0x20] sm:$0xff]
    %v1744 = vld [vmem:[%s1 + $0x28] sm:$0xff]
    %v1745 = vld [vmem:[%s1 + $0x30] sm:$0xff]
    %v1746 = vld [vmem:[%s1 + $0x38] sm:$0xff]
    %v1747 = vld [vmem:[%s1 + $0x40] sm:$0xff]
    %v1748 = vld [vmem:[%s1 + $0x48] sm:$0xff]
    %v1749 = vld [vmem:[%s1 + $0x50] sm:$0xff]
    %v1750 = vld [vmem:[%s1 + $0x58] sm:$0xff]
    %v1751 = vld [vmem:[%s1 + $0x60] sm:$0xff]
    %v1752 = vld [vmem:[%s1 + $0x68] sm:$0xff]
    %v1753 = vld [vmem:[%s1 + $0x70] sm:$0xff]
    %v1754 = vld [vmem:[%s1 + $0x78] sm:$0xff]
    %v1755 = vld [vmem:[%s1 + $0x80] sm:$0xff]
    %v1756 = vld [vmem:[%s1 + $0x88] sm:$0xff]
    %v1757 = vld [vmem:[%s1 + $0x90] sm:$0xff]
    %v1758 = vld [vmem:[%s1 + $0x98] sm:$0xff]
    %v1759 = vld [vmem:[%s1 + $0xa0] sm:$0xff]
    %v1760 = vld [vmem:[%s1 + $0xa8] sm:$0xff]
    %v1761 = vld [vmem:[%s1 + $0xb0] sm:$0xff]
    %v1762 = vld [vmem:[%s1 + $0xb8] sm:$0xff]
    %v1763 = vld [vmem:[%s1 + $0xc0] sm:$0xff]
    %v1764 = vld [vmem:[%s1 + $0xc8] sm:$0xff]
    %v1765 = vld [vmem:[%s1 + $0xd0] sm:$0xff]
    %v1766 = vld [vmem:[%s1 + $0xd8] sm:$0xff]
    %v1767 = vld [vmem:[%s1 + $0xe0] sm:$0xff]
    %v1768 = vld [vmem:[%s1 + $0xe8] sm:$0xff]
    %v1769 = vld [vmem:[%s1 + $0xf0] sm:$0xff]
    %v1770 = vld [vmem:[%s1 + $0xf8] sm:$0xff]
    %v1771 = vld [vmem:[%s1 + $0x100] sm:$0xff]
    %v1772 = vld [vmem:[%s1 + $0x108] sm:$0xff]
    %v1773 = vld [vmem:[%s1 + $0x110] sm:$0xff]
    %v1774 = vld [vmem:[%s1 + $0x118] sm:$0xff]
    %v1775 = vld [vmem:[%s1 + $0x120] sm:$0xff]
    %v1776 = vld [vmem:[%s1 + $0x128] sm:$0xff]
    %v1777 = vld [vmem:[%s1 + $0x130] sm:$0xff]
    %v1778 = vld [vmem:[%s1 + $0x138] sm:$0xff]
    %v1779 = vld [vmem:[%s1 + $0x140] sm:$0xff]
    %v1780 = vld [vmem:[%s1 + $0x148] sm:$0xff]
    %v1781 = vld [vmem:[%s1 + $0x150] sm:$0xff]
    %v1782 = vld [vmem:[%s1 + $0x158] sm:$0xff]
    %v1783 = vld [vmem:[%s1 + $0x160] sm:$0xff]
    %v1784 = vld [vmem:[%s1 + $0x168] sm:$0xff]
    %v1785 = vld [vmem:[%s1 + $0x170] sm:$0xff]
    %v1786 = vld [vmem:[%s1 + $0x178] sm:$0xff]
    %v1787 = vld [vmem:[%s1 + $0x180] sm:$0xff]
    %v1788 = vld [vmem:[%s1 + $0x188] sm:$0xff]
    %v1789 = vld [vmem:[%s1 + $0x190] sm:$0xff]
    %v1790 = vld [vmem:[%s1 + $0x198] sm:$0xff]
    %v1791 = vld [vmem:[%s1 + $0x1a0] sm:$0xff]
    %v1792 = vld [vmem:[%s1 + $0x1a8] sm:$0xff]
    %v1793 = vld [vmem:[%s1 + $0x1b0] sm:$0xff]
    %v1794 = vld [vmem:[%s1 + $0x1b8] sm:$0xff]
    %v1795 = vld [vmem:[%s1 + $0x1c0] sm:$0xff]
    %v1796 = vld [vmem:[%s1 + $0x1c8] sm:$0xff]
    %v1797 = vld [vmem:[%s1 + $0x1d0] sm:$0xff]
    %v1798 = vld [vmem:[%s1 + $0x1d8] sm:$0xff]
    %v1799 = vld [vmem:[%s1 + $0x1e0] sm:$0xff]
    %v1800 = vld [vmem:[%s1 + $0x1e8] sm:$0xff]
    %v1801 = vld [vmem:[%s1 + $0x1f0] sm:$0xff]
    %v1802 = vld [vmem:[%s1 + $0x1f8] sm:$0xff]
    %1803 = vmatprep.subr.mxu0 %v1800
    %1804 = vmatpush1.msra.mxu0 %v1799
    %1805 = vmatprep.subr.mxu0 %v1796
    %1806 = vmatpush1.msra.mxu0 %v1795
    %1807 = vmatprep.subr.mxu0 %v1792
    %1808 = vmatpush1.msra.mxu0 %v1791
    %1809 = vmatprep.subr.mxu0 %v1788
    %1810 = vmatpush1.msra.mxu0 %v1787
    %1811 = vmatprep.subr.mxu0 %v1784
    %1812 = vmatpush1.msra.mxu0 %v1783
    %1813 = vmatprep.subr.mxu0 %v1780
    %1814 = vmatpush1.msra.mxu0 %v1779
    %1815 = vmatprep.subr.mxu0 %v1776
    %1816 = vmatpush1.msra.mxu0 %v1775
    %1817 = vmatprep.subr.mxu0 %v1772
    %1818 = vmatpush1.msra.mxu0 %v1771
    %1819 = vmatprep.subr.mxu0 %v1768
    %1820 = vmatpush1.msra.mxu0 %v1767
    %1821 = vmatprep.subr.mxu0 %v1764
    %1822 = vmatpush1.msra.mxu0 %v1763
    %1823 = vmatprep.subr.mxu0 %v1760
    %1824 = vmatpush1.msra.mxu0 %v1759
    %1825 = vmatprep.subr.mxu0 %v1756
    %1826 = vmatpush1.msra.mxu0 %v1755
    %1827 = vmatprep.subr.mxu0 %v1752
    %1828 = vmatpush1.msra.mxu0 %v1751
    %1829 = vmatprep.subr.mxu0 %v1748
    %1830 = vmatpush1.msra.mxu0 %v1747
    %1831 = vmatprep.subr.mxu0 %v1744
    %1832 = vmatpush1.msra.mxu0 %v1743
    %1833 = vmatprep.subr.mxu0 %v1740
    %1834 = vmatpush1.msra.mxu0 %v1739
    %1835 = vmatprep.subr.mxu0 0.0
    %1836 = vmatpush2.msra.mxu0 0.0
    %1837 = vmatprep.subr.mxu0 0.0
    %1838 = vmatpush2.msra.mxu0 0.0
    %1839 = vmatprep.subr.mxu0 0.0
    %1840 = vmatpush2.msra.mxu0 0.0
    %1841 = vmatprep.subr.mxu0 0.0
    %1842 = vmatpush2.msra.mxu0 0.0
    %1843 = vmatprep.subr.mxu0 0.0
    %1844 = vmatpush2.msra.mxu0 0.0
    %1845 = vmatprep.subr.mxu0 0.0
    %1846 = vmatpush2.msra.mxu0 0.0
    %1847 = vmatprep.subr.mxu0 0.0
    %1848 = vmatpush2.msra.mxu0 0.0
    %1849 = vmatprep.subr.mxu0 0.0
    %1850 = vmatpush2.msra.mxu0 0.0
    %1851 = vmatprep.subr.mxu0 0.0
    %1852 = vmatpush2.msra.mxu0 0.0
    %1853 = vmatprep.subr.mxu0 0.0
    %1854 = vmatpush2.msra.mxu0 0.0
    %1855 = vmatprep.subr.mxu0 0.0
    %1856 = vmatpush2.msra.mxu0 0.0
    %1857 = vmatprep.subr.mxu0 0.0
    %1858 = vmatpush2.msra.mxu0 0.0
    %1859 = vmatprep.subr.mxu0 0.0
    %1860 = vmatpush2.msra.mxu0 0.0
    %1861 = vmatprep.subr.mxu0 0.0
    %1862 = vmatpush2.msra.mxu0 0.0
    %1863 = vmatprep.subr.mxu0 0.0
    %1864 = vmatpush2.msra.mxu0 0.0
    %1865 = vmatprep.subr.mxu0 0.0
    %1866 = vmatpush2.msra.mxu0 0.0
    %1867 = vmatprep.mubr.f32.mxu0 0.0
    %1868 = vmatmul.mubr.f32.gmra.mxu0 %v1729
    %v1869 = vpop.f32.mrf.mxu0
    %v1870 = vadd.f32 0.0, %v1869
    %v1871 = vpop.f32.mrf.mxu0
    %v1872 = vadd.f32 0.0, %v1871
    %1873 = vdwg.mxu0
    %1874 = vmatprep.subr.mxu0 %v1802
    %1875 = vmatpush1.msra.mxu0 %v1801
    %1876 = vmatprep.subr.mxu0 %v1798
    %1877 = vmatpush1.msra.mxu0 %v1797
    %1878 = vmatprep.subr.mxu0 %v1794
    %1879 = vmatpush1.msra.mxu0 %v1793
    %1880 = vmatprep.subr.mxu0 %v1790
    %1881 = vmatpush1.msra.mxu0 %v1789
    %1882 = vmatprep.subr.mxu0 %v1786
    %1883 = vmatpush1.msra.mxu0 %v1785
    %1884 = vmatprep.subr.mxu0 %v1782
    %1885 = vmatpush1.msra.mxu0 %v1781
    %1886 = vmatprep.subr.mxu0 %v1778
    %1887 = vmatpush1.msra.mxu0 %v1777
    %1888 = vmatprep.subr.mxu0 %v1774
    %1889 = vmatpush1.msra.mxu0 %v1773
    %1890 = vmatprep.subr.mxu0 %v1770
    %1891 = vmatpush1.msra.mxu0 %v1769
    %1892 = vmatprep.subr.mxu0 %v1766
    %1893 = vmatpush1.msra.mxu0 %v1765
    %1894 = vmatprep.subr.mxu0 %v1762
    %1895 = vmatpush1.msra.mxu0 %v1761
    %1896 = vmatprep.subr.mxu0 %v1758
    %1897 = vmatpush1.msra.mxu0 %v1757
    %1898 = vmatprep.subr.mxu0 %v1754
    %1899 = vmatpush1.msra.mxu0 %v1753
    %1900 = vmatprep.subr.mxu0 %v1750
    %1901 = vmatpush1.msra.mxu0 %v1749
    %1902 = vmatprep.subr.mxu0 %v1746
    %1903 = vmatpush1.msra.mxu0 %v1745
    %1904 = vmatprep.subr.mxu0 %v1742
    %1905 = vmatpush1.msra.mxu0 %v1741
    %1906 = vmatprep.subr.mxu0 0.0
    %1907 = vmatpush2.msra.mxu0 0.0
    %1908 = vmatprep.subr.mxu0 0.0
    %1909 = vmatpush2.msra.mxu0 0.0
    %1910 = vmatprep.subr.mxu0 0.0
    %1911 = vmatpush2.msra.mxu0 0.0
    %1912 = vmatprep.subr.mxu0 0.0
    %1913 = vmatpush2.msra.mxu0 0.0
    %1914 = vmatprep.subr.mxu0 0.0
    %1915 = vmatpush2.msra.mxu0 0.0
    %1916 = vmatprep.subr.mxu0 0.0
    %1917 = vmatpush2.msra.mxu0 0.0
    %1918 = vmatprep.subr.mxu0 0.0
    %1919 = vmatpush2.msra.mxu0 0.0
    %1920 = vmatprep.subr.mxu0 0.0
    %1921 = vmatpush2.msra.mxu0 0.0
    %1922 = vmatprep.subr.mxu0 0.0
    %1923 = vmatpush2.msra.mxu0 0.0
    %1924 = vmatprep.subr.mxu0 0.0
    %1925 = vmatpush2.msra.mxu0 0.0
    %1926 = vmatprep.subr.mxu0 0.0
    %1927 = vmatpush2.msra.mxu0 0.0
    %1928 = vmatprep.subr.mxu0 0.0
    %1929 = vmatpush2.msra.mxu0 0.0
    %1930 = vmatprep.subr.mxu0 0.0
    %1931 = vmatpush2.msra.mxu0 0.0
    %1932 = vmatprep.subr.mxu0 0.0
    %1933 = vmatpush2.msra.mxu0 0.0
    %1934 = vmatprep.subr.mxu0 0.0
    %1935 = vmatpush2.msra.mxu0 0.0
    %1936 = vmatprep.subr.mxu0 0.0
    %1937 = vmatpush2.msra.mxu0 0.0
    %1938 = vmatprep.mubr.f32.mxu0 0.0
    %1939 = vmatmul.mubr.f32.gmra.mxu0 %v1729
    %v1940 = vpop.f32.mrf.mxu0
    %v1941 = vadd.f32 0.0, %v1940
    %v1942 = vpop.f32.mrf.mxu0
    %v1943 = vadd.f32 0.0, %v1942
    %1944 = vdwg.mxu0
    %v1945 = vadd.f32 %v1735, %v1870
    %v1946 = vadd.f32 %v1736, %v1872
    %v1947 = vadd.f32 %v1737, %v1941
    %v1948 = vadd.f32 %v1738, %v1943
    %v1949 = vxor.u32 %v1945, 2147483648
    %v1950 = vxor.u32 %v1946, 2147483648
    %v1951 = vxor.u32 %v1947, 2147483648
    %v1952 = vmul.f32 %v1949, 1.442695
    %v1953 = vpow.pop %v1952
    %v1954 = vmul.f32 %v1950, 1.442695
    %v1955 = vpow.pop %v1954
    %v1956 = vmul.f32 %v1951, 1.442695
    %v1957 = vpow.pop %v1956
    %v1958 = vadd.f32 %v1953, 1.0
    %v1959 = vadd.f32 %v1955, 1.0
    %v1960 = vadd.f32 %v1957, 1.0
    %v1961 = vrcp.pop %v1958
    %v1962 = vmul.f32 1.0, %v1961
    %v1963 = vrcp.pop %v1959
    %v1964 = vmul.f32 1.0, %v1963
    %v1965 = vrcp.pop %v1960
    %v1966 = vmul.f32 1.0, %v1965
    %v1967 = vtanh.pop %v1948
    %v1968 = vmul.f32 %v1964, %v1727
    %v1969 = vmul.f32 %v1962, %v1967
    %v1970 = vadd.f32 %v1968, %v1969
    %v1971 = vtanh.pop %v1970
    %v1972 = vmul.f32 %v1966, %v1971
    %s1973 = scalar_lea.vmem [#allocation4], 56
    %1974 = vst [vmem:[%s1973] sm:$0xff] %v1972
    %1975 = vst [vmem:[#allocation2] sm:$0xff] %v1972
    %1976 = vst [vmem:[#allocation3] sm:$0xff] %v1970
    // Predicated region
    $region22: #{quant_lstm_forward.3} parent=1 // pred_check
      %p1977 = pneg %p22
    $region23: #{quant_lstm_forward.3} parent=1 // pred_check_branch
      %1979 = sbr.rel (%p1977) target = $region25
    $region24: #{quant_lstm_forward.3} parent=1 // pred_region
      %1980 = vst [vmem:[#allocation6] sm:$0xff] %v1972
      %1981 = vst [vmem:[#allocation8] sm:$0xff] %v1970
    $region25: #{quant_lstm_forward.3} parent=1 // pred_fallthru
      _
    // Predicated region
    $region26: #{quant_lstm_forward.3} parent=1 // pred_check
      _
    $region27: #{quant_lstm_forward.3} parent=1 // pred_check_branch
      %1983 = sbr.rel (0) target = $region29
    $region28: #{quant_lstm_forward.3} parent=1 // pred_region
      %s1985 = ssub.s32 1024, 1024
      %1986 = vsyncadd [#allocation5], %s1985
      %s1987 = sshll.u32 [#allocation4], 4
      %s1988 = int_to_ptr.vmem [resolvable:$true] %s1987
      %1993 = dma.vmem_to_hbm [thread:$0]  %s1988, 1024, %s4, [#allocation5], 128, 128, 8
    $region29: #{quant_lstm_forward.3} parent=1 // pred_fallthru
      _
    // Predicated region
    $region30: #{quant_lstm_forward.3} parent=1 // pred_check
      _
    $region31: #{quant_lstm_forward.3} parent=1 // pred_check_branch
      %1995 = sbr.rel (0) target = $region33
    $region32: #{quant_lstm_forward.3} parent=1 // pred_region
      %s1997 = ssub.s32 128, 128
      %1998 = vsyncadd [#allocation7], %s1997
      %s2000 = sshll.u32 [#allocation6], 4
      %s2001 = int_to_ptr.vmem [resolvable:$true] %s2000
      %2003 = dma.vmem_to_hbm [thread:$0]  %s2001, 128, %s5, [#allocation7]
    $region33: #{quant_lstm_forward.3} parent=1 // pred_fallthru
      _
    // Predicated region
    $region34: #{quant_lstm_forward.3} parent=1 // pred_check
      _
    $region35: #{quant_lstm_forward.3} parent=1 // pred_check_branch
      %2005 = sbr.rel (0) target = $region37
    $region36: #{quant_lstm_forward.3} parent=1 // pred_region
      %s2007 = ssub.s32 128, 128
      %2008 = vsyncadd [#allocation7], %s2007
      %s2010 = sshll.u32 [#allocation8], 4
      %s2011 = int_to_ptr.vmem [resolvable:$true] %s2010
      %2013 = dma.vmem_to_hbm [thread:$0]  %s2011, 128, %s6, [#allocation7]
    $region37: #{quant_lstm_forward.3} parent=1 // pred_fallthru
      _
    // Predicated region
    $region38: #{quant_lstm_forward.3} parent=1 // pred_check
      _
    $region39: #{quant_lstm_forward.3} parent=1 // pred_check_branch
      %2015 = sbr.rel (0) target = $region41
    $region40: #{quant_lstm_forward.3} parent=1 // pred_region
      %2016 = dma.done [#allocation5], 1024
    $region41: #{quant_lstm_forward.3} parent=1 // pred_fallthru
      _
    // Predicated region
    $region42: #{quant_lstm_forward.3} parent=1 // pred_check
      _
    $region43: #{quant_lstm_forward.3} parent=1 // pred_check_branch
      %2018 = sbr.rel (0) target = $region45
    $region44: #{quant_lstm_forward.3} parent=1 // pred_region
      %2019 = dma.done [#allocation7], 128
    $region45: #{quant_lstm_forward.3} parent=1 // pred_fallthru
      _
    // Predicated region
    $region46: #{quant_lstm_forward.3} parent=1 // pred_check
      _
    $region47: #{quant_lstm_forward.3} parent=1 // pred_check_branch
      %2021 = sbr.rel (0) target = $region49
    $region48: #{quant_lstm_forward.3} parent=1 // pred_region
      %2022 = dma.done [#allocation7], 128
    $region49: #{quant_lstm_forward.3} parent=1 // pred_fallthru
      _
    %2023 = vsyncpa [#allocation5], 1
    %2024 = vsyncpa [#allocation7], 1

</llo_original>
